<compile_context>
chip_gen: v5e
topology: v5e:2x2
jax: 0.10.0
libtpu: 0.0.40
codegen_flags: <defaults>
</compile_context>

<pallas_src>
import functools

import numpy as np
import jax
import jax.numpy as jnp
from jax.experimental import pallas as pl
from jax.experimental.pallas import tpu as pltpu


# ----------------------------------------------------------------------------
# Fused kernel
# ----------------------------------------------------------------------------
def _shift_lanes(a, k):
    """result[:, p] = a[:, p - k], zero-filled at the array ends (no wrap). k static."""
    if k == 0:
        return a
    rows, n = a.shape
    if k > 0:
        return jnp.concatenate([jnp.zeros((rows, k), a.dtype), a[:, :n - k]], axis=1)
    return jnp.concatenate([a[:, -k:], jnp.zeros((rows, -k), a.dtype)], axis=1)


def _disc_kernel(x1_ref, mask_ref, w1_ref, b1_ref, w2_ref, b2_ref,
                 w3_ref, b3_ref, wlin_ref, blin_ref, o_ref, *,
                 img_w, img_hw, n_img):
    # x1_ref  : (1, 9*Cin0, B*HW) bf16  layer-1 im2col patches (tap*Cin0 + ci on sublanes)
    # mask_ref: (4, B*HW) f32           rows: x-1 valid, x+1 valid, y-1 valid, y+1 valid
    # w1_ref  : (C, 9*Cin0) bf16        layer-1 weight, BN scale folded in
    # w2/w3   : (C, 9*C)   bf16         fused conv weight: col index = ky*3C + kx*C + ci
    # b1/b2/b3: (C, 1) f32              folded conv bias + BN shift
    # wlin    : (C, 1) f32              linear weight already divided by H*W
    # blin    : (1, 1) f32
    # o_ref   : (1, 1, B) f32           one logit per image in this step's batch
    masks = mask_ref[...].astype(jnp.bfloat16)       # cast once (values are exact 0/1)
    m_xm = masks[0:1, :]                              # valid where x-1 >= 0
    m_xp = masks[1:2, :]                              # valid where x+1 <= W-1
    m_ym = masks[2:3, :]                              # valid where y-1 >= 0
    m_yp = masks[3:4, :]                              # valid where y+1 <= H-1

    def conv3x3(act_b, w_ref, b_ref):
        # act_b: (C, B*HW) bf16 -> (C, B*HW) f32 (bias + ReLU applied)
        left = m_xm * _shift_lanes(act_b, 1)          # tap at column x-1
        right = m_xp * _shift_lanes(act_b, -1)        # tap at column x+1
        xcat = jnp.concatenate([left, act_b, right], axis=0)        # (3C, L) bf16
        top = m_ym * _shift_lanes(xcat, img_w)        # taps at row y-1
        bot = m_yp * _shift_lanes(xcat, -img_w)       # taps at row y+1
        big = jnp.concatenate([top, xcat, bot], axis=0)             # (9C, L) bf16
        acc = jnp.dot(w_ref[...], big, preferred_element_type=jnp.float32)
        return jnp.maximum(acc + b_ref[...], 0.0)

    # Layer 1: single deep-K matmul over the pre-built im2col patches (K = 27).
    a1 = jnp.dot(w1_ref[...], x1_ref[0], preferred_element_type=jnp.float32)
    a1 = jnp.maximum(a1 + b1_ref[...], 0.0)

    # Layers 2 and 3: one K=576 matmul each, single bf16 cast of the layer input.
    a2 = conv3x3(a1.astype(jnp.bfloat16), w2_ref, b2_ref)
    a3 = conv3x3(a2.astype(jnp.bfloat16), w3_ref, b3_ref)

    # Global average pool + Linear(C -> 1), fused epilogue (per-image lane sums).
    s = jnp.sum(a3 * wlin_ref[...], axis=0, keepdims=True)          # (1, B*HW)
    logits = jnp.concatenate(
        [jnp.sum(s[:, b * img_hw:(b + 1) * img_hw], axis=1, keepdims=True)
         for b in range(n_img)], axis=1)                            # (1, B)
    o_ref[...] = (logits + blin_ref[...]).reshape(1, 1, n_img)


# ----------------------------------------------------------------------------
# Wrapper: layout prep + single pallas_call
# ----------------------------------------------------------------------------
def discriminator_forward(image_nchw, params):
    """image_nchw: (N, 3, H, W) -> logits (N, 1)."""
    x = jnp.transpose(image_nchw, (0, 2, 3, 1)).astype(jnp.float32)   # NCHW -> NHWC
    N, H, W, cin0 = x.shape
    HW = H * W

    blocks = params["blocks"]
    C = blocks[0][0].shape[2]

    # Per-step image batch B: fill the MXU N-dimension (target ~2K lanes) while keeping
    # >= 2 grid steps when possible (v7x megacore sharding of the "parallel" axis).
    max_lanes = 2048
    B = max(1, min(N, max_lanes // HW))
    while B > 1 and -(-N // B) < 2:
        B //= 2
    B = max(B, 1)
    G = -(-N // B)                    # grid length
    n_pad = G * B
    if n_pad != N:                    # pad with zero images; sliced off at the end
        x = jnp.concatenate([x, jnp.zeros((n_pad - N, H, W, cin0), x.dtype)], axis=0)

    # Layer-1 im2col in the wrapper (Cin=3 is lane-sparse; keep it out of the kernel),
    # then regroup so B images share one lane axis per grid step.
    xp = jnp.pad(x, ((0, 0), (1, 1), (1, 1), (0, 0)))
    taps = [xp[:, ky:ky + H, kx:kx + W, :].reshape(n_pad, HW, cin0)
            for ky in range(3) for kx in range(3)]
    x1 = jnp.stack(taps, axis=1)                                     # (Np, 9, HW, Cin0)
    x1 = jnp.transpose(x1, (0, 1, 3, 2)).reshape(n_pad, 9 * cin0, HW)
    x1 = (x1.reshape(G, B, 9 * cin0, HW)
            .transpose(0, 2, 1, 3)
            .reshape(G, 9 * cin0, B * HW)
            .astype(jnp.bfloat16))                                   # (G, 27, B*HW)

    # Fold BN (eval) scale into the conv weights and reshape to kernel layouts.
    def fold(w9, scale):
        return w9 * scale[None, None, :]                             # (9, Cin, Cout)

    w9_1, s1, bias1 = blocks[0]
    w1 = fold(w9_1, s1).reshape(9 * cin0, C).T.astype(jnp.bfloat16)  # (C, 27)

    def fused(w9, scale):
        wf = fold(w9, scale).reshape(3, 3, C, C)                     # (ky, kx, ci, co)
        wf = jnp.transpose(wf, (3, 0, 1, 2)).reshape(C, 9 * C)       # (co, ky*3C+kx*C+ci)
        return wf.astype(jnp.bfloat16)

    w9_2, s2, bias2 = blocks[1]
    w9_3, s3, bias3 = blocks[2]
    w2, w3 = fused(w9_2, s2), fused(w9_3, s3)
    b1 = bias1.reshape(C, 1).astype(jnp.float32)
    b2 = bias2.reshape(C, 1).astype(jnp.float32)
    b3 = bias3.reshape(C, 1).astype(jnp.float32)

    # Boundary masks (static geometry constants), replicated for the B lane-batched
    # images: they also kill cross-image bleed from the +-1 / +-W window shifts.
    xs = np.arange(HW) % W
    ys = np.arange(HW) // W
    m = np.stack([xs >= 1, xs <= W - 2, ys >= 1, ys <= H - 2]).astype(np.float32)
    mask = jnp.asarray(np.tile(m, (1, B)))                           # (4, B*HW)

    wlin = (params["w_lin"] / float(HW)).reshape(C, 1).astype(jnp.float32)
    blin = params["b_lin"].reshape(1, 1).astype(jnp.float32)

    kernel = functools.partial(_disc_kernel, img_w=W, img_hw=HW, n_img=B)
    out = pl.pallas_call(
        kernel,
        out_shape=jax.ShapeDtypeStruct((G, 1, B), jnp.float32),
        grid_spec=pltpu.PrefetchScalarGridSpec(
            num_scalar_prefetch=0,
            grid=(G,),
            in_specs=[
                pl.BlockSpec((1, 9 * cin0, B * HW), lambda g: (g, 0, 0)),  # x1 patches
                pl.BlockSpec((4, B * HW), lambda g: (0, 0)),               # boundary masks
                pl.BlockSpec((C, 9 * cin0), lambda g: (0, 0)),             # w1
                pl.BlockSpec((C, 1), lambda g: (0, 0)),                    # b1
                pl.BlockSpec((C, 9 * C), lambda g: (0, 0)),                # w2 (fused)
                pl.BlockSpec((C, 1), lambda g: (0, 0)),                    # b2
                pl.BlockSpec((C, 9 * C), lambda g: (0, 0)),                # w3 (fused)
                pl.BlockSpec((C, 1), lambda g: (0, 0)),                    # b3
                pl.BlockSpec((C, 1), lambda g: (0, 0)),                    # w_lin / (H*W)
                pl.BlockSpec((1, 1), lambda g: (0, 0)),                    # b_lin
            ],
            out_specs=pl.BlockSpec((1, 1, B), lambda g: (g, 0, 0)),
        ),
        compiler_params=pltpu.CompilerParams(
            dimension_semantics=("parallel",)),
    )(x1, mask, w1, b1, w2, b2, w3, b3, wlin, blin)
    return out.reshape(n_pad, 1)[:N]


# ----------------------------------------------------------------------------
# Parameter construction (deterministic, synthetic)
# ----------------------------------------------------------------------------
def make_block_params(key, cin, cout):
    ks = jax.random.split(key, 5)
    w = jax.random.normal(ks[0], (9, cin, cout), jnp.float32) / np.sqrt(9.0 * cin)
    conv_b = 0.1 * jax.random.normal(ks[1], (cout,), jnp.float32)
    gamma = 1.0 + 0.1 * jax.random.normal(ks[2], (cout,), jnp.float32)
    beta = 0.1 * jax.random.normal(ks[3], (cout,), jnp.float32)
    run_mean = 0.1 * jax.random.normal(ks[4], (cout,), jnp.float32)
    run_var = jnp.ones((cout,), jnp.float32)
    eps = 1e-5
    scale = gamma / jnp.sqrt(run_var + eps)
    bias = (conv_b - run_mean) * scale + beta
    return w, scale, bias


# Pure-JAX reference (same bf16-operand / f32-accumulate math as the kernel).
def reference_forward(image_nchw, params):
    x = jnp.transpose(image_nchw, (0, 2, 3, 1)).astype(jnp.float32)
    for (w9, scale, bias) in params["blocks"]:
        cin, cout = w9.shape[1], w9.shape[2]
        wf = (w9 * scale[None, None, :]).reshape(3, 3, cin, cout)
        y = jax.lax.conv_general_dilated(
            x.astype(jnp.bfloat16), wf.astype(jnp.bfloat16), (1, 1), "SAME",
            dimension_numbers=("NHWC", "HWIO", "NHWC"),
            preferred_element_type=jnp.float32)
        x = jnp.maximum(y + bias, 0.0)
    pooled = jnp.mean(x, axis=(1, 2))
    return pooled @ params["w_lin"].reshape(-1, 1) + params["b_lin"]


if __name__ == "__main__":
    key = jax.random.PRNGKey(0)
    k_in, k_b1, k_b2, k_b3, k_lw, k_lb = jax.random.split(key, 6)

    N, C_in, H, W = 4, 3, 16, 16       # N=4 -> B=2 images per step, grid of 2
    disc_channels = 64

    image = jax.random.normal(k_in, (N, C_in, H, W), jnp.float32)   # NCHW like PyTorch

    params = {
        "blocks": [
            make_block_params(k_b1, C_in, disc_channels),
            make_block_params(k_b2, disc_channels, disc_channels),
            make_block_params(k_b3, disc_channels, disc_channels),
        ],
        "w_lin": jax.random.normal(k_lw, (disc_channels,), jnp.float32)
                 / np.sqrt(disc_channels),
        "b_lin": 0.1 * jax.random.normal(k_lb, (1,), jnp.float32),
    }

    out = jax.jit(discriminator_forward)(image, params)
    out = jax.block_until_ready(out)

    ref = jax.block_until_ready(reference_forward(image, params))
    assert out.shape == (N, 1), out.shape
    np.testing.assert_allclose(np.asarray(out), np.asarray(ref),
                               rtol=2e-3, atol=2e-3)
    print("KERNEL_OK")
</pallas_src>

<mosaic_0001>
module attributes {stable_mosaic.version = 11 : i64} {
  func.func @_disc_kernel(%arg0: i32, %arg1: memref<1x27x512xbf16, #tpu.memory_space<vmem>>, %arg2: memref<4x512xf32, #tpu.memory_space<vmem>>, %arg3: memref<64x27xbf16, #tpu.memory_space<vmem>>, %arg4: memref<64x1xf32, #tpu.memory_space<vmem>>, %arg5: memref<64x576xbf16, #tpu.memory_space<vmem>>, %arg6: memref<64x1xf32, #tpu.memory_space<vmem>>, %arg7: memref<64x576xbf16, #tpu.memory_space<vmem>>, %arg8: memref<64x1xf32, #tpu.memory_space<vmem>>, %arg9: memref<64x1xf32, #tpu.memory_space<vmem>>, %arg10: memref<1x1xf32, #tpu.memory_space<vmem>>, %arg11: memref<1x1x2xf32, #tpu.memory_space<vmem>>) attributes {dimension_semantics = [#tpu.dimension_semantics<parallel>], iteration_bounds = array<i64: 2>, scalar_prefetch = 0 : i64, scratch_operands = 0 : i64, tpu.core_type = #tpu.core_type<tc>, window_params = [{transform_indices = @transform_0, window_bounds = array<i64: 1, 27, 512>}, {pipeline_mode = #tpu.pipeline_mode<synchronous>, transform_indices = @transform_1, window_bounds = array<i64: 4, 512>}, {pipeline_mode = #tpu.pipeline_mode<synchronous>, transform_indices = @transform_2, window_bounds = array<i64: 64, 27>}, {pipeline_mode = #tpu.pipeline_mode<synchronous>, transform_indices = @transform_3, window_bounds = array<i64: 64, 1>}, {pipeline_mode = #tpu.pipeline_mode<synchronous>, transform_indices = @transform_4, window_bounds = array<i64: 64, 576>}, {pipeline_mode = #tpu.pipeline_mode<synchronous>, transform_indices = @transform_5, window_bounds = array<i64: 64, 1>}, {pipeline_mode = #tpu.pipeline_mode<synchronous>, transform_indices = @transform_6, window_bounds = array<i64: 64, 576>}, {pipeline_mode = #tpu.pipeline_mode<synchronous>, transform_indices = @transform_7, window_bounds = array<i64: 64, 1>}, {pipeline_mode = #tpu.pipeline_mode<synchronous>, transform_indices = @transform_8, window_bounds = array<i64: 64, 1>}, {pipeline_mode = #tpu.pipeline_mode<synchronous>, transform_indices = @transform_9, window_bounds = array<i64: 1, 1>}, {transform_indices = @transform_10, window_bounds = array<i64: 1, 1, 2>}]} {
    %c0 = arith.constant 0 : index
    %c0_0 = arith.constant 0 : index
    %0 = vector.load %arg2[%c0, %c0_0] : memref<4x512xf32, #tpu.memory_space<vmem>>, vector<4x512xf32>
    %1 = arith.truncf %0 : vector<4x512xf32> to vector<4x512xbf16>
    %2 = vector.extract_strided_slice %1 {offsets = [0, 0], sizes = [1, 512], strides = [1, 1]} : vector<4x512xbf16> to vector<1x512xbf16>
    %3 = vector.extract_strided_slice %1 {offsets = [1, 0], sizes = [1, 512], strides = [1, 1]} : vector<4x512xbf16> to vector<1x512xbf16>
    %4 = vector.extract_strided_slice %1 {offsets = [2, 0], sizes = [1, 512], strides = [1, 1]} : vector<4x512xbf16> to vector<1x512xbf16>
    %5 = vector.extract_strided_slice %1 {offsets = [3, 0], sizes = [1, 512], strides = [1, 1]} : vector<4x512xbf16> to vector<1x512xbf16>
    %c0_1 = arith.constant 0 : index
    %c0_2 = arith.constant 0 : index
    %6 = vector.load %arg3[%c0_1, %c0_2] : memref<64x27xbf16, #tpu.memory_space<vmem>>, vector<64x27xbf16>
    %c0_3 = arith.constant 0 : index
    %c0_4 = arith.constant 0 : index
    %c0_5 = arith.constant 0 : index
    %7 = vector.load %arg1[%c0_3, %c0_4, %c0_5] : memref<1x27x512xbf16, #tpu.memory_space<vmem>>, vector<1x27x512xbf16>
    %8 = vector.shape_cast %7 : vector<1x27x512xbf16> to vector<27x512xbf16>
    %cst = arith.constant dense<0.000000e+00> : vector<64x512xf32>
    %9 = tpu.matmul %6, %8, %cst {dimension_numbers = #tpu.dot_dimension_numbers<[1], [0], [0], [1], [0, 0, 1, 1], [], []>} : vector<64x27xbf16>, vector<27x512xbf16>, vector<64x512xf32> -> vector<64x512xf32>
    %c0_6 = arith.constant 0 : index
    %c0_7 = arith.constant 0 : index
    %10 = vector.load %arg4[%c0_6, %c0_7] : memref<64x1xf32, #tpu.memory_space<vmem>>, vector<64x1xf32>
    %11 = vector.broadcast %10 : vector<64x1xf32> to vector<64x512xf32>
    %12 = arith.addf %9, %11 : vector<64x512xf32>
    %cst_8 = arith.constant 0.000000e+00 : f32
    %13 = vector.broadcast %cst_8 : f32 to vector<64x512xf32>
    %14 = arith.maximumf %12, %13 : vector<64x512xf32>
    %15 = arith.truncf %14 : vector<64x512xf32> to vector<64x512xbf16>
    %cst_9 = arith.constant 0.000000e+00 : bf16
    %16 = vector.broadcast %cst_9 : bf16 to vector<64x1xbf16>
    %17 = vector.extract_strided_slice %15 {offsets = [0, 0], sizes = [64, 511], strides = [1, 1]} : vector<64x512xbf16> to vector<64x511xbf16>
    %18 = tpu.concatenate %16, %17 in 1 : vector<64x1xbf16>, vector<64x511xbf16> -> vector<64x512xbf16>
    %19 = vector.broadcast %2 : vector<1x512xbf16> to vector<64x512xbf16>
    %20 = arith.mulf %19, %18 : vector<64x512xbf16>
    %21 = vector.extract_strided_slice %15 {offsets = [0, 1], sizes = [64, 511], strides = [1, 1]} : vector<64x512xbf16> to vector<64x511xbf16>
    %cst_10 = arith.constant 0.000000e+00 : bf16
    %22 = vector.broadcast %cst_10 : bf16 to vector<64x1xbf16>
    %23 = tpu.concatenate %21, %22 in 1 : vector<64x511xbf16>, vector<64x1xbf16> -> vector<64x512xbf16>
    %24 = vector.broadcast %3 : vector<1x512xbf16> to vector<64x512xbf16>
    %25 = arith.mulf %24, %23 : vector<64x512xbf16>
    %26 = tpu.concatenate %20, %15, %25 in 0 : vector<64x512xbf16>, vector<64x512xbf16>, vector<64x512xbf16> -> vector<192x512xbf16>
    %cst_11 = arith.constant 0.000000e+00 : bf16
    %27 = vector.broadcast %cst_11 : bf16 to vector<192x16xbf16>
    %28 = vector.extract_strided_slice %26 {offsets = [0, 0], sizes = [192, 496], strides = [1, 1]} : vector<192x512xbf16> to vector<192x496xbf16>
    %29 = tpu.concatenate %27, %28 in 1 : vector<192x16xbf16>, vector<192x496xbf16> -> vector<192x512xbf16>
    %30 = vector.broadcast %4 : vector<1x512xbf16> to vector<192x512xbf16>
    %31 = arith.mulf %30, %29 : vector<192x512xbf16>
    %32 = vector.extract_strided_slice %26 {offsets = [0, 16], sizes = [192, 496], strides = [1, 1]} : vector<192x512xbf16> to vector<192x496xbf16>
    %cst_12 = arith.constant 0.000000e+00 : bf16
    %33 = vector.broadcast %cst_12 : bf16 to vector<192x16xbf16>
    %34 = tpu.concatenate %32, %33 in 1 : vector<192x496xbf16>, vector<192x16xbf16> -> vector<192x512xbf16>
    %35 = vector.broadcast %5 : vector<1x512xbf16> to vector<192x512xbf16>
    %36 = arith.mulf %35, %34 : vector<192x512xbf16>
    %37 = tpu.concatenate %31, %26, %36 in 0 : vector<192x512xbf16>, vector<192x512xbf16>, vector<192x512xbf16> -> vector<576x512xbf16>
    %c0_13 = arith.constant 0 : index
    %c0_14 = arith.constant 0 : index
    %38 = vector.load %arg5[%c0_13, %c0_14] : memref<64x576xbf16, #tpu.memory_space<vmem>>, vector<64x576xbf16>
    %cst_15 = arith.constant dense<0.000000e+00> : vector<64x512xf32>
    %39 = tpu.matmul %38, %37, %cst_15 {dimension_numbers = #tpu.dot_dimension_numbers<[1], [0], [0], [1], [0, 0, 1, 1], [], []>} : vector<64x576xbf16>, vector<576x512xbf16>, vector<64x512xf32> -> vector<64x512xf32>
    %c0_16 = arith.constant 0 : index
    %c0_17 = arith.constant 0 : index
    %40 = vector.load %arg6[%c0_16, %c0_17] : memref<64x1xf32, #tpu.memory_space<vmem>>, vector<64x1xf32>
    %41 = vector.broadcast %40 : vector<64x1xf32> to vector<64x512xf32>
    %42 = arith.addf %39, %41 : vector<64x512xf32>
    %cst_18 = arith.constant 0.000000e+00 : f32
    %43 = vector.broadcast %cst_18 : f32 to vector<64x512xf32>
    %44 = arith.maximumf %42, %43 : vector<64x512xf32>
    %45 = arith.truncf %44 : vector<64x512xf32> to vector<64x512xbf16>
    %cst_19 = arith.constant 0.000000e+00 : bf16
    %46 = vector.broadcast %cst_19 : bf16 to vector<64x1xbf16>
    %47 = vector.extract_strided_slice %45 {offsets = [0, 0], sizes = [64, 511], strides = [1, 1]} : vector<64x512xbf16> to vector<64x511xbf16>
    %48 = tpu.concatenate %46, %47 in 1 : vector<64x1xbf16>, vector<64x511xbf16> -> vector<64x512xbf16>
    %49 = vector.broadcast %2 : vector<1x512xbf16> to vector<64x512xbf16>
    %50 = arith.mulf %49, %48 : vector<64x512xbf16>
    %51 = vector.extract_strided_slice %45 {offsets = [0, 1], sizes = [64, 511], strides = [1, 1]} : vector<64x512xbf16> to vector<64x511xbf16>
    %cst_20 = arith.constant 0.000000e+00 : bf16
    %52 = vector.broadcast %cst_20 : bf16 to vector<64x1xbf16>
    %53 = tpu.concatenate %51, %52 in 1 : vector<64x511xbf16>, vector<64x1xbf16> -> vector<64x512xbf16>
    %54 = vector.broadcast %3 : vector<1x512xbf16> to vector<64x512xbf16>
    %55 = arith.mulf %54, %53 : vector<64x512xbf16>
    %56 = tpu.concatenate %50, %45, %55 in 0 : vector<64x512xbf16>, vector<64x512xbf16>, vector<64x512xbf16> -> vector<192x512xbf16>
    %cst_21 = arith.constant 0.000000e+00 : bf16
    %57 = vector.broadcast %cst_21 : bf16 to vector<192x16xbf16>
    %58 = vector.extract_strided_slice %56 {offsets = [0, 0], sizes = [192, 496], strides = [1, 1]} : vector<192x512xbf16> to vector<192x496xbf16>
    %59 = tpu.concatenate %57, %58 in 1 : vector<192x16xbf16>, vector<192x496xbf16> -> vector<192x512xbf16>
    %60 = vector.broadcast %4 : vector<1x512xbf16> to vector<192x512xbf16>
    %61 = arith.mulf %60, %59 : vector<192x512xbf16>
    %62 = vector.extract_strided_slice %56 {offsets = [0, 16], sizes = [192, 496], strides = [1, 1]} : vector<192x512xbf16> to vector<192x496xbf16>
    %cst_22 = arith.constant 0.000000e+00 : bf16
    %63 = vector.broadcast %cst_22 : bf16 to vector<192x16xbf16>
    %64 = tpu.concatenate %62, %63 in 1 : vector<192x496xbf16>, vector<192x16xbf16> -> vector<192x512xbf16>
    %65 = vector.broadcast %5 : vector<1x512xbf16> to vector<192x512xbf16>
    %66 = arith.mulf %65, %64 : vector<192x512xbf16>
    %67 = tpu.concatenate %61, %56, %66 in 0 : vector<192x512xbf16>, vector<192x512xbf16>, vector<192x512xbf16> -> vector<576x512xbf16>
    %c0_23 = arith.constant 0 : index
    %c0_24 = arith.constant 0 : index
    %68 = vector.load %arg7[%c0_23, %c0_24] : memref<64x576xbf16, #tpu.memory_space<vmem>>, vector<64x576xbf16>
    %cst_25 = arith.constant dense<0.000000e+00> : vector<64x512xf32>
    %69 = tpu.matmul %68, %67, %cst_25 {dimension_numbers = #tpu.dot_dimension_numbers<[1], [0], [0], [1], [0, 0, 1, 1], [], []>} : vector<64x576xbf16>, vector<576x512xbf16>, vector<64x512xf32> -> vector<64x512xf32>
    %c0_26 = arith.constant 0 : index
    %c0_27 = arith.constant 0 : index
    %70 = vector.load %arg8[%c0_26, %c0_27] : memref<64x1xf32, #tpu.memory_space<vmem>>, vector<64x1xf32>
    %71 = vector.broadcast %70 : vector<64x1xf32> to vector<64x512xf32>
    %72 = arith.addf %69, %71 : vector<64x512xf32>
    %cst_28 = arith.constant 0.000000e+00 : f32
    %73 = vector.broadcast %cst_28 : f32 to vector<64x512xf32>
    %74 = arith.maximumf %72, %73 : vector<64x512xf32>
    %c0_29 = arith.constant 0 : index
    %c0_30 = arith.constant 0 : index
    %75 = vector.load %arg9[%c0_29, %c0_30] : memref<64x1xf32, #tpu.memory_space<vmem>>, vector<64x1xf32>
    %76 = vector.broadcast %75 : vector<64x1xf32> to vector<64x512xf32>
    %77 = arith.mulf %74, %76 : vector<64x512xf32>
    %cst_31 = arith.constant dense<0.000000e+00> : vector<512xf32>
    %78 = vector.multi_reduction <add>, %77, %cst_31 [0] : vector<64x512xf32> to vector<512xf32>
    %79 = vector.shape_cast %78 : vector<512xf32> to vector<1x512xf32>
    %80 = vector.extract_strided_slice %79 {offsets = [0, 0], sizes = [1, 256], strides = [1, 1]} : vector<1x512xf32> to vector<1x256xf32>
    %cst_32 = arith.constant dense<0.000000e+00> : vector<1xf32>
    %81 = vector.multi_reduction <add>, %80, %cst_32 [1] : vector<1x256xf32> to vector<1xf32>
    %82 = vector.shape_cast %81 : vector<1xf32> to vector<1x1xf32>
    %83 = vector.extract_strided_slice %79 {offsets = [0, 256], sizes = [1, 256], strides = [1, 1]} : vector<1x512xf32> to vector<1x256xf32>
    %cst_33 = arith.constant dense<0.000000e+00> : vector<1xf32>
    %84 = vector.multi_reduction <add>, %83, %cst_33 [1] : vector<1x256xf32> to vector<1xf32>
    %85 = vector.shape_cast %84 : vector<1xf32> to vector<1x1xf32>
    %86 = tpu.concatenate %82, %85 in 1 : vector<1x1xf32>, vector<1x1xf32> -> vector<1x2xf32>
    %c0_34 = arith.constant 0 : index
    %c0_35 = arith.constant 0 : index
    %87 = vector.load %arg10[%c0_34, %c0_35] : memref<1x1xf32, #tpu.memory_space<vmem>>, vector<1x1xf32>
    %88 = vector.broadcast %87 : vector<1x1xf32> to vector<1x2xf32>
    %89 = arith.addf %86, %88 : vector<1x2xf32>
    %90 = vector.shape_cast %89 : vector<1x2xf32> to vector<1x1x2xf32>
    %c0_36 = arith.constant 0 : index
    %c0_37 = arith.constant 0 : index
    %c0_38 = arith.constant 0 : index
    %91 = vector.load %arg11[%c0_36, %c0_37, %c0_38] : memref<1x1x2xf32, #tpu.memory_space<vmem>>, vector<1x1x2xf32>
    tpu.vector_store %arg11[%c0_36, %c0_37, %c0_38], %90 {strides = array<i32>} : memref<1x1x2xf32, #tpu.memory_space<vmem>>, vector<1x1x2xf32>,
    return
  }
  func.func @transform_0(%arg0: i32) -> (i32, i32, i32) {
    %c0_i32 = arith.constant 0 : i32
    %c0_i32_0 = arith.constant 0 : i32
    %c0_i32_1 = arith.constant 0 : i32
    return %arg0, %c0_i32, %c0_i32_0 : i32, i32, i32
  }
  func.func @transform_1(%arg0: i32) -> (i32, i32) {
    %c0_i32 = arith.constant 0 : i32
    %c0_i32_0 = arith.constant 0 : i32
    %c0_i32_1 = arith.constant 0 : i32
    return %c0_i32, %c0_i32_0 : i32, i32
  }
  func.func @transform_2(%arg0: i32) -> (i32, i32) {
    %c0_i32 = arith.constant 0 : i32
    %c0_i32_0 = arith.constant 0 : i32
    %c0_i32_1 = arith.constant 0 : i32
    return %c0_i32, %c0_i32_0 : i32, i32
  }
  func.func @transform_3(%arg0: i32) -> (i32, i32) {
    %c0_i32 = arith.constant 0 : i32
    %c0_i32_0 = arith.constant 0 : i32
    %c0_i32_1 = arith.constant 0 : i32
    return %c0_i32, %c0_i32_0 : i32, i32
  }
  func.func @transform_4(%arg0: i32) -> (i32, i32) {
    %c0_i32 = arith.constant 0 : i32
    %c0_i32_0 = arith.constant 0 : i32
    %c0_i32_1 = arith.constant 0 : i32
    return %c0_i32, %c0_i32_0 : i32, i32
  }
  func.func @transform_5(%arg0: i32) -> (i32, i32) {
    %c0_i32 = arith.constant 0 : i32
    %c0_i32_0 = arith.constant 0 : i32
    %c0_i32_1 = arith.constant 0 : i32
    return %c0_i32, %c0_i32_0 : i32, i32
  }
  func.func @transform_6(%arg0: i32) -> (i32, i32) {
    %c0_i32 = arith.constant 0 : i32
    %c0_i32_0 = arith.constant 0 : i32
    %c0_i32_1 = arith.constant 0 : i32
    return %c0_i32, %c0_i32_0 : i32, i32
  }
  func.func @transform_7(%arg0: i32) -> (i32, i32) {
    %c0_i32 = arith.constant 0 : i32
    %c0_i32_0 = arith.constant 0 : i32
    %c0_i32_1 = arith.constant 0 : i32
    return %c0_i32, %c0_i32_0 : i32, i32
  }
  func.func @transform_8(%arg0: i32) -> (i32, i32) {
    %c0_i32 = arith.constant 0 : i32
    %c0_i32_0 = arith.constant 0 : i32
    %c0_i32_1 = arith.constant 0 : i32
    return %c0_i32, %c0_i32_0 : i32, i32
  }
  func.func @transform_9(%arg0: i32) -> (i32, i32) {
    %c0_i32 = arith.constant 0 : i32
    %c0_i32_0 = arith.constant 0 : i32
    %c0_i32_1 = arith.constant 0 : i32
    return %c0_i32, %c0_i32_0 : i32, i32
  }
  func.func @transform_10(%arg0: i32) -> (i32, i32, i32) {
    %c0_i32 = arith.constant 0 : i32
    %c0_i32_0 = arith.constant 0 : i32
    %c0_i32_1 = arith.constant 0 : i32
    return %arg0, %c0_i32, %c0_i32_0 : i32, i32, i32
  }
}

</mosaic_0001>

<llo_original>
// kernel: discriminator_forward.1
$region0: #{discriminator_forward.1}
  #allocation0 [shape = 'u32[]', space=smem, size = 0x4, offset = 0x4, fixed_abs, tag = 'smem constant byte address 0x4 - core index']
  #allocation1 [shape = 'u32[72,128]{1,0:T(1,128)}', space=vmem, size = 0x9000, scoped, tag = 'internal scratch']
  #allocation2 [shape = 'f32[1,1]{1,0:T(1,128)S(1)}', space=vmem, size = 0x200, scoped, tag = 'scoped memory for discriminator_forward.1']
  %s0 = inlined_call_operand.vmem [shape: bf16[2,27,512], index: 0, kind: input, shape index: {}]
  %s1 = inlined_call_operand.vmem [shape: f32[4,512], index: 1, kind: input, shape index: {}]
  %s2 = inlined_call_operand.vmem [shape: bf16[64,27], index: 2, kind: input, shape index: {}]
  %s3 = inlined_call_operand.vmem [shape: f32[64,1], index: 3, kind: input, shape index: {}]
  %s4 = inlined_call_operand.vmem [shape: bf16[64,576], index: 4, kind: input, shape index: {}]
  %s5 = inlined_call_operand.vmem [shape: f32[64,1], index: 5, kind: input, shape index: {}]
  %s6 = inlined_call_operand.vmem [shape: bf16[64,576], index: 6, kind: input, shape index: {}]
  %s7 = inlined_call_operand.vmem [shape: f32[64,1], index: 7, kind: input, shape index: {}]
  %s8 = inlined_call_operand.vmem [shape: f32[64,1], index: 8, kind: input, shape index: {}]
  %s9 = inlined_call_operand.<no memory space> [shape: f32[1,1], index: 9, kind: input, shape index: {}]
  %s10 = inlined_call_operand.vmem [shape: f32[2,1,2], index: 10, kind: output, shape index: {}]
  %s11 = sld [smem:[#allocation0]]
  $region73: #{discriminator_forward.1} parent=0
    _
  %s13 = ssub.s32 1, %s11
  %s14 = scalar_select 0, %s13, %s11
  %v15 = vstv %s9
  %16 = vst [vmem:[#allocation2] sm:$0x1] %v15
  loop: start=0, step=1, limit=4
  $region2: #{discriminator_forward.1} parent=0 // loop_pre_header
    _
  $region3: #{discriminator_forward.1} parent=0 // loop_header
    %s18 = sphi 0, %s22
    %p19 = scmp.ge.s32.totalorder %s18, 4
    %s28 = sphi 0, %s30
    %s31 = sphi 0, %s28
    %s32 = sphi 0, %s31
    %s48 = sphi 0, %s32
    %s52 = sphi 0, %s52
    %s54 = sphi 0, %s52
    %s55 = sphi 0, %s54
    %s69 = sphi 0, %s55
    %s73 = sphi 0, %s73
    %s75 = sphi 0, %s73
    %s76 = sphi 0, %s75
    %s90 = sphi 0, %s76
    %s94 = sphi 0, %s94
    %s96 = sphi 0, %s94
    %s97 = sphi 0, %s96
    %s111 = sphi 0, %s97
    %s115 = sphi 0, %s115
    %s117 = sphi 0, %s115
    %s118 = sphi 0, %s117
    %s132 = sphi 0, %s118
    %s136 = sphi 0, %s136
    %s138 = sphi 0, %s136
    %s139 = sphi 0, %s138
    %s153 = sphi 0, %s139
    %s157 = sphi 0, %s157
    %s159 = sphi 0, %s157
    %s160 = sphi 0, %s159
    %s174 = sphi 0, %s160
    %s178 = sphi 0, %s178
    %s180 = sphi 0, %s178
    %s181 = sphi 0, %s180
    %s195 = sphi 0, %s181
    %s199 = sphi 0, %s199
    %s201 = sphi 0, %s199
    %s202 = sphi 0, %s201
    %s216 = sphi 0, %s202
    %s220 = sphi 0, %s220
    %s222 = sphi 0, %s220
    %s223 = sphi 0, %s222
    %s237 = sphi 0, %s223
    %s243 = sphi 0, %s245
    %s246 = sphi 0, %s243
    %s247 = sphi 0, %s246
    %s263 = sphi 0, %s247
  $region4: #{discriminator_forward.1} parent=0 // loop_header_branch
    %21 = sbr.rel (%p19) target = $region8
  $region5: #{discriminator_forward.1} parent=0 // loop_body
    %s23 = ssub.s32 %s18, 1
    %s24 = ssub.s32 %s18, 2
    %s25 = sadd.s32 %s18, 1
    %s26 = ssub.s32 %s18, %s25
    %p27 = scmp.eq.s32.totalorder %s26, 0
    %s29 = sadd.s32 %s28, 1
    %s30 = scalar_select %p27, %s28, %s29
    %p33 = pneg %p27
    %p34 = scmp.eq.s32.totalorder %s18, 1
    %p35 = por %p33, %p34
    %p36 = scmp.ne.s32.totalorder %s28, %s31
    %p37 = scmp.eq.s32.totalorder %s18, 0
    %p38 = por %p36, %p37
    %p39 = scmp.ne.s32.totalorder %s28, %s31
    %p40 = scmp.eq.s32.totalorder %s23, 1
    %p41 = por %p39, %p40
    %p42 = scmp.ne.s32.totalorder %s31, %s32
    %p43 = scmp.eq.s32.totalorder %s23, 0
    %p44 = por %p42, %p43
    %p45 = scmp.ne.s32.totalorder %s31, %s32
    %p46 = scmp.eq.s32.totalorder %s24, 1
    %p47 = por %p45, %p46
    %p49 = scmp.ne.s32.totalorder %s32, %s48
    %p50 = scmp.eq.s32.totalorder %s24, 0
    %p51 = por %p49, %p50
    %s53 = sadd.s32 %s52, 1
    %p56 = scmp.eq.s32.totalorder %s18, 1
    %p57 = scmp.ne.s32.totalorder %s52, %s54
    %p58 = scmp.eq.s32.totalorder %s18, 0
    %p59 = por %p57, %p58
    %p60 = scmp.ne.s32.totalorder %s52, %s54
    %p61 = scmp.eq.s32.totalorder %s23, 1
    %p62 = por %p60, %p61
    %p63 = scmp.ne.s32.totalorder %s54, %s55
    %p64 = scmp.eq.s32.totalorder %s23, 0
    %p65 = por %p63, %p64
    %p66 = scmp.ne.s32.totalorder %s54, %s55
    %p67 = scmp.eq.s32.totalorder %s24, 1
    %p68 = por %p66, %p67
    %p70 = scmp.ne.s32.totalorder %s55, %s69
    %p71 = scmp.eq.s32.totalorder %s24, 0
    %p72 = por %p70, %p71
    %s74 = sadd.s32 %s73, 1
    %p77 = scmp.eq.s32.totalorder %s18, 1
    %p78 = scmp.ne.s32.totalorder %s73, %s75
    %p79 = scmp.eq.s32.totalorder %s18, 0
    %p80 = por %p78, %p79
    %p81 = scmp.ne.s32.totalorder %s73, %s75
    %p82 = scmp.eq.s32.totalorder %s23, 1
    %p83 = por %p81, %p82
    %p84 = scmp.ne.s32.totalorder %s75, %s76
    %p85 = scmp.eq.s32.totalorder %s23, 0
    %p86 = por %p84, %p85
    %p87 = scmp.ne.s32.totalorder %s75, %s76
    %p88 = scmp.eq.s32.totalorder %s24, 1
    %p89 = por %p87, %p88
    %p91 = scmp.ne.s32.totalorder %s76, %s90
    %p92 = scmp.eq.s32.totalorder %s24, 0
    %p93 = por %p91, %p92
    %s95 = sadd.s32 %s94, 1
    %p98 = scmp.eq.s32.totalorder %s18, 1
    %p99 = scmp.ne.s32.totalorder %s94, %s96
    %p100 = scmp.eq.s32.totalorder %s18, 0
    %p101 = por %p99, %p100
    %p102 = scmp.ne.s32.totalorder %s94, %s96
    %p103 = scmp.eq.s32.totalorder %s23, 1
    %p104 = por %p102, %p103
    %p105 = scmp.ne.s32.totalorder %s96, %s97
    %p106 = scmp.eq.s32.totalorder %s23, 0
    %p107 = por %p105, %p106
    %p108 = scmp.ne.s32.totalorder %s96, %s97
    %p109 = scmp.eq.s32.totalorder %s24, 1
    %p110 = por %p108, %p109
    %p112 = scmp.ne.s32.totalorder %s97, %s111
    %p113 = scmp.eq.s32.totalorder %s24, 0
    %p114 = por %p112, %p113
    %s116 = sadd.s32 %s115, 1
    %p119 = scmp.eq.s32.totalorder %s18, 1
    %p120 = scmp.ne.s32.totalorder %s115, %s117
    %p121 = scmp.eq.s32.totalorder %s18, 0
    %p122 = por %p120, %p121
    %p123 = scmp.ne.s32.totalorder %s115, %s117
    %p124 = scmp.eq.s32.totalorder %s23, 1
    %p125 = por %p123, %p124
    %p126 = scmp.ne.s32.totalorder %s117, %s118
    %p127 = scmp.eq.s32.totalorder %s23, 0
    %p128 = por %p126, %p127
    %p129 = scmp.ne.s32.totalorder %s117, %s118
    %p130 = scmp.eq.s32.totalorder %s24, 1
    %p131 = por %p129, %p130
    %p133 = scmp.ne.s32.totalorder %s118, %s132
    %p134 = scmp.eq.s32.totalorder %s24, 0
    %p135 = por %p133, %p134
    %s137 = sadd.s32 %s136, 1
    %p140 = scmp.eq.s32.totalorder %s18, 1
    %p141 = scmp.ne.s32.totalorder %s136, %s138
    %p142 = scmp.eq.s32.totalorder %s18, 0
    %p143 = por %p141, %p142
    %p144 = scmp.ne.s32.totalorder %s136, %s138
    %p145 = scmp.eq.s32.totalorder %s23, 1
    %p146 = por %p144, %p145
    %p147 = scmp.ne.s32.totalorder %s138, %s139
    %p148 = scmp.eq.s32.totalorder %s23, 0
    %p149 = por %p147, %p148
    %p150 = scmp.ne.s32.totalorder %s138, %s139
    %p151 = scmp.eq.s32.totalorder %s24, 1
    %p152 = por %p150, %p151
    %p154 = scmp.ne.s32.totalorder %s139, %s153
    %p155 = scmp.eq.s32.totalorder %s24, 0
    %p156 = por %p154, %p155
    %s158 = sadd.s32 %s157, 1
    %p161 = scmp.eq.s32.totalorder %s18, 1
    %p162 = scmp.ne.s32.totalorder %s157, %s159
    %p163 = scmp.eq.s32.totalorder %s18, 0
    %p164 = por %p162, %p163
    %p165 = scmp.ne.s32.totalorder %s157, %s159
    %p166 = scmp.eq.s32.totalorder %s23, 1
    %p167 = por %p165, %p166
    %p168 = scmp.ne.s32.totalorder %s159, %s160
    %p169 = scmp.eq.s32.totalorder %s23, 0
    %p170 = por %p168, %p169
    %p171 = scmp.ne.s32.totalorder %s159, %s160
    %p172 = scmp.eq.s32.totalorder %s24, 1
    %p173 = por %p171, %p172
    %p175 = scmp.ne.s32.totalorder %s160, %s174
    %p176 = scmp.eq.s32.totalorder %s24, 0
    %p177 = por %p175, %p176
    %s179 = sadd.s32 %s178, 1
    %p182 = scmp.eq.s32.totalorder %s18, 1
    %p183 = scmp.ne.s32.totalorder %s178, %s180
    %p184 = scmp.eq.s32.totalorder %s18, 0
    %p185 = por %p183, %p184
    %p186 = scmp.ne.s32.totalorder %s178, %s180
    %p187 = scmp.eq.s32.totalorder %s23, 1
    %p188 = por %p186, %p187
    %p189 = scmp.ne.s32.totalorder %s180, %s181
    %p190 = scmp.eq.s32.totalorder %s23, 0
    %p191 = por %p189, %p190
    %p192 = scmp.ne.s32.totalorder %s180, %s181
    %p193 = scmp.eq.s32.totalorder %s24, 1
    %p194 = por %p192, %p193
    %p196 = scmp.ne.s32.totalorder %s181, %s195
    %p197 = scmp.eq.s32.totalorder %s24, 0
    %p198 = por %p196, %p197
    %s200 = sadd.s32 %s199, 1
    %p203 = scmp.eq.s32.totalorder %s18, 1
    %p204 = scmp.ne.s32.totalorder %s199, %s201
    %p205 = scmp.eq.s32.totalorder %s18, 0
    %p206 = por %p204, %p205
    %p207 = scmp.ne.s32.totalorder %s199, %s201
    %p208 = scmp.eq.s32.totalorder %s23, 1
    %p209 = por %p207, %p208
    %p210 = scmp.ne.s32.totalorder %s201, %s202
    %p211 = scmp.eq.s32.totalorder %s23, 0
    %p212 = por %p210, %p211
    %p213 = scmp.ne.s32.totalorder %s201, %s202
    %p214 = scmp.eq.s32.totalorder %s24, 1
    %p215 = por %p213, %p214
    %p217 = scmp.ne.s32.totalorder %s202, %s216
    %p218 = scmp.eq.s32.totalorder %s24, 0
    %p219 = por %p217, %p218
    %s221 = sadd.s32 %s220, 1
    %p224 = scmp.eq.s32.totalorder %s18, 1
    %p225 = scmp.ne.s32.totalorder %s220, %s222
    %p226 = scmp.eq.s32.totalorder %s18, 0
    %p227 = por %p225, %p226
    %p228 = scmp.ne.s32.totalorder %s220, %s222
    %p229 = scmp.eq.s32.totalorder %s23, 1
    %p230 = por %p228, %p229
    %p231 = scmp.ne.s32.totalorder %s222, %s223
    %p232 = scmp.eq.s32.totalorder %s23, 0
    %p233 = por %p231, %p232
    %p234 = scmp.ne.s32.totalorder %s222, %s223
    %p235 = scmp.eq.s32.totalorder %s24, 1
    %p236 = por %p234, %p235
    %p238 = scmp.ne.s32.totalorder %s223, %s237
    %p239 = scmp.eq.s32.totalorder %s24, 0
    %p240 = por %p238, %p239
    %s241 = ssub.s32 %s18, %s25
    %p242 = scmp.eq.s32.totalorder %s241, 0
    %s244 = sadd.s32 %s243, 1
    %s245 = scalar_select %p242, %s243, %s244
    %p248 = pneg %p242
    %p249 = scmp.eq.s32.totalorder %s18, 1
    %p250 = por %p248, %p249
    %p251 = scmp.ne.s32.totalorder %s243, %s246
    %p252 = scmp.eq.s32.totalorder %s18, 0
    %p253 = por %p251, %p252
    %p254 = scmp.ne.s32.totalorder %s243, %s246
    %p255 = scmp.eq.s32.totalorder %s23, 1
    %p256 = por %p254, %p255
    %p257 = scmp.ne.s32.totalorder %s246, %s247
    %p258 = scmp.eq.s32.totalorder %s23, 0
    %p259 = por %p257, %p258
    %p260 = scmp.ne.s32.totalorder %s246, %s247
    %p261 = scmp.eq.s32.totalorder %s24, 1
    %p262 = por %p260, %p261
    %p264 = scmp.ne.s32.totalorder %s247, %s263
    %p265 = scmp.eq.s32.totalorder %s24, 0
    %p266 = por %p264, %p265
    %p267 = scmp.le.s32.totalorder 1, %s18
    %p268 = scmp.lt.s32.totalorder %s18, 3
    %p269 = pnand %p267, %p268
    %p270 = pneg %p269
    // Predicated region
    $region9: #{discriminator_forward.1} parent=5 // pred_check
      _
    $region10: #{discriminator_forward.1} parent=5 // pred_check_branch
      %272 = sbr.rel (%p269) target = $region12
    $region11: #{discriminator_forward.1} parent=5 // pred_region
      %s273 = ssub.s32 %s18, 1
      // Predicated region
      $region13: #{discriminator_forward.1} parent=11 // pred_check
        %p274 = pneg %p65
      $region14: #{discriminator_forward.1} parent=11 // pred_check_branch
        %276 = sbr.rel (%p274) target = $region16
      $region15: #{discriminator_forward.1} parent=11 // pred_region
        _
      $region16: #{discriminator_forward.1} parent=11 // pred_fallthru
        _
      // Predicated region
      $region17: #{discriminator_forward.1} parent=11 // pred_check
        %p277 = pneg %p86
      $region18: #{discriminator_forward.1} parent=11 // pred_check_branch
        %279 = sbr.rel (%p277) target = $region20
      $region19: #{discriminator_forward.1} parent=11 // pred_region
        _
      $region20: #{discriminator_forward.1} parent=11 // pred_fallthru
        _
      // Predicated region
      $region21: #{discriminator_forward.1} parent=11 // pred_check
        %p280 = pneg %p107
      $region22: #{discriminator_forward.1} parent=11 // pred_check_branch
        %282 = sbr.rel (%p280) target = $region24
      $region23: #{discriminator_forward.1} parent=11 // pred_region
        _
      $region24: #{discriminator_forward.1} parent=11 // pred_fallthru
        _
      // Predicated region
      $region25: #{discriminator_forward.1} parent=11 // pred_check
        %p283 = pneg %p128
      $region26: #{discriminator_forward.1} parent=11 // pred_check_branch
        %285 = sbr.rel (%p283) target = $region28
      $region27: #{discriminator_forward.1} parent=11 // pred_region
        _
      $region28: #{discriminator_forward.1} parent=11 // pred_fallthru
        _
      // Predicated region
      $region29: #{discriminator_forward.1} parent=11 // pred_check
        %p286 = pneg %p149
      $region30: #{discriminator_forward.1} parent=11 // pred_check_branch
        %288 = sbr.rel (%p286) target = $region32
      $region31: #{discriminator_forward.1} parent=11 // pred_region
        _
      $region32: #{discriminator_forward.1} parent=11 // pred_fallthru
        _
      // Predicated region
      $region33: #{discriminator_forward.1} parent=11 // pred_check
        %p289 = pneg %p170
      $region34: #{discriminator_forward.1} parent=11 // pred_check_branch
        %291 = sbr.rel (%p289) target = $region36
      $region35: #{discriminator_forward.1} parent=11 // pred_region
        _
      $region36: #{discriminator_forward.1} parent=11 // pred_fallthru
        _
      // Predicated region
      $region37: #{discriminator_forward.1} parent=11 // pred_check
        %p292 = pneg %p191
      $region38: #{discriminator_forward.1} parent=11 // pred_check_branch
        %294 = sbr.rel (%p292) target = $region40
      $region39: #{discriminator_forward.1} parent=11 // pred_region
        _
      $region40: #{discriminator_forward.1} parent=11 // pred_fallthru
        _
      // Predicated region
      $region41: #{discriminator_forward.1} parent=11 // pred_check
        %p295 = pneg %p212
      $region42: #{discriminator_forward.1} parent=11 // pred_check_branch
        %297 = sbr.rel (%p295) target = $region44
      $region43: #{discriminator_forward.1} parent=11 // pred_region
        _
      $region44: #{discriminator_forward.1} parent=11 // pred_fallthru
        _
      // Predicated region
      $region45: #{discriminator_forward.1} parent=11 // pred_check
        %p298 = pneg %p233
      $region46: #{discriminator_forward.1} parent=11 // pred_check_branch
        %300 = sbr.rel (%p298) target = $region48
      $region47: #{discriminator_forward.1} parent=11 // pred_region
        _
      $region48: #{discriminator_forward.1} parent=11 // pred_fallthru
        _
    $region12: #{discriminator_forward.1} parent=5 // pred_fallthru
      _
    %p301 = scmp.lt.s32.totalorder %s18, 2
    // Predicated region
    $region49: #{discriminator_forward.1} parent=5 // pred_check
      %p302 = pneg %p301
    $region50: #{discriminator_forward.1} parent=5 // pred_check_branch
      %304 = sbr.rel (%p302) target = $region52
    $region51: #{discriminator_forward.1} parent=5 // pred_region
      // Predicated region
      $region53: #{discriminator_forward.1} parent=51 // pred_check
        %p305 = pneg %p38
      $region54: #{discriminator_forward.1} parent=51 // pred_check_branch
        %307 = sbr.rel (%p305) target = $region56
      $region55: #{discriminator_forward.1} parent=51 // pred_region
        %p308 = scmp.lt.s32.totalorder %s18, 1
        %s309 = scalar_select %p308, %s18, 1
        %s310 = smul.addr %s309, 16
        %s311 = smul.addr %s310, 4
        %s312 = scalar_lea.vmem %s0, %s311
      $region56: #{discriminator_forward.1} parent=51 // pred_fallthru
        _
    $region52: #{discriminator_forward.1} parent=5 // pred_fallthru
      _
    %p313 = scmp.le.s32.totalorder 1, %s18
    %p314 = scmp.lt.s32.totalorder %s18, 3
    %p315 = pnand %p313, %p314
    %p316 = pneg %p315
    // Predicated region
    $region57: #{discriminator_forward.1} parent=5 // pred_check
      _
    $region58: #{discriminator_forward.1} parent=5 // pred_check_branch
      %318 = sbr.rel (%p315) target = $region60
    $region59: #{discriminator_forward.1} parent=5 // pred_region
      %s319 = ssub.s32 %s18, 1
      %p320 = scmp.lt.s32.totalorder %s23, 1
      %s321 = scalar_select %p320, %s23, 1
      %s322 = smul.addr %s321, 16
      %s323 = smul.addr %s322, 4
      %s324 = scalar_lea.vmem %s0, %s323
      %p325 = pneg %p44
      %p326 = pneg %p41
      %p327 = pneg %p65
      %p328 = pneg %p62
      %p329 = pneg %p86
      %p330 = pneg %p83
      %p331 = pneg %p107
      %p332 = pneg %p104
      %p333 = pneg %p128
      %p334 = pneg %p125
      %p335 = pneg %p149
      %p336 = pneg %p146
      %p337 = pneg %p170
      %p338 = pneg %p167
      %p339 = pneg %p191
      %p340 = pneg %p188
      %p341 = pneg %p212
      %p342 = pneg %p209
      %p343 = pneg %p233
      %p344 = pneg %p230
      %p345 = pneg %p259
      %p346 = pneg %p256
      %p347 = scmp.lt.s32.totalorder %s23, 1
      %s348 = scalar_select %p347, %s23, 1
      %s349 = scalar_lea.vmem %s10, %s348
      %p350 = scmp.lt.s32.totalorder %s23, 1
      %s351 = scalar_select %p350, %s23, 1
      %s352 = smul.addr %s351, 16
      %s353 = smul.addr %s352, 4
      %s354 = scalar_lea.vmem %s0, %s353
      %p355 = scmp.lt.s32.totalorder %s23, 1
      %s356 = scalar_select %p355, %s23, 1
      %s357 = scalar_lea.vmem %s10, %s356
      %v359 = vld [vmem:[%s1] sm:$0xff]
      %v360 = vld [vmem:[%s1 + $0x8] sm:$0xff]
      %363 = vst [vmem:[#allocation1] ss:$2 sm:$0xff] %v359
      %s364 = scalar_lea.vmem [#allocation1], 16
      %365 = vst [vmem:[%s364] ss:$2 sm:$0xff] %v360
      %v366 = vld.sshfl [vmem:[#allocation1] sm:$0xff pattern:$0x75316420]
      %v367 = vld.sshfl [vmem:[#allocation1 + $0x8] sm:$0xff pattern:$0x75316420]
      %v368 = vld.sshfl [vmem:[#allocation1 + $0x10] sm:$0xff pattern:$0x75316420]
      %v369 = vld.sshfl [vmem:[#allocation1 + $0x18] sm:$0xff pattern:$0x75316420]
      %v374 = vpack.c.bf16 %v367, %v366
      %v375 = vpack.c.bf16 %v369, %v368
      %v376 = vld [vmem:[%s2] sm:$0xf]
      %v377 = vld [vmem:[%s2 + $0x4] sm:$0xf]
      %v378 = vld [vmem:[%s2 + $0x8] sm:$0xf]
      %v379 = vld [vmem:[%s2 + $0xc] sm:$0xf]
      %v380 = vld [vmem:[%s2 + $0x10] sm:$0xf]
      %v381 = vld [vmem:[%s2 + $0x14] sm:$0xf]
      %v382 = vld [vmem:[%s2 + $0x18] sm:$0xf]
      %v383 = vld [vmem:[%s2 + $0x1c] sm:$0xf]
      %v384 = vld [vmem:[%s354] sm:$0xff]
      %v385 = vld [vmem:[%s354 + $0x8] sm:$0xff]
      %v386 = vld [vmem:[%s354 + $0x10] sm:$0xff]
      %v387 = vld [vmem:[%s354 + $0x18] sm:$0xff]
      %v388 = vld [vmem:[%s354 + $0x20] sm:$0xff]
      %v389 = vld [vmem:[%s354 + $0x28] sm:$0xff]
      %v390 = vld [vmem:[%s354 + $0x30] sm:$0x33]
      %v391 = vld [vmem:[%s354 + $0x38] sm:$0x33]
      %v392 = vld [vmem:[%s3] sm:$0xff]
      %v393 = vld [vmem:[%s3 + $0x8] sm:$0xff]
      %v394 = vld [vmem:[%s3 + $0x10] sm:$0xff]
      %v395 = vld [vmem:[%s3 + $0x18] sm:$0xff]
      %v396 = vld [vmem:[%s3 + $0x20] sm:$0xff]
      %v397 = vld [vmem:[%s3 + $0x28] sm:$0xff]
      %v398 = vld [vmem:[%s3 + $0x30] sm:$0xff]
      %v399 = vld [vmem:[%s3 + $0x38] sm:$0xff]
      %401 = vset.pattern.permute.xlu0 0
      %402 = vperm.xlu0 %401, %v392
      %v403 = vpop.permute.xlu0 %402
      %406 = vset.pattern.permute.xlu0 0
      %407 = vperm.xlu0 %406, %v393
      %v408 = vpop.permute.xlu0 %407
      %411 = vset.pattern.permute.xlu0 0
      %412 = vperm.xlu0 %411, %v394
      %v413 = vpop.permute.xlu0 %412
      %416 = vset.pattern.permute.xlu0 0
      %417 = vperm.xlu0 %416, %v395
      %v418 = vpop.permute.xlu0 %417
      %421 = vset.pattern.permute.xlu0 0
      %422 = vperm.xlu0 %421, %v396
      %v423 = vpop.permute.xlu0 %422
      %426 = vset.pattern.permute.xlu0 0
      %427 = vperm.xlu0 %426, %v397
      %v428 = vpop.permute.xlu0 %427
      %431 = vset.pattern.permute.xlu0 0
      %432 = vperm.xlu0 %431, %v398
      %v433 = vpop.permute.xlu0 %432
      %436 = vset.pattern.permute.xlu0 0
      %437 = vperm.xlu0 %436, %v399
      %v438 = vpop.permute.xlu0 %437
      %v448 = vunpack.c.l.b16 %v376
      %v449 = vunpack.c.l.b16 %v377
      %v450 = vunpack.c.l.b16 %v378
      %v451 = vunpack.c.l.b16 %v379
      %v452 = vunpack.c.l.b16 %v380
      %v453 = vunpack.c.l.b16 %v381
      %v454 = vunpack.c.l.b16 %v382
      %v455 = vunpack.c.l.b16 %v383
      %v456 = vpack.c.b16 %v449, %v448
      %v457 = vpack.c.b16 %v451, %v450
      %v458 = vpack.c.b16 %v453, %v452
      %v459 = vpack.c.b16 %v455, %v454
      %v468 = vunpack.c.l.b16 %v384
      %v469 = vunpack.c.h.b16 %v384
      %v470 = vunpack.c.l.b16 %v385
      %v471 = vunpack.c.h.b16 %v385
      %v472 = vunpack.c.l.b16 %v386
      %v473 = vunpack.c.h.b16 %v386
      %v474 = vunpack.c.l.b16 %v387
      %v475 = vunpack.c.h.b16 %v387
      %v476 = vunpack.c.l.b16 %v388
      %v477 = vunpack.c.h.b16 %v388
      %v478 = vunpack.c.l.b16 %v389
      %v479 = vunpack.c.h.b16 %v389
      %v480 = vunpack.c.l.b16 %v390
      %v481 = vunpack.c.h.b16 %v390
      %v482 = vunpack.c.l.b16 %v391
      %v483 = vunpack.c.h.b16 %v391
      %v484 = vpack.c.b16 %v472, %v468
      %v485 = vpack.c.b16 %v473, %v469
      %v486 = vpack.c.b16 %v474, %v470
      %v487 = vpack.c.b16 %v475, %v471
      %v488 = vpack.c.b16 %v480, %v476
      %v489 = vpack.c.b16 %v481, %v477
      %v490 = vpack.c.b16 %v482, %v478
      %v491 = vpack.c.b16 %v483, %v479
      %vm496 = vcmask 220160
      %v498 = vsel %vm496, %v456, 0
      %v501 = vsel %vm496, %v457, 0
      %v504 = vsel %vm496, %v458, 0
      %v507 = vsel %vm496, %v459, 0
      %vm509 = vcmask 1044480
      %vm510 = vcmask 1045504
      %v511 = vsel %vm509, 4294967295, 65535
      %v512 = vsel %vm510, %v511, 0
      %v514 = vand.u32 %v488, %v512
      %v517 = vand.u32 %v489, %v512
      %v520 = vand.u32 %v490, %v512
      %v523 = vand.u32 %v491, %v512
      %525 = vmatpush.bf16.msra.mxu0 0
      %526 = vmatpush.bf16.msra.mxu0 0
      %527 = vmatpush.bf16.msra.mxu0 0
      %528 = vmatpush.bf16.msra.mxu0 0
      %529 = vmatpush.bf16.msra.mxu0 0
      %530 = vmatpush.bf16.msra.mxu0 0
      %531 = vmatpush.bf16.msra.mxu0 %v514
      %532 = vmatpush.bf16.msra.mxu0 %v484
      %533 = vmatmul.bf16.gmra.mxu0 %v498
      %v534 = vpop.f32.mrf.mxu0
      %v535 = vadd.f32 %v403, %v534
      %v536 = vpop.f32.mrf.mxu0
      %v537 = vadd.f32 %v408, %v536
      %538 = vmatmul.bf16.gmra.mxu0 %v501
      %v539 = vpop.f32.mrf.mxu0
      %v540 = vadd.f32 %v413, %v539
      %v541 = vpop.f32.mrf.mxu0
      %v542 = vadd.f32 %v418, %v541
      %543 = vmatmul.bf16.gmra.mxu0 %v504
      %v544 = vpop.f32.mrf.mxu0
      %v545 = vadd.f32 %v423, %v544
      %v546 = vpop.f32.mrf.mxu0
      %v547 = vadd.f32 %v428, %v546
      %548 = vmatmul.bf16.gmra.mxu0 %v507
      %v549 = vpop.f32.mrf.mxu0
      %v550 = vadd.f32 %v433, %v549
      %v551 = vpop.f32.mrf.mxu0
      %v552 = vadd.f32 %v438, %v551
      %553 = vdwg.mxu0
      %554 = vmatpush.bf16.msra.mxu0 0
      %555 = vmatpush.bf16.msra.mxu0 0
      %556 = vmatpush.bf16.msra.mxu0 0
      %557 = vmatpush.bf16.msra.mxu0 0
      %558 = vmatpush.bf16.msra.mxu0 0
      %559 = vmatpush.bf16.msra.mxu0 0
      %560 = vmatpush.bf16.msra.mxu0 %v517
      %561 = vmatpush.bf16.msra.mxu0 %v485
      %562 = vmatmul.bf16.gmra.mxu0 %v498
      %v563 = vpop.f32.mrf.mxu0
      %v564 = vadd.f32 %v403, %v563
      %v565 = vpop.f32.mrf.mxu0
      %v566 = vadd.f32 %v408, %v565
      %567 = vmatmul.bf16.gmra.mxu0 %v501
      %v568 = vpop.f32.mrf.mxu0
      %v569 = vadd.f32 %v413, %v568
      %v570 = vpop.f32.mrf.mxu0
      %v571 = vadd.f32 %v418, %v570
      %572 = vmatmul.bf16.gmra.mxu0 %v504
      %v573 = vpop.f32.mrf.mxu0
      %v574 = vadd.f32 %v423, %v573
      %v575 = vpop.f32.mrf.mxu0
      %v576 = vadd.f32 %v428, %v575
      %577 = vmatmul.bf16.gmra.mxu0 %v507
      %v578 = vpop.f32.mrf.mxu0
      %v579 = vadd.f32 %v433, %v578
      %v580 = vpop.f32.mrf.mxu0
      %v581 = vadd.f32 %v438, %v580
      %582 = vdwg.mxu0
      %583 = vmatpush.bf16.msra.mxu0 0
      %584 = vmatpush.bf16.msra.mxu0 0
      %585 = vmatpush.bf16.msra.mxu0 0
      %586 = vmatpush.bf16.msra.mxu0 0
      %587 = vmatpush.bf16.msra.mxu0 0
      %588 = vmatpush.bf16.msra.mxu0 0
      %589 = vmatpush.bf16.msra.mxu0 %v520
      %590 = vmatpush.bf16.msra.mxu0 %v486
      %591 = vmatmul.bf16.gmra.mxu0 %v498
      %v592 = vpop.f32.mrf.mxu0
      %v593 = vadd.f32 %v403, %v592
      %v594 = vpop.f32.mrf.mxu0
      %v595 = vadd.f32 %v408, %v594
      %596 = vmatmul.bf16.gmra.mxu0 %v501
      %v597 = vpop.f32.mrf.mxu0
      %v598 = vadd.f32 %v413, %v597
      %v599 = vpop.f32.mrf.mxu0
      %v600 = vadd.f32 %v418, %v599
      %601 = vmatmul.bf16.gmra.mxu0 %v504
      %v602 = vpop.f32.mrf.mxu0
      %v603 = vadd.f32 %v423, %v602
      %v604 = vpop.f32.mrf.mxu0
      %v605 = vadd.f32 %v428, %v604
      %606 = vmatmul.bf16.gmra.mxu0 %v507
      %v607 = vpop.f32.mrf.mxu0
      %v608 = vadd.f32 %v433, %v607
      %v609 = vpop.f32.mrf.mxu0
      %v610 = vadd.f32 %v438, %v609
      %611 = vdwg.mxu0
      %612 = vmatpush.bf16.msra.mxu0 0
      %613 = vmatpush.bf16.msra.mxu0 0
      %614 = vmatpush.bf16.msra.mxu0 0
      %615 = vmatpush.bf16.msra.mxu0 0
      %616 = vmatpush.bf16.msra.mxu0 0
      %617 = vmatpush.bf16.msra.mxu0 0
      %618 = vmatpush.bf16.msra.mxu0 %v523
      %619 = vmatpush.bf16.msra.mxu0 %v487
      %620 = vmatmul.bf16.gmra.mxu0 %v498
      %v621 = vpop.f32.mrf.mxu0
      %v622 = vadd.f32 %v403, %v621
      %v623 = vpop.f32.mrf.mxu0
      %v624 = vadd.f32 %v408, %v623
      %625 = vmatmul.bf16.gmra.mxu0 %v501
      %v626 = vpop.f32.mrf.mxu0
      %v627 = vadd.f32 %v413, %v626
      %v628 = vpop.f32.mrf.mxu0
      %v629 = vadd.f32 %v418, %v628
      %630 = vmatmul.bf16.gmra.mxu0 %v504
      %v631 = vpop.f32.mrf.mxu0
      %v632 = vadd.f32 %v423, %v631
      %v633 = vpop.f32.mrf.mxu0
      %v634 = vadd.f32 %v428, %v633
      %635 = vmatmul.bf16.gmra.mxu0 %v507
      %v636 = vpop.f32.mrf.mxu0
      %v637 = vadd.f32 %v433, %v636
      %v638 = vpop.f32.mrf.mxu0
      %v639 = vadd.f32 %v438, %v638
      %640 = vdwg.mxu0
      %v641 = vmax.f32 %v535, 0.0
      %v642 = vmax.f32 %v564, 0.0
      %v643 = vmax.f32 %v593, 0.0
      %v644 = vmax.f32 %v622, 0.0
      %v645 = vmax.f32 %v537, 0.0
      %v646 = vmax.f32 %v566, 0.0
      %v647 = vmax.f32 %v595, 0.0
      %v648 = vmax.f32 %v624, 0.0
      %v649 = vmax.f32 %v540, 0.0
      %v650 = vmax.f32 %v569, 0.0
      %v651 = vmax.f32 %v598, 0.0
      %v652 = vmax.f32 %v627, 0.0
      %v653 = vmax.f32 %v542, 0.0
      %v654 = vmax.f32 %v571, 0.0
      %v655 = vmax.f32 %v600, 0.0
      %v656 = vmax.f32 %v629, 0.0
      %v657 = vmax.f32 %v545, 0.0
      %v658 = vmax.f32 %v574, 0.0
      %v659 = vmax.f32 %v603, 0.0
      %v660 = vmax.f32 %v632, 0.0
      %v661 = vmax.f32 %v547, 0.0
      %v662 = vmax.f32 %v576, 0.0
      %v663 = vmax.f32 %v605, 0.0
      %v664 = vmax.f32 %v634, 0.0
      %v665 = vmax.f32 %v550, 0.0
      %v666 = vmax.f32 %v579, 0.0
      %v667 = vmax.f32 %v608, 0.0
      %v668 = vmax.f32 %v637, 0.0
      %v669 = vmax.f32 %v552, 0.0
      %v670 = vmax.f32 %v581, 0.0
      %v671 = vmax.f32 %v610, 0.0
      %v672 = vmax.f32 %v639, 0.0
      %v673 = vpack.c.bf16 %v642, %v641
      %v674 = vpack.c.bf16 %v644, %v643
      %v675 = vpack.c.bf16 %v646, %v645
      %v676 = vpack.c.bf16 %v648, %v647
      %v677 = vpack.c.bf16 %v650, %v649
      %v678 = vpack.c.bf16 %v652, %v651
      %v679 = vpack.c.bf16 %v654, %v653
      %v680 = vpack.c.bf16 %v656, %v655
      %v681 = vpack.c.bf16 %v658, %v657
      %v682 = vpack.c.bf16 %v660, %v659
      %v683 = vpack.c.bf16 %v662, %v661
      %v684 = vpack.c.bf16 %v664, %v663
      %v685 = vpack.c.bf16 %v666, %v665
      %v686 = vpack.c.bf16 %v668, %v667
      %v687 = vpack.c.bf16 %v670, %v669
      %v688 = vpack.c.bf16 %v672, %v671
      %v705 = vunpack.c.l.b16 %v673
      %v706 = vunpack.c.h.b16 %v673
      %v707 = vunpack.c.l.b16 %v674
      %v708 = vunpack.c.h.b16 %v674
      %v709 = vunpack.c.l.b16 %v675
      %v710 = vunpack.c.h.b16 %v675
      %v711 = vunpack.c.l.b16 %v676
      %v712 = vunpack.c.h.b16 %v676
      %v713 = vunpack.c.l.b16 %v677
      %v714 = vunpack.c.h.b16 %v677
      %v715 = vunpack.c.l.b16 %v678
      %v716 = vunpack.c.h.b16 %v678
      %v717 = vunpack.c.l.b16 %v679
      %v718 = vunpack.c.h.b16 %v679
      %v719 = vunpack.c.l.b16 %v680
      %v720 = vunpack.c.h.b16 %v680
      %v721 = vunpack.c.l.b16 %v681
      %v722 = vunpack.c.h.b16 %v681
      %v723 = vunpack.c.l.b16 %v682
      %v724 = vunpack.c.h.b16 %v682
      %v725 = vunpack.c.l.b16 %v683
      %v726 = vunpack.c.h.b16 %v683
      %v727 = vunpack.c.l.b16 %v684
      %v728 = vunpack.c.h.b16 %v684
      %v729 = vunpack.c.l.b16 %v685
      %v730 = vunpack.c.h.b16 %v685
      %v731 = vunpack.c.l.b16 %v686
      %v732 = vunpack.c.h.b16 %v686
      %v733 = vunpack.c.l.b16 %v687
      %v734 = vunpack.c.h.b16 %v687
      %v735 = vunpack.c.l.b16 %v688
      %v736 = vunpack.c.h.b16 %v688
      %v737 = vpack.c.b16 %v709, %v705
      %v738 = vpack.c.b16 %v710, %v706
      %v739 = vpack.c.b16 %v711, %v707
      %v740 = vpack.c.b16 %v712, %v708
      %v741 = vpack.c.b16 %v717, %v713
      %v742 = vpack.c.b16 %v718, %v714
      %v743 = vpack.c.b16 %v719, %v715
      %v744 = vpack.c.b16 %v720, %v716
      %v745 = vpack.c.b16 %v725, %v721
      %v746 = vpack.c.b16 %v726, %v722
      %v747 = vpack.c.b16 %v727, %v723
      %v748 = vpack.c.b16 %v728, %v724
      %v749 = vpack.c.b16 %v733, %v729
      %v750 = vpack.c.b16 %v734, %v730
      %v751 = vpack.c.b16 %v735, %v731
      %v752 = vpack.c.b16 %v736, %v732
      %753 = vrot.lane.b32.xlu0 %v737, 1
      %v754 = vpop.permute.xlu0 %753
      %755 = vrot.lane.b32.xlu0 %v738, 1
      %v756 = vpop.permute.xlu0 %755
      %757 = vrot.lane.b32.xlu0 %v739, 1
      %v758 = vpop.permute.xlu0 %757
      %759 = vrot.lane.b32.xlu0 %v740, 1
      %v760 = vpop.permute.xlu0 %759
      %761 = vrot.lane.b32.xlu0 %v741, 1
      %v762 = vpop.permute.xlu0 %761
      %763 = vrot.lane.b32.xlu0 %v742, 1
      %v764 = vpop.permute.xlu0 %763
      %765 = vrot.lane.b32.xlu0 %v743, 1
      %v766 = vpop.permute.xlu0 %765
      %767 = vrot.lane.b32.xlu0 %v744, 1
      %v768 = vpop.permute.xlu0 %767
      %769 = vrot.lane.b32.xlu0 %v745, 1
      %v770 = vpop.permute.xlu0 %769
      %771 = vrot.lane.b32.xlu0 %v746, 1
      %v772 = vpop.permute.xlu0 %771
      %773 = vrot.lane.b32.xlu0 %v747, 1
      %v774 = vpop.permute.xlu0 %773
      %775 = vrot.lane.b32.xlu0 %v748, 1
      %v776 = vpop.permute.xlu0 %775
      %777 = vrot.lane.b32.xlu0 %v749, 1
      %v778 = vpop.permute.xlu0 %777
      %779 = vrot.lane.b32.xlu0 %v750, 1
      %v780 = vpop.permute.xlu0 %779
      %781 = vrot.lane.b32.xlu0 %v751, 1
      %v782 = vpop.permute.xlu0 %781
      %783 = vrot.lane.b32.xlu0 %v752, 1
      %v784 = vpop.permute.xlu0 %783
      %vm785 = vcmask 7168
      %v786 = vsel %vm785, %v754, %v756
      %v787 = vsel %vm785, %v756, %v758
      %v788 = vsel %vm785, %v758, %v760
      %v789 = vsel %vm785, %v762, %v764
      %v790 = vsel %vm785, %v764, %v766
      %v791 = vsel %vm785, %v766, %v768
      %v792 = vsel %vm785, %v770, %v772
      %v793 = vsel %vm785, %v772, %v774
      %v794 = vsel %vm785, %v774, %v776
      %v795 = vsel %vm785, %v778, %v780
      %v796 = vsel %vm785, %v780, %v782
      %v797 = vsel %vm785, %v782, %v784
      %vm810 = vcmask 7168
      %v813 = vsel %vm810, 0, %v754
      %v816 = vsel %vm810, 0, %v762
      %v819 = vsel %vm810, 0, %v770
      %v822 = vsel %vm810, 0, %v778
      %v826 = vunpack.c.l.b16 %v374
      %v827 = vunpack.c.h.b16 %v374
      %v828 = vunpack.c.l.b16 %v375
      %v829 = vunpack.c.h.b16 %v375
      %v830 = vpack.c.b16 %v826, %v826
      %v831 = vpack.c.b16 %v827, %v827
      %v832 = vpack.c.b16 %v828, %v828
      %v833 = vpack.c.b16 %v829, %v829
      %v835 = vpack.i.b16 %v830, %v830
      %v837 = vperm.slane %v835, 0
      %v839 = vpack.i.b16 %v831, %v831
      %v841 = vperm.slane %v839, 0
      %v843 = vpack.i.b16 %v832, %v832
      %v845 = vperm.slane %v843, 0
      %v847 = vpack.i.b16 %v833, %v833
      %v849 = vperm.slane %v847, 0
      %v850 = vunpack.c.l.bf16 %v837
      %v851 = vunpack.c.l.bf16 %v841
      %v852 = vunpack.c.l.bf16 %v845
      %v853 = vunpack.c.l.bf16 %v849
      %v854 = vunpack.c.l.bf16 %v813
      %v855 = vunpack.c.l.bf16 %v786
      %v856 = vunpack.c.l.bf16 %v787
      %v857 = vunpack.c.l.bf16 %v788
      %v858 = vunpack.c.h.bf16 %v813
      %v859 = vunpack.c.h.bf16 %v786
      %v860 = vunpack.c.h.bf16 %v787
      %v861 = vunpack.c.h.bf16 %v788
      %v862 = vunpack.c.l.bf16 %v816
      %v863 = vunpack.c.l.bf16 %v789
      %v864 = vunpack.c.l.bf16 %v790
      %v865 = vunpack.c.l.bf16 %v791
      %v866 = vunpack.c.h.bf16 %v816
      %v867 = vunpack.c.h.bf16 %v789
      %v868 = vunpack.c.h.bf16 %v790
      %v869 = vunpack.c.h.bf16 %v791
      %v870 = vunpack.c.l.bf16 %v819
      %v871 = vunpack.c.l.bf16 %v792
      %v872 = vunpack.c.l.bf16 %v793
      %v873 = vunpack.c.l.bf16 %v794
      %v874 = vunpack.c.h.bf16 %v819
      %v875 = vunpack.c.h.bf16 %v792
      %v876 = vunpack.c.h.bf16 %v793
      %v877 = vunpack.c.h.bf16 %v794
      %v878 = vunpack.c.l.bf16 %v822
      %v879 = vunpack.c.l.bf16 %v795
      %v880 = vunpack.c.l.bf16 %v796
      %v881 = vunpack.c.l.bf16 %v797
      %v882 = vunpack.c.h.bf16 %v822
      %v883 = vunpack.c.h.bf16 %v795
      %v884 = vunpack.c.h.bf16 %v796
      %v885 = vunpack.c.h.bf16 %v797
      %v886 = vmul.f32 %v850, %v854
      %v887 = vmul.f32 %v851, %v855
      %v888 = vmul.f32 %v852, %v856
      %v889 = vmul.f32 %v853, %v857
      %v890 = vmul.f32 %v850, %v858
      %v891 = vmul.f32 %v851, %v859
      %v892 = vmul.f32 %v852, %v860
      %v893 = vmul.f32 %v853, %v861
      %v894 = vmul.f32 %v850, %v862
      %v895 = vmul.f32 %v851, %v863
      %v896 = vmul.f32 %v852, %v864
      %v897 = vmul.f32 %v853, %v865
      %v898 = vmul.f32 %v850, %v866
      %v899 = vmul.f32 %v851, %v867
      %v900 = vmul.f32 %v852, %v868
      %v901 = vmul.f32 %v853, %v869
      %v902 = vmul.f32 %v850, %v870
      %v903 = vmul.f32 %v851, %v871
      %v904 = vmul.f32 %v852, %v872
      %v905 = vmul.f32 %v853, %v873
      %v906 = vmul.f32 %v850, %v874
      %v907 = vmul.f32 %v851, %v875
      %v908 = vmul.f32 %v852, %v876
      %v909 = vmul.f32 %v853, %v877
      %v910 = vmul.f32 %v850, %v878
      %v911 = vmul.f32 %v851, %v879
      %v912 = vmul.f32 %v852, %v880
      %v913 = vmul.f32 %v853, %v881
      %v914 = vmul.f32 %v850, %v882
      %v915 = vmul.f32 %v851, %v883
      %v916 = vmul.f32 %v852, %v884
      %v917 = vmul.f32 %v853, %v885
      %v918 = vpack.c.bf16 %v887, %v886
      %v919 = vpack.c.bf16 %v889, %v888
      %v920 = vpack.c.bf16 %v891, %v890
      %v921 = vpack.c.bf16 %v893, %v892
      %v922 = vpack.c.bf16 %v895, %v894
      %v923 = vpack.c.bf16 %v897, %v896
      %v924 = vpack.c.bf16 %v899, %v898
      %v925 = vpack.c.bf16 %v901, %v900
      %v926 = vpack.c.bf16 %v903, %v902
      %v927 = vpack.c.bf16 %v905, %v904
      %v928 = vpack.c.bf16 %v907, %v906
      %v929 = vpack.c.bf16 %v909, %v908
      %v930 = vpack.c.bf16 %v911, %v910
      %v931 = vpack.c.bf16 %v913, %v912
      %v932 = vpack.c.bf16 %v915, %v914
      %v933 = vpack.c.bf16 %v917, %v916
      %934 = vrot.lane.b32.xlu0 %v737, 127
      %v935 = vpop.permute.xlu0 %934
      %936 = vrot.lane.b32.xlu0 %v738, 127
      %v937 = vpop.permute.xlu0 %936
      %938 = vrot.lane.b32.xlu0 %v739, 127
      %v939 = vpop.permute.xlu0 %938
      %940 = vrot.lane.b32.xlu0 %v740, 127
      %v941 = vpop.permute.xlu0 %940
      %942 = vrot.lane.b32.xlu0 %v741, 127
      %v943 = vpop.permute.xlu0 %942
      %944 = vrot.lane.b32.xlu0 %v742, 127
      %v945 = vpop.permute.xlu0 %944
      %946 = vrot.lane.b32.xlu0 %v743, 127
      %v947 = vpop.permute.xlu0 %946
      %948 = vrot.lane.b32.xlu0 %v744, 127
      %v949 = vpop.permute.xlu0 %948
      %950 = vrot.lane.b32.xlu0 %v745, 127
      %v951 = vpop.permute.xlu0 %950
      %952 = vrot.lane.b32.xlu0 %v746, 127
      %v953 = vpop.permute.xlu0 %952
      %954 = vrot.lane.b32.xlu0 %v747, 127
      %v955 = vpop.permute.xlu0 %954
      %956 = vrot.lane.b32.xlu0 %v748, 127
      %v957 = vpop.permute.xlu0 %956
      %958 = vrot.lane.b32.xlu0 %v749, 127
      %v959 = vpop.permute.xlu0 %958
      %960 = vrot.lane.b32.xlu0 %v750, 127
      %v961 = vpop.permute.xlu0 %960
      %962 = vrot.lane.b32.xlu0 %v751, 127
      %v963 = vpop.permute.xlu0 %962
      %964 = vrot.lane.b32.xlu0 %v752, 127
      %v965 = vpop.permute.xlu0 %964
      %vm966 = vcmask 1039360
      %v967 = vsel %vm966, %v935, %v937
      %v968 = vsel %vm966, %v937, %v939
      %v969 = vsel %vm966, %v939, %v941
      %v970 = vsel %vm966, %v943, %v945
      %v971 = vsel %vm966, %v945, %v947
      %v972 = vsel %vm966, %v947, %v949
      %v973 = vsel %vm966, %v951, %v953
      %v974 = vsel %vm966, %v953, %v955
      %v975 = vsel %vm966, %v955, %v957
      %v976 = vsel %vm966, %v959, %v961
      %v977 = vsel %vm966, %v961, %v963
      %v978 = vsel %vm966, %v963, %v965
      %vm991 = vcmask 1039360
      %v993 = vsel %vm991, %v941, 0
      %v996 = vsel %vm991, %v949, 0
      %v999 = vsel %vm991, %v957, 0
      %v1002 = vsel %vm991, %v965, 0
      %v1004 = vshrl.u32 %v830, 16
      %v1005 = vpack.i.b16 %v1004, %v1004
      %v1007 = vperm.slane %v1005, 0
      %v1008 = vshrl.u32 %v831, 16
      %v1009 = vpack.i.b16 %v1008, %v1008
      %v1011 = vperm.slane %v1009, 0
      %v1012 = vshrl.u32 %v832, 16
      %v1013 = vpack.i.b16 %v1012, %v1012
      %v1015 = vperm.slane %v1013, 0
      %v1016 = vshrl.u32 %v833, 16
      %v1017 = vpack.i.b16 %v1016, %v1016
      %v1019 = vperm.slane %v1017, 0
      %v1020 = vunpack.c.l.bf16 %v1007
      %v1021 = vunpack.c.l.bf16 %v1011
      %v1022 = vunpack.c.l.bf16 %v1015
      %v1023 = vunpack.c.l.bf16 %v1019
      %v1024 = vunpack.c.l.bf16 %v967
      %v1025 = vunpack.c.l.bf16 %v968
      %v1026 = vunpack.c.l.bf16 %v969
      %v1027 = vunpack.c.l.bf16 %v993
      %v1028 = vunpack.c.h.bf16 %v967
      %v1029 = vunpack.c.h.bf16 %v968
      %v1030 = vunpack.c.h.bf16 %v969
      %v1031 = vunpack.c.h.bf16 %v993
      %v1032 = vunpack.c.l.bf16 %v970
      %v1033 = vunpack.c.l.bf16 %v971
      %v1034 = vunpack.c.l.bf16 %v972
      %v1035 = vunpack.c.l.bf16 %v996
      %v1036 = vunpack.c.h.bf16 %v970
      %v1037 = vunpack.c.h.bf16 %v971
      %v1038 = vunpack.c.h.bf16 %v972
      %v1039 = vunpack.c.h.bf16 %v996
      %v1040 = vunpack.c.l.bf16 %v973
      %v1041 = vunpack.c.l.bf16 %v974
      %v1042 = vunpack.c.l.bf16 %v975
      %v1043 = vunpack.c.l.bf16 %v999
      %v1044 = vunpack.c.h.bf16 %v973
      %v1045 = vunpack.c.h.bf16 %v974
      %v1046 = vunpack.c.h.bf16 %v975
      %v1047 = vunpack.c.h.bf16 %v999
      %v1048 = vunpack.c.l.bf16 %v976
      %v1049 = vunpack.c.l.bf16 %v977
      %v1050 = vunpack.c.l.bf16 %v978
      %v1051 = vunpack.c.l.bf16 %v1002
      %v1052 = vunpack.c.h.bf16 %v976
      %v1053 = vunpack.c.h.bf16 %v977
      %v1054 = vunpack.c.h.bf16 %v978
      %v1055 = vunpack.c.h.bf16 %v1002
      %v1056 = vmul.f32 %v1020, %v1024
      %v1057 = vmul.f32 %v1021, %v1025
      %v1058 = vmul.f32 %v1022, %v1026
      %v1059 = vmul.f32 %v1023, %v1027
      %v1060 = vmul.f32 %v1020, %v1028
      %v1061 = vmul.f32 %v1021, %v1029
      %v1062 = vmul.f32 %v1022, %v1030
      %v1063 = vmul.f32 %v1023, %v1031
      %v1064 = vmul.f32 %v1020, %v1032
      %v1065 = vmul.f32 %v1021, %v1033
      %v1066 = vmul.f32 %v1022, %v1034
      %v1067 = vmul.f32 %v1023, %v1035
      %v1068 = vmul.f32 %v1020, %v1036
      %v1069 = vmul.f32 %v1021, %v1037
      %v1070 = vmul.f32 %v1022, %v1038
      %v1071 = vmul.f32 %v1023, %v1039
      %v1072 = vmul.f32 %v1020, %v1040
      %v1073 = vmul.f32 %v1021, %v1041
      %v1074 = vmul.f32 %v1022, %v1042
      %v1075 = vmul.f32 %v1023, %v1043
      %v1076 = vmul.f32 %v1020, %v1044
      %v1077 = vmul.f32 %v1021, %v1045
      %v1078 = vmul.f32 %v1022, %v1046
      %v1079 = vmul.f32 %v1023, %v1047
      %v1080 = vmul.f32 %v1020, %v1048
      %v1081 = vmul.f32 %v1021, %v1049
      %v1082 = vmul.f32 %v1022, %v1050
      %v1083 = vmul.f32 %v1023, %v1051
      %v1084 = vmul.f32 %v1020, %v1052
      %v1085 = vmul.f32 %v1021, %v1053
      %v1086 = vmul.f32 %v1022, %v1054
      %v1087 = vmul.f32 %v1023, %v1055
      %v1088 = vpack.c.bf16 %v1057, %v1056
      %v1089 = vpack.c.bf16 %v1059, %v1058
      %v1090 = vpack.c.bf16 %v1061, %v1060
      %v1091 = vpack.c.bf16 %v1063, %v1062
      %v1092 = vpack.c.bf16 %v1065, %v1064
      %v1093 = vpack.c.bf16 %v1067, %v1066
      %v1094 = vpack.c.bf16 %v1069, %v1068
      %v1095 = vpack.c.bf16 %v1071, %v1070
      %v1096 = vpack.c.bf16 %v1073, %v1072
      %v1097 = vpack.c.bf16 %v1075, %v1074
      %v1098 = vpack.c.bf16 %v1077, %v1076
      %v1099 = vpack.c.bf16 %v1079, %v1078
      %v1100 = vpack.c.bf16 %v1081, %v1080
      %v1101 = vpack.c.bf16 %v1083, %v1082
      %v1102 = vpack.c.bf16 %v1085, %v1084
      %v1103 = vpack.c.bf16 %v1087, %v1086
      %v1120 = vunpack.c.l.b16 %v918
      %v1121 = vunpack.c.h.b16 %v918
      %v1122 = vunpack.c.l.b16 %v919
      %v1123 = vunpack.c.h.b16 %v919
      %v1124 = vunpack.c.l.b16 %v920
      %v1125 = vunpack.c.h.b16 %v920
      %v1126 = vunpack.c.l.b16 %v921
      %v1127 = vunpack.c.h.b16 %v921
      %v1128 = vunpack.c.l.b16 %v922
      %v1129 = vunpack.c.h.b16 %v922
      %v1130 = vunpack.c.l.b16 %v923
      %v1131 = vunpack.c.h.b16 %v923
      %v1132 = vunpack.c.l.b16 %v924
      %v1133 = vunpack.c.h.b16 %v924
      %v1134 = vunpack.c.l.b16 %v925
      %v1135 = vunpack.c.h.b16 %v925
      %v1136 = vunpack.c.l.b16 %v926
      %v1137 = vunpack.c.h.b16 %v926
      %v1138 = vunpack.c.l.b16 %v927
      %v1139 = vunpack.c.h.b16 %v927
      %v1140 = vunpack.c.l.b16 %v928
      %v1141 = vunpack.c.h.b16 %v928
      %v1142 = vunpack.c.l.b16 %v929
      %v1143 = vunpack.c.h.b16 %v929
      %v1144 = vunpack.c.l.b16 %v930
      %v1145 = vunpack.c.h.b16 %v930
      %v1146 = vunpack.c.l.b16 %v931
      %v1147 = vunpack.c.h.b16 %v931
      %v1148 = vunpack.c.l.b16 %v932
      %v1149 = vunpack.c.h.b16 %v932
      %v1150 = vunpack.c.l.b16 %v933
      %v1151 = vunpack.c.h.b16 %v933
      %v1152 = vpack.c.b16 %v1124, %v1120
      %v1153 = vpack.c.b16 %v1125, %v1121
      %v1154 = vpack.c.b16 %v1126, %v1122
      %v1155 = vpack.c.b16 %v1127, %v1123
      %v1156 = vpack.c.b16 %v1132, %v1128
      %v1157 = vpack.c.b16 %v1133, %v1129
      %v1158 = vpack.c.b16 %v1134, %v1130
      %v1159 = vpack.c.b16 %v1135, %v1131
      %v1160 = vpack.c.b16 %v1140, %v1136
      %v1161 = vpack.c.b16 %v1141, %v1137
      %v1162 = vpack.c.b16 %v1142, %v1138
      %v1163 = vpack.c.b16 %v1143, %v1139
      %v1164 = vpack.c.b16 %v1148, %v1144
      %v1165 = vpack.c.b16 %v1149, %v1145
      %v1166 = vpack.c.b16 %v1150, %v1146
      %v1167 = vpack.c.b16 %v1151, %v1147
      %v1216 = vunpack.c.l.b16 %v1088
      %v1217 = vunpack.c.h.b16 %v1088
      %v1218 = vunpack.c.l.b16 %v1089
      %v1219 = vunpack.c.h.b16 %v1089
      %v1220 = vunpack.c.l.b16 %v1090
      %v1221 = vunpack.c.h.b16 %v1090
      %v1222 = vunpack.c.l.b16 %v1091
      %v1223 = vunpack.c.h.b16 %v1091
      %v1224 = vunpack.c.l.b16 %v1092
      %v1225 = vunpack.c.h.b16 %v1092
      %v1226 = vunpack.c.l.b16 %v1093
      %v1227 = vunpack.c.h.b16 %v1093
      %v1228 = vunpack.c.l.b16 %v1094
      %v1229 = vunpack.c.h.b16 %v1094
      %v1230 = vunpack.c.l.b16 %v1095
      %v1231 = vunpack.c.h.b16 %v1095
      %v1232 = vunpack.c.l.b16 %v1096
      %v1233 = vunpack.c.h.b16 %v1096
      %v1234 = vunpack.c.l.b16 %v1097
      %v1235 = vunpack.c.h.b16 %v1097
      %v1236 = vunpack.c.l.b16 %v1098
      %v1237 = vunpack.c.h.b16 %v1098
      %v1238 = vunpack.c.l.b16 %v1099
      %v1239 = vunpack.c.h.b16 %v1099
      %v1240 = vunpack.c.l.b16 %v1100
      %v1241 = vunpack.c.h.b16 %v1100
      %v1242 = vunpack.c.l.b16 %v1101
      %v1243 = vunpack.c.h.b16 %v1101
      %v1244 = vunpack.c.l.b16 %v1102
      %v1245 = vunpack.c.h.b16 %v1102
      %v1246 = vunpack.c.l.b16 %v1103
      %v1247 = vunpack.c.h.b16 %v1103
      %v1248 = vpack.c.b16 %v1220, %v1216
      %v1249 = vpack.c.b16 %v1221, %v1217
      %v1250 = vpack.c.b16 %v1222, %v1218
      %v1251 = vpack.c.b16 %v1223, %v1219
      %v1252 = vpack.c.b16 %v1228, %v1224
      %v1253 = vpack.c.b16 %v1229, %v1225
      %v1254 = vpack.c.b16 %v1230, %v1226
      %v1255 = vpack.c.b16 %v1231, %v1227
      %v1256 = vpack.c.b16 %v1236, %v1232
      %v1257 = vpack.c.b16 %v1237, %v1233
      %v1258 = vpack.c.b16 %v1238, %v1234
      %v1259 = vpack.c.b16 %v1239, %v1235
      %v1260 = vpack.c.b16 %v1244, %v1240
      %v1261 = vpack.c.b16 %v1245, %v1241
      %v1262 = vpack.c.b16 %v1246, %v1242
      %v1263 = vpack.c.b16 %v1247, %v1243
      %1280 = vrot.lane.b32.xlu0 %v1152, 16
      %v1281 = vpop.permute.xlu0 %1280
      %1282 = vrot.lane.b32.xlu0 %v1153, 16
      %v1283 = vpop.permute.xlu0 %1282
      %1284 = vrot.lane.b32.xlu0 %v1154, 16
      %v1285 = vpop.permute.xlu0 %1284
      %1286 = vrot.lane.b32.xlu0 %v1155, 16
      %v1287 = vpop.permute.xlu0 %1286
      %1288 = vrot.lane.b32.xlu0 %v1156, 16
      %v1289 = vpop.permute.xlu0 %1288
      %1290 = vrot.lane.b32.xlu0 %v1157, 16
      %v1291 = vpop.permute.xlu0 %1290
      %1292 = vrot.lane.b32.xlu0 %v1158, 16
      %v1293 = vpop.permute.xlu0 %1292
      %1294 = vrot.lane.b32.xlu0 %v1159, 16
      %v1295 = vpop.permute.xlu0 %1294
      %1296 = vrot.lane.b32.xlu0 %v1160, 16
      %v1297 = vpop.permute.xlu0 %1296
      %1298 = vrot.lane.b32.xlu0 %v1161, 16
      %v1299 = vpop.permute.xlu0 %1298
      %1300 = vrot.lane.b32.xlu0 %v1162, 16
      %v1301 = vpop.permute.xlu0 %1300
      %1302 = vrot.lane.b32.xlu0 %v1163, 16
      %v1303 = vpop.permute.xlu0 %1302
      %1304 = vrot.lane.b32.xlu0 %v1164, 16
      %v1305 = vpop.permute.xlu0 %1304
      %1306 = vrot.lane.b32.xlu0 %v1165, 16
      %v1307 = vpop.permute.xlu0 %1306
      %1308 = vrot.lane.b32.xlu0 %v1166, 16
      %v1309 = vpop.permute.xlu0 %1308
      %1310 = vrot.lane.b32.xlu0 %v1167, 16
      %v1311 = vpop.permute.xlu0 %1310
      %1312 = vrot.lane.b32.xlu0 %v737, 16
      %v1313 = vpop.permute.xlu0 %1312
      %1314 = vrot.lane.b32.xlu0 %v738, 16
      %v1315 = vpop.permute.xlu0 %1314
      %1316 = vrot.lane.b32.xlu0 %v739, 16
      %v1317 = vpop.permute.xlu0 %1316
      %1318 = vrot.lane.b32.xlu0 %v740, 16
      %v1319 = vpop.permute.xlu0 %1318
      %1320 = vrot.lane.b32.xlu0 %v741, 16
      %v1321 = vpop.permute.xlu0 %1320
      %1322 = vrot.lane.b32.xlu0 %v742, 16
      %v1323 = vpop.permute.xlu0 %1322
      %1324 = vrot.lane.b32.xlu0 %v743, 16
      %v1325 = vpop.permute.xlu0 %1324
      %1326 = vrot.lane.b32.xlu0 %v744, 16
      %v1327 = vpop.permute.xlu0 %1326
      %1328 = vrot.lane.b32.xlu0 %v745, 16
      %v1329 = vpop.permute.xlu0 %1328
      %1330 = vrot.lane.b32.xlu0 %v746, 16
      %v1331 = vpop.permute.xlu0 %1330
      %1332 = vrot.lane.b32.xlu0 %v747, 16
      %v1333 = vpop.permute.xlu0 %1332
      %1334 = vrot.lane.b32.xlu0 %v748, 16
      %v1335 = vpop.permute.xlu0 %1334
      %1336 = vrot.lane.b32.xlu0 %v749, 16
      %v1337 = vpop.permute.xlu0 %1336
      %1338 = vrot.lane.b32.xlu0 %v750, 16
      %v1339 = vpop.permute.xlu0 %1338
      %1340 = vrot.lane.b32.xlu0 %v751, 16
      %v1341 = vpop.permute.xlu0 %1340
      %1342 = vrot.lane.b32.xlu0 %v752, 16
      %v1343 = vpop.permute.xlu0 %1342
      %1344 = vrot.lane.b32.xlu0 %v1248, 16
      %v1345 = vpop.permute.xlu0 %1344
      %1346 = vrot.lane.b32.xlu0 %v1249, 16
      %v1347 = vpop.permute.xlu0 %1346
      %1348 = vrot.lane.b32.xlu0 %v1250, 16
      %v1349 = vpop.permute.xlu0 %1348
      %1350 = vrot.lane.b32.xlu0 %v1251, 16
      %v1351 = vpop.permute.xlu0 %1350
      %1352 = vrot.lane.b32.xlu0 %v1252, 16
      %v1353 = vpop.permute.xlu0 %1352
      %1354 = vrot.lane.b32.xlu0 %v1253, 16
      %v1355 = vpop.permute.xlu0 %1354
      %1356 = vrot.lane.b32.xlu0 %v1254, 16
      %v1357 = vpop.permute.xlu0 %1356
      %1358 = vrot.lane.b32.xlu0 %v1255, 16
      %v1359 = vpop.permute.xlu0 %1358
      %1360 = vrot.lane.b32.xlu0 %v1256, 16
      %v1361 = vpop.permute.xlu0 %1360
      %1362 = vrot.lane.b32.xlu0 %v1257, 16
      %v1363 = vpop.permute.xlu0 %1362
      %1364 = vrot.lane.b32.xlu0 %v1258, 16
      %v1365 = vpop.permute.xlu0 %1364
      %1366 = vrot.lane.b32.xlu0 %v1259, 16
      %v1367 = vpop.permute.xlu0 %1366
      %1368 = vrot.lane.b32.xlu0 %v1260, 16
      %v1369 = vpop.permute.xlu0 %1368
      %1370 = vrot.lane.b32.xlu0 %v1261, 16
      %v1371 = vpop.permute.xlu0 %1370
      %1372 = vrot.lane.b32.xlu0 %v1262, 16
      %v1373 = vpop.permute.xlu0 %1372
      %1374 = vrot.lane.b32.xlu0 %v1263, 16
      %v1375 = vpop.permute.xlu0 %1374
      %vm1376 = vcmask 130048
      %v1377 = vsel %vm1376, %v1281, %v1283
      %v1378 = vsel %vm1376, %v1283, %v1285
      %v1379 = vsel %vm1376, %v1285, %v1287
      %v1380 = vsel %vm1376, %v1289, %v1291
      %v1381 = vsel %vm1376, %v1291, %v1293
      %v1382 = vsel %vm1376, %v1293, %v1295
      %v1383 = vsel %vm1376, %v1297, %v1299
      %v1384 = vsel %vm1376, %v1299, %v1301
      %v1385 = vsel %vm1376, %v1301, %v1303
      %v1386 = vsel %vm1376, %v1305, %v1307
      %v1387 = vsel %vm1376, %v1307, %v1309
      %v1388 = vsel %vm1376, %v1309, %v1311
      %v1389 = vsel %vm1376, %v1313, %v1315
      %v1390 = vsel %vm1376, %v1315, %v1317
      %v1391 = vsel %vm1376, %v1317, %v1319
      %v1392 = vsel %vm1376, %v1321, %v1323
      %v1393 = vsel %vm1376, %v1323, %v1325
      %v1394 = vsel %vm1376, %v1325, %v1327
      %v1395 = vsel %vm1376, %v1329, %v1331
      %v1396 = vsel %vm1376, %v1331, %v1333
      %v1397 = vsel %vm1376, %v1333, %v1335
      %v1398 = vsel %vm1376, %v1337, %v1339
      %v1399 = vsel %vm1376, %v1339, %v1341
      %v1400 = vsel %vm1376, %v1341, %v1343
      %v1401 = vsel %vm1376, %v1345, %v1347
      %v1402 = vsel %vm1376, %v1347, %v1349
      %v1403 = vsel %vm1376, %v1349, %v1351
      %v1404 = vsel %vm1376, %v1353, %v1355
      %v1405 = vsel %vm1376, %v1355, %v1357
      %v1406 = vsel %vm1376, %v1357, %v1359
      %v1407 = vsel %vm1376, %v1361, %v1363
      %v1408 = vsel %vm1376, %v1363, %v1365
      %v1409 = vsel %vm1376, %v1365, %v1367
      %v1410 = vsel %vm1376, %v1369, %v1371
      %v1411 = vsel %vm1376, %v1371, %v1373
      %v1412 = vsel %vm1376, %v1373, %v1375
      %vm1449 = vcmask 130048
      %v1451 = vsel %vm1449, 0, %v1281
      %v1454 = vsel %vm1449, 0, %v1289
      %v1457 = vsel %vm1449, 0, %v1297
      %v1460 = vsel %vm1449, 0, %v1305
      %v1463 = vsel %vm1449, 0, %v1313
      %v1466 = vsel %vm1449, 0, %v1321
      %v1469 = vsel %vm1449, 0, %v1329
      %v1472 = vsel %vm1449, 0, %v1337
      %v1475 = vsel %vm1449, 0, %v1345
      %v1478 = vsel %vm1449, 0, %v1353
      %v1481 = vsel %vm1449, 0, %v1361
      %v1484 = vsel %vm1449, 0, %v1369
      %v1486 = vperm.slane %v835, 1
      %v1487 = vperm.slane %v839, 1
      %v1488 = vperm.slane %v843, 1
      %v1489 = vperm.slane %v847, 1
      %v1490 = vunpack.c.l.bf16 %v1486
      %v1491 = vunpack.c.l.bf16 %v1487
      %v1492 = vunpack.c.l.bf16 %v1488
      %v1493 = vunpack.c.l.bf16 %v1489
      %v1494 = vunpack.c.l.bf16 %v1451
      %v1495 = vunpack.c.l.bf16 %v1377
      %v1496 = vunpack.c.l.bf16 %v1378
      %v1497 = vunpack.c.l.bf16 %v1379
      %v1498 = vunpack.c.h.bf16 %v1451
      %v1499 = vunpack.c.h.bf16 %v1377
      %v1500 = vunpack.c.h.bf16 %v1378
      %v1501 = vunpack.c.h.bf16 %v1379
      %v1502 = vunpack.c.l.bf16 %v1454
      %v1503 = vunpack.c.l.bf16 %v1380
      %v1504 = vunpack.c.l.bf16 %v1381
      %v1505 = vunpack.c.l.bf16 %v1382
      %v1506 = vunpack.c.h.bf16 %v1454
      %v1507 = vunpack.c.h.bf16 %v1380
      %v1508 = vunpack.c.h.bf16 %v1381
      %v1509 = vunpack.c.h.bf16 %v1382
      %v1510 = vunpack.c.l.bf16 %v1457
      %v1511 = vunpack.c.l.bf16 %v1383
      %v1512 = vunpack.c.l.bf16 %v1384
      %v1513 = vunpack.c.l.bf16 %v1385
      %v1514 = vunpack.c.h.bf16 %v1457
      %v1515 = vunpack.c.h.bf16 %v1383
      %v1516 = vunpack.c.h.bf16 %v1384
      %v1517 = vunpack.c.h.bf16 %v1385
      %v1518 = vunpack.c.l.bf16 %v1460
      %v1519 = vunpack.c.l.bf16 %v1386
      %v1520 = vunpack.c.l.bf16 %v1387
      %v1521 = vunpack.c.l.bf16 %v1388
      %v1522 = vunpack.c.h.bf16 %v1460
      %v1523 = vunpack.c.h.bf16 %v1386
      %v1524 = vunpack.c.h.bf16 %v1387
      %v1525 = vunpack.c.h.bf16 %v1388
      %v1526 = vunpack.c.l.bf16 %v1463
      %v1527 = vunpack.c.l.bf16 %v1389
      %v1528 = vunpack.c.l.bf16 %v1390
      %v1529 = vunpack.c.l.bf16 %v1391
      %v1530 = vunpack.c.h.bf16 %v1463
      %v1531 = vunpack.c.h.bf16 %v1389
      %v1532 = vunpack.c.h.bf16 %v1390
      %v1533 = vunpack.c.h.bf16 %v1391
      %v1534 = vunpack.c.l.bf16 %v1466
      %v1535 = vunpack.c.l.bf16 %v1392
      %v1536 = vunpack.c.l.bf16 %v1393
      %v1537 = vunpack.c.l.bf16 %v1394
      %v1538 = vunpack.c.h.bf16 %v1466
      %v1539 = vunpack.c.h.bf16 %v1392
      %v1540 = vunpack.c.h.bf16 %v1393
      %v1541 = vunpack.c.h.bf16 %v1394
      %v1542 = vunpack.c.l.bf16 %v1469
      %v1543 = vunpack.c.l.bf16 %v1395
      %v1544 = vunpack.c.l.bf16 %v1396
      %v1545 = vunpack.c.l.bf16 %v1397
      %v1546 = vunpack.c.h.bf16 %v1469
      %v1547 = vunpack.c.h.bf16 %v1395
      %v1548 = vunpack.c.h.bf16 %v1396
      %v1549 = vunpack.c.h.bf16 %v1397
      %v1550 = vunpack.c.l.bf16 %v1472
      %v1551 = vunpack.c.l.bf16 %v1398
      %v1552 = vunpack.c.l.bf16 %v1399
      %v1553 = vunpack.c.l.bf16 %v1400
      %v1554 = vunpack.c.h.bf16 %v1472
      %v1555 = vunpack.c.h.bf16 %v1398
      %v1556 = vunpack.c.h.bf16 %v1399
      %v1557 = vunpack.c.h.bf16 %v1400
      %v1558 = vunpack.c.l.bf16 %v1475
      %v1559 = vunpack.c.l.bf16 %v1401
      %v1560 = vunpack.c.l.bf16 %v1402
      %v1561 = vunpack.c.l.bf16 %v1403
      %v1562 = vunpack.c.h.bf16 %v1475
      %v1563 = vunpack.c.h.bf16 %v1401
      %v1564 = vunpack.c.h.bf16 %v1402
      %v1565 = vunpack.c.h.bf16 %v1403
      %v1566 = vunpack.c.l.bf16 %v1478
      %v1567 = vunpack.c.l.bf16 %v1404
      %v1568 = vunpack.c.l.bf16 %v1405
      %v1569 = vunpack.c.l.bf16 %v1406
      %v1570 = vunpack.c.h.bf16 %v1478
      %v1571 = vunpack.c.h.bf16 %v1404
      %v1572 = vunpack.c.h.bf16 %v1405
      %v1573 = vunpack.c.h.bf16 %v1406
      %v1574 = vunpack.c.l.bf16 %v1481
      %v1575 = vunpack.c.l.bf16 %v1407
      %v1576 = vunpack.c.l.bf16 %v1408
      %v1577 = vunpack.c.l.bf16 %v1409
      %v1578 = vunpack.c.h.bf16 %v1481
      %v1579 = vunpack.c.h.bf16 %v1407
      %v1580 = vunpack.c.h.bf16 %v1408
      %v1581 = vunpack.c.h.bf16 %v1409
      %v1582 = vunpack.c.l.bf16 %v1484
      %v1583 = vunpack.c.l.bf16 %v1410
      %v1584 = vunpack.c.l.bf16 %v1411
      %v1585 = vunpack.c.l.bf16 %v1412
      %v1586 = vunpack.c.h.bf16 %v1484
      %v1587 = vunpack.c.h.bf16 %v1410
      %v1588 = vunpack.c.h.bf16 %v1411
      %v1589 = vunpack.c.h.bf16 %v1412
      %v1590 = vmul.f32 %v1490, %v1494
      %v1591 = vmul.f32 %v1491, %v1495
      %v1592 = vmul.f32 %v1492, %v1496
      %v1593 = vmul.f32 %v1493, %v1497
      %v1594 = vmul.f32 %v1490, %v1498
      %v1595 = vmul.f32 %v1491, %v1499
      %v1596 = vmul.f32 %v1492, %v1500
      %v1597 = vmul.f32 %v1493, %v1501
      %v1598 = vmul.f32 %v1490, %v1502
      %v1599 = vmul.f32 %v1491, %v1503
      %v1600 = vmul.f32 %v1492, %v1504
      %v1601 = vmul.f32 %v1493, %v1505
      %v1602 = vmul.f32 %v1490, %v1506
      %v1603 = vmul.f32 %v1491, %v1507
      %v1604 = vmul.f32 %v1492, %v1508
      %v1605 = vmul.f32 %v1493, %v1509
      %v1606 = vmul.f32 %v1490, %v1510
      %v1607 = vmul.f32 %v1491, %v1511
      %v1608 = vmul.f32 %v1492, %v1512
      %v1609 = vmul.f32 %v1493, %v1513
      %v1610 = vmul.f32 %v1490, %v1514
      %v1611 = vmul.f32 %v1491, %v1515
      %v1612 = vmul.f32 %v1492, %v1516
      %v1613 = vmul.f32 %v1493, %v1517
      %v1614 = vmul.f32 %v1490, %v1518
      %v1615 = vmul.f32 %v1491, %v1519
      %v1616 = vmul.f32 %v1492, %v1520
      %v1617 = vmul.f32 %v1493, %v1521
      %v1618 = vmul.f32 %v1490, %v1522
      %v1619 = vmul.f32 %v1491, %v1523
      %v1620 = vmul.f32 %v1492, %v1524
      %v1621 = vmul.f32 %v1493, %v1525
      %v1622 = vmul.f32 %v1490, %v1526
      %v1623 = vmul.f32 %v1491, %v1527
      %v1624 = vmul.f32 %v1492, %v1528
      %v1625 = vmul.f32 %v1493, %v1529
      %v1626 = vmul.f32 %v1490, %v1530
      %v1627 = vmul.f32 %v1491, %v1531
      %v1628 = vmul.f32 %v1492, %v1532
      %v1629 = vmul.f32 %v1493, %v1533
      %v1630 = vmul.f32 %v1490, %v1534
      %v1631 = vmul.f32 %v1491, %v1535
      %v1632 = vmul.f32 %v1492, %v1536
      %v1633 = vmul.f32 %v1493, %v1537
      %v1634 = vmul.f32 %v1490, %v1538
      %v1635 = vmul.f32 %v1491, %v1539
      %v1636 = vmul.f32 %v1492, %v1540
      %v1637 = vmul.f32 %v1493, %v1541
      %v1638 = vmul.f32 %v1490, %v1542
      %v1639 = vmul.f32 %v1491, %v1543
      %v1640 = vmul.f32 %v1492, %v1544
      %v1641 = vmul.f32 %v1493, %v1545
      %v1642 = vmul.f32 %v1490, %v1546
      %v1643 = vmul.f32 %v1491, %v1547
      %v1644 = vmul.f32 %v1492, %v1548
      %v1645 = vmul.f32 %v1493, %v1549
      %v1646 = vmul.f32 %v1490, %v1550
      %v1647 = vmul.f32 %v1491, %v1551
      %v1648 = vmul.f32 %v1492, %v1552
      %v1649 = vmul.f32 %v1493, %v1553
      %v1650 = vmul.f32 %v1490, %v1554
      %v1651 = vmul.f32 %v1491, %v1555
      %v1652 = vmul.f32 %v1492, %v1556
      %v1653 = vmul.f32 %v1493, %v1557
      %v1654 = vmul.f32 %v1490, %v1558
      %v1655 = vmul.f32 %v1491, %v1559
      %v1656 = vmul.f32 %v1492, %v1560
      %v1657 = vmul.f32 %v1493, %v1561
      %v1658 = vmul.f32 %v1490, %v1562
      %v1659 = vmul.f32 %v1491, %v1563
      %v1660 = vmul.f32 %v1492, %v1564
      %v1661 = vmul.f32 %v1493, %v1565
      %v1662 = vmul.f32 %v1490, %v1566
      %v1663 = vmul.f32 %v1491, %v1567
      %v1664 = vmul.f32 %v1492, %v1568
      %v1665 = vmul.f32 %v1493, %v1569
      %v1666 = vmul.f32 %v1490, %v1570
      %v1667 = vmul.f32 %v1491, %v1571
      %v1668 = vmul.f32 %v1492, %v1572
      %v1669 = vmul.f32 %v1493, %v1573
      %v1670 = vmul.f32 %v1490, %v1574
      %v1671 = vmul.f32 %v1491, %v1575
      %v1672 = vmul.f32 %v1492, %v1576
      %v1673 = vmul.f32 %v1493, %v1577
      %v1674 = vmul.f32 %v1490, %v1578
      %v1675 = vmul.f32 %v1491, %v1579
      %v1676 = vmul.f32 %v1492, %v1580
      %v1677 = vmul.f32 %v1493, %v1581
      %v1678 = vmul.f32 %v1490, %v1582
      %v1679 = vmul.f32 %v1491, %v1583
      %v1680 = vmul.f32 %v1492, %v1584
      %v1681 = vmul.f32 %v1493, %v1585
      %v1682 = vmul.f32 %v1490, %v1586
      %v1683 = vmul.f32 %v1491, %v1587
      %v1684 = vmul.f32 %v1492, %v1588
      %v1685 = vmul.f32 %v1493, %v1589
      %v1686 = vpack.c.bf16 %v1591, %v1590
      %v1687 = vpack.c.bf16 %v1593, %v1592
      %v1688 = vpack.c.bf16 %v1595, %v1594
      %v1689 = vpack.c.bf16 %v1597, %v1596
      %v1690 = vpack.c.bf16 %v1599, %v1598
      %v1691 = vpack.c.bf16 %v1601, %v1600
      %v1692 = vpack.c.bf16 %v1603, %v1602
      %v1693 = vpack.c.bf16 %v1605, %v1604
      %v1694 = vpack.c.bf16 %v1607, %v1606
      %v1695 = vpack.c.bf16 %v1609, %v1608
      %v1696 = vpack.c.bf16 %v1611, %v1610
      %v1697 = vpack.c.bf16 %v1613, %v1612
      %v1698 = vpack.c.bf16 %v1615, %v1614
      %v1699 = vpack.c.bf16 %v1617, %v1616
      %v1700 = vpack.c.bf16 %v1619, %v1618
      %v1701 = vpack.c.bf16 %v1621, %v1620
      %v1702 = vpack.c.bf16 %v1623, %v1622
      %v1703 = vpack.c.bf16 %v1625, %v1624
      %v1704 = vpack.c.bf16 %v1627, %v1626
      %v1705 = vpack.c.bf16 %v1629, %v1628
      %v1706 = vpack.c.bf16 %v1631, %v1630
      %v1707 = vpack.c.bf16 %v1633, %v1632
      %v1708 = vpack.c.bf16 %v1635, %v1634
      %v1709 = vpack.c.bf16 %v1637, %v1636
      %v1710 = vpack.c.bf16 %v1639, %v1638
      %v1711 = vpack.c.bf16 %v1641, %v1640
      %v1712 = vpack.c.bf16 %v1643, %v1642
      %v1713 = vpack.c.bf16 %v1645, %v1644
      %v1714 = vpack.c.bf16 %v1647, %v1646
      %v1715 = vpack.c.bf16 %v1649, %v1648
      %v1716 = vpack.c.bf16 %v1651, %v1650
      %v1717 = vpack.c.bf16 %v1653, %v1652
      %v1718 = vpack.c.bf16 %v1655, %v1654
      %v1719 = vpack.c.bf16 %v1657, %v1656
      %v1720 = vpack.c.bf16 %v1659, %v1658
      %v1721 = vpack.c.bf16 %v1661, %v1660
      %v1722 = vpack.c.bf16 %v1663, %v1662
      %v1723 = vpack.c.bf16 %v1665, %v1664
      %v1724 = vpack.c.bf16 %v1667, %v1666
      %v1725 = vpack.c.bf16 %v1669, %v1668
      %v1726 = vpack.c.bf16 %v1671, %v1670
      %v1727 = vpack.c.bf16 %v1673, %v1672
      %v1728 = vpack.c.bf16 %v1675, %v1674
      %v1729 = vpack.c.bf16 %v1677, %v1676
      %v1730 = vpack.c.bf16 %v1679, %v1678
      %v1731 = vpack.c.bf16 %v1681, %v1680
      %v1732 = vpack.c.bf16 %v1683, %v1682
      %v1733 = vpack.c.bf16 %v1685, %v1684
      %1734 = vrot.lane.b32.xlu0 %v1152, 112
      %v1735 = vpop.permute.xlu0 %1734
      %1736 = vrot.lane.b32.xlu0 %v1153, 112
      %v1737 = vpop.permute.xlu0 %1736
      %1738 = vrot.lane.b32.xlu0 %v1154, 112
      %v1739 = vpop.permute.xlu0 %1738
      %1740 = vrot.lane.b32.xlu0 %v1155, 112
      %v1741 = vpop.permute.xlu0 %1740
      %1742 = vrot.lane.b32.xlu0 %v1156, 112
      %v1743 = vpop.permute.xlu0 %1742
      %1744 = vrot.lane.b32.xlu0 %v1157, 112
      %v1745 = vpop.permute.xlu0 %1744
      %1746 = vrot.lane.b32.xlu0 %v1158, 112
      %v1747 = vpop.permute.xlu0 %1746
      %1748 = vrot.lane.b32.xlu0 %v1159, 112
      %v1749 = vpop.permute.xlu0 %1748
      %1750 = vrot.lane.b32.xlu0 %v1160, 112
      %v1751 = vpop.permute.xlu0 %1750
      %1752 = vrot.lane.b32.xlu0 %v1161, 112
      %v1753 = vpop.permute.xlu0 %1752
      %1754 = vrot.lane.b32.xlu0 %v1162, 112
      %v1755 = vpop.permute.xlu0 %1754
      %1756 = vrot.lane.b32.xlu0 %v1163, 112
      %v1757 = vpop.permute.xlu0 %1756
      %1758 = vrot.lane.b32.xlu0 %v1164, 112
      %v1759 = vpop.permute.xlu0 %1758
      %1760 = vrot.lane.b32.xlu0 %v1165, 112
      %v1761 = vpop.permute.xlu0 %1760
      %1762 = vrot.lane.b32.xlu0 %v1166, 112
      %v1763 = vpop.permute.xlu0 %1762
      %1764 = vrot.lane.b32.xlu0 %v1167, 112
      %v1765 = vpop.permute.xlu0 %1764
      %1766 = vrot.lane.b32.xlu0 %v737, 112
      %v1767 = vpop.permute.xlu0 %1766
      %1768 = vrot.lane.b32.xlu0 %v738, 112
      %v1769 = vpop.permute.xlu0 %1768
      %1770 = vrot.lane.b32.xlu0 %v739, 112
      %v1771 = vpop.permute.xlu0 %1770
      %1772 = vrot.lane.b32.xlu0 %v740, 112
      %v1773 = vpop.permute.xlu0 %1772
      %1774 = vrot.lane.b32.xlu0 %v741, 112
      %v1775 = vpop.permute.xlu0 %1774
      %1776 = vrot.lane.b32.xlu0 %v742, 112
      %v1777 = vpop.permute.xlu0 %1776
      %1778 = vrot.lane.b32.xlu0 %v743, 112
      %v1779 = vpop.permute.xlu0 %1778
      %1780 = vrot.lane.b32.xlu0 %v744, 112
      %v1781 = vpop.permute.xlu0 %1780
      %1782 = vrot.lane.b32.xlu0 %v745, 112
      %v1783 = vpop.permute.xlu0 %1782
      %1784 = vrot.lane.b32.xlu0 %v746, 112
      %v1785 = vpop.permute.xlu0 %1784
      %1786 = vrot.lane.b32.xlu0 %v747, 112
      %v1787 = vpop.permute.xlu0 %1786
      %1788 = vrot.lane.b32.xlu0 %v748, 112
      %v1789 = vpop.permute.xlu0 %1788
      %1790 = vrot.lane.b32.xlu0 %v749, 112
      %v1791 = vpop.permute.xlu0 %1790
      %1792 = vrot.lane.b32.xlu0 %v750, 112
      %v1793 = vpop.permute.xlu0 %1792
      %1794 = vrot.lane.b32.xlu0 %v751, 112
      %v1795 = vpop.permute.xlu0 %1794
      %1796 = vrot.lane.b32.xlu0 %v752, 112
      %v1797 = vpop.permute.xlu0 %1796
      %1798 = vrot.lane.b32.xlu0 %v1248, 112
      %v1799 = vpop.permute.xlu0 %1798
      %1800 = vrot.lane.b32.xlu0 %v1249, 112
      %v1801 = vpop.permute.xlu0 %1800
      %1802 = vrot.lane.b32.xlu0 %v1250, 112
      %v1803 = vpop.permute.xlu0 %1802
      %1804 = vrot.lane.b32.xlu0 %v1251, 112
      %v1805 = vpop.permute.xlu0 %1804
      %1806 = vrot.lane.b32.xlu0 %v1252, 112
      %v1807 = vpop.permute.xlu0 %1806
      %1808 = vrot.lane.b32.xlu0 %v1253, 112
      %v1809 = vpop.permute.xlu0 %1808
      %1810 = vrot.lane.b32.xlu0 %v1254, 112
      %v1811 = vpop.permute.xlu0 %1810
      %1812 = vrot.lane.b32.xlu0 %v1255, 112
      %v1813 = vpop.permute.xlu0 %1812
      %1814 = vrot.lane.b32.xlu0 %v1256, 112
      %v1815 = vpop.permute.xlu0 %1814
      %1816 = vrot.lane.b32.xlu0 %v1257, 112
      %v1817 = vpop.permute.xlu0 %1816
      %1818 = vrot.lane.b32.xlu0 %v1258, 112
      %v1819 = vpop.permute.xlu0 %1818
      %1820 = vrot.lane.b32.xlu0 %v1259, 112
      %v1821 = vpop.permute.xlu0 %1820
      %1822 = vrot.lane.b32.xlu0 %v1260, 112
      %v1823 = vpop.permute.xlu0 %1822
      %1824 = vrot.lane.b32.xlu0 %v1261, 112
      %v1825 = vpop.permute.xlu0 %1824
      %1826 = vrot.lane.b32.xlu0 %v1262, 112
      %v1827 = vpop.permute.xlu0 %1826
      %1828 = vrot.lane.b32.xlu0 %v1263, 112
      %v1829 = vpop.permute.xlu0 %1828
      %vm1830 = vcmask 916480
      %v1831 = vsel %vm1830, %v1735, %v1737
      %v1832 = vsel %vm1830, %v1737, %v1739
      %v1833 = vsel %vm1830, %v1739, %v1741
      %v1834 = vsel %vm1830, %v1743, %v1745
      %v1835 = vsel %vm1830, %v1745, %v1747
      %v1836 = vsel %vm1830, %v1747, %v1749
      %v1837 = vsel %vm1830, %v1751, %v1753
      %v1838 = vsel %vm1830, %v1753, %v1755
      %v1839 = vsel %vm1830, %v1755, %v1757
      %v1840 = vsel %vm1830, %v1759, %v1761
      %v1841 = vsel %vm1830, %v1761, %v1763
      %v1842 = vsel %vm1830, %v1763, %v1765
      %v1843 = vsel %vm1830, %v1767, %v1769
      %v1844 = vsel %vm1830, %v1769, %v1771
      %v1845 = vsel %vm1830, %v1771, %v1773
      %v1846 = vsel %vm1830, %v1775, %v1777
      %v1847 = vsel %vm1830, %v1777, %v1779
      %v1848 = vsel %vm1830, %v1779, %v1781
      %v1849 = vsel %vm1830, %v1783, %v1785
      %v1850 = vsel %vm1830, %v1785, %v1787
      %v1851 = vsel %vm1830, %v1787, %v1789
      %v1852 = vsel %vm1830, %v1791, %v1793
      %v1853 = vsel %vm1830, %v1793, %v1795
      %v1854 = vsel %vm1830, %v1795, %v1797
      %v1855 = vsel %vm1830, %v1799, %v1801
      %v1856 = vsel %vm1830, %v1801, %v1803
      %v1857 = vsel %vm1830, %v1803, %v1805
      %v1858 = vsel %vm1830, %v1807, %v1809
      %v1859 = vsel %vm1830, %v1809, %v1811
      %v1860 = vsel %vm1830, %v1811, %v1813
      %v1861 = vsel %vm1830, %v1815, %v1817
      %v1862 = vsel %vm1830, %v1817, %v1819
      %v1863 = vsel %vm1830, %v1819, %v1821
      %v1864 = vsel %vm1830, %v1823, %v1825
      %v1865 = vsel %vm1830, %v1825, %v1827
      %v1866 = vsel %vm1830, %v1827, %v1829
      %vm1903 = vcmask 916480
      %v1905 = vsel %vm1903, %v1741, 0
      %v1908 = vsel %vm1903, %v1749, 0
      %v1911 = vsel %vm1903, %v1757, 0
      %v1914 = vsel %vm1903, %v1765, 0
      %v1917 = vsel %vm1903, %v1773, 0
      %v1920 = vsel %vm1903, %v1781, 0
      %v1923 = vsel %vm1903, %v1789, 0
      %v1926 = vsel %vm1903, %v1797, 0
      %v1929 = vsel %vm1903, %v1805, 0
      %v1932 = vsel %vm1903, %v1813, 0
      %v1935 = vsel %vm1903, %v1821, 0
      %v1938 = vsel %vm1903, %v1829, 0
      %v1940 = vperm.slane %v1005, 1
      %v1941 = vperm.slane %v1009, 1
      %v1942 = vperm.slane %v1013, 1
      %v1943 = vperm.slane %v1017, 1
      %v1944 = vunpack.c.l.bf16 %v1940
      %v1945 = vunpack.c.l.bf16 %v1941
      %v1946 = vunpack.c.l.bf16 %v1942
      %v1947 = vunpack.c.l.bf16 %v1943
      %v1948 = vunpack.c.l.bf16 %v1831
      %v1949 = vunpack.c.l.bf16 %v1832
      %v1950 = vunpack.c.l.bf16 %v1833
      %v1951 = vunpack.c.l.bf16 %v1905
      %v1952 = vunpack.c.h.bf16 %v1831
      %v1953 = vunpack.c.h.bf16 %v1832
      %v1954 = vunpack.c.h.bf16 %v1833
      %v1955 = vunpack.c.h.bf16 %v1905
      %v1956 = vunpack.c.l.bf16 %v1834
      %v1957 = vunpack.c.l.bf16 %v1835
      %v1958 = vunpack.c.l.bf16 %v1836
      %v1959 = vunpack.c.l.bf16 %v1908
      %v1960 = vunpack.c.h.bf16 %v1834
      %v1961 = vunpack.c.h.bf16 %v1835
      %v1962 = vunpack.c.h.bf16 %v1836
      %v1963 = vunpack.c.h.bf16 %v1908
      %v1964 = vunpack.c.l.bf16 %v1837
      %v1965 = vunpack.c.l.bf16 %v1838
      %v1966 = vunpack.c.l.bf16 %v1839
      %v1967 = vunpack.c.l.bf16 %v1911
      %v1968 = vunpack.c.h.bf16 %v1837
      %v1969 = vunpack.c.h.bf16 %v1838
      %v1970 = vunpack.c.h.bf16 %v1839
      %v1971 = vunpack.c.h.bf16 %v1911
      %v1972 = vunpack.c.l.bf16 %v1840
      %v1973 = vunpack.c.l.bf16 %v1841
      %v1974 = vunpack.c.l.bf16 %v1842
      %v1975 = vunpack.c.l.bf16 %v1914
      %v1976 = vunpack.c.h.bf16 %v1840
      %v1977 = vunpack.c.h.bf16 %v1841
      %v1978 = vunpack.c.h.bf16 %v1842
      %v1979 = vunpack.c.h.bf16 %v1914
      %v1980 = vunpack.c.l.bf16 %v1843
      %v1981 = vunpack.c.l.bf16 %v1844
      %v1982 = vunpack.c.l.bf16 %v1845
      %v1983 = vunpack.c.l.bf16 %v1917
      %v1984 = vunpack.c.h.bf16 %v1843
      %v1985 = vunpack.c.h.bf16 %v1844
      %v1986 = vunpack.c.h.bf16 %v1845
      %v1987 = vunpack.c.h.bf16 %v1917
      %v1988 = vunpack.c.l.bf16 %v1846
      %v1989 = vunpack.c.l.bf16 %v1847
      %v1990 = vunpack.c.l.bf16 %v1848
      %v1991 = vunpack.c.l.bf16 %v1920
      %v1992 = vunpack.c.h.bf16 %v1846
      %v1993 = vunpack.c.h.bf16 %v1847
      %v1994 = vunpack.c.h.bf16 %v1848
      %v1995 = vunpack.c.h.bf16 %v1920
      %v1996 = vunpack.c.l.bf16 %v1849
      %v1997 = vunpack.c.l.bf16 %v1850
      %v1998 = vunpack.c.l.bf16 %v1851
      %v1999 = vunpack.c.l.bf16 %v1923
      %v2000 = vunpack.c.h.bf16 %v1849
      %v2001 = vunpack.c.h.bf16 %v1850
      %v2002 = vunpack.c.h.bf16 %v1851
      %v2003 = vunpack.c.h.bf16 %v1923
      %v2004 = vunpack.c.l.bf16 %v1852
      %v2005 = vunpack.c.l.bf16 %v1853
      %v2006 = vunpack.c.l.bf16 %v1854
      %v2007 = vunpack.c.l.bf16 %v1926
      %v2008 = vunpack.c.h.bf16 %v1852
      %v2009 = vunpack.c.h.bf16 %v1853
      %v2010 = vunpack.c.h.bf16 %v1854
      %v2011 = vunpack.c.h.bf16 %v1926
      %v2012 = vunpack.c.l.bf16 %v1855
      %v2013 = vunpack.c.l.bf16 %v1856
      %v2014 = vunpack.c.l.bf16 %v1857
      %v2015 = vunpack.c.l.bf16 %v1929
      %v2016 = vunpack.c.h.bf16 %v1855
      %v2017 = vunpack.c.h.bf16 %v1856
      %v2018 = vunpack.c.h.bf16 %v1857
      %v2019 = vunpack.c.h.bf16 %v1929
      %v2020 = vunpack.c.l.bf16 %v1858
      %v2021 = vunpack.c.l.bf16 %v1859
      %v2022 = vunpack.c.l.bf16 %v1860
      %v2023 = vunpack.c.l.bf16 %v1932
      %v2024 = vunpack.c.h.bf16 %v1858
      %v2025 = vunpack.c.h.bf16 %v1859
      %v2026 = vunpack.c.h.bf16 %v1860
      %v2027 = vunpack.c.h.bf16 %v1932
      %v2028 = vunpack.c.l.bf16 %v1861
      %v2029 = vunpack.c.l.bf16 %v1862
      %v2030 = vunpack.c.l.bf16 %v1863
      %v2031 = vunpack.c.l.bf16 %v1935
      %v2032 = vunpack.c.h.bf16 %v1861
      %v2033 = vunpack.c.h.bf16 %v1862
      %v2034 = vunpack.c.h.bf16 %v1863
      %v2035 = vunpack.c.h.bf16 %v1935
      %v2036 = vunpack.c.l.bf16 %v1864
      %v2037 = vunpack.c.l.bf16 %v1865
      %v2038 = vunpack.c.l.bf16 %v1866
      %v2039 = vunpack.c.l.bf16 %v1938
      %v2040 = vunpack.c.h.bf16 %v1864
      %v2041 = vunpack.c.h.bf16 %v1865
      %v2042 = vunpack.c.h.bf16 %v1866
      %v2043 = vunpack.c.h.bf16 %v1938
      %v2044 = vmul.f32 %v1944, %v1948
      %v2045 = vmul.f32 %v1945, %v1949
      %v2046 = vmul.f32 %v1946, %v1950
      %v2047 = vmul.f32 %v1947, %v1951
      %v2048 = vmul.f32 %v1944, %v1952
      %v2049 = vmul.f32 %v1945, %v1953
      %v2050 = vmul.f32 %v1946, %v1954
      %v2051 = vmul.f32 %v1947, %v1955
      %v2052 = vmul.f32 %v1944, %v1956
      %v2053 = vmul.f32 %v1945, %v1957
      %v2054 = vmul.f32 %v1946, %v1958
      %v2055 = vmul.f32 %v1947, %v1959
      %v2056 = vmul.f32 %v1944, %v1960
      %v2057 = vmul.f32 %v1945, %v1961
      %v2058 = vmul.f32 %v1946, %v1962
      %v2059 = vmul.f32 %v1947, %v1963
      %v2060 = vmul.f32 %v1944, %v1964
      %v2061 = vmul.f32 %v1945, %v1965
      %v2062 = vmul.f32 %v1946, %v1966
      %v2063 = vmul.f32 %v1947, %v1967
      %v2064 = vmul.f32 %v1944, %v1968
      %v2065 = vmul.f32 %v1945, %v1969
      %v2066 = vmul.f32 %v1946, %v1970
      %v2067 = vmul.f32 %v1947, %v1971
      %v2068 = vmul.f32 %v1944, %v1972
      %v2069 = vmul.f32 %v1945, %v1973
      %v2070 = vmul.f32 %v1946, %v1974
      %v2071 = vmul.f32 %v1947, %v1975
      %v2072 = vmul.f32 %v1944, %v1976
      %v2073 = vmul.f32 %v1945, %v1977
      %v2074 = vmul.f32 %v1946, %v1978
      %v2075 = vmul.f32 %v1947, %v1979
      %v2076 = vmul.f32 %v1944, %v1980
      %v2077 = vmul.f32 %v1945, %v1981
      %v2078 = vmul.f32 %v1946, %v1982
      %v2079 = vmul.f32 %v1947, %v1983
      %v2080 = vmul.f32 %v1944, %v1984
      %v2081 = vmul.f32 %v1945, %v1985
      %v2082 = vmul.f32 %v1946, %v1986
      %v2083 = vmul.f32 %v1947, %v1987
      %v2084 = vmul.f32 %v1944, %v1988
      %v2085 = vmul.f32 %v1945, %v1989
      %v2086 = vmul.f32 %v1946, %v1990
      %v2087 = vmul.f32 %v1947, %v1991
      %v2088 = vmul.f32 %v1944, %v1992
      %v2089 = vmul.f32 %v1945, %v1993
      %v2090 = vmul.f32 %v1946, %v1994
      %v2091 = vmul.f32 %v1947, %v1995
      %v2092 = vmul.f32 %v1944, %v1996
      %v2093 = vmul.f32 %v1945, %v1997
      %v2094 = vmul.f32 %v1946, %v1998
      %v2095 = vmul.f32 %v1947, %v1999
      %v2096 = vmul.f32 %v1944, %v2000
      %v2097 = vmul.f32 %v1945, %v2001
      %v2098 = vmul.f32 %v1946, %v2002
      %v2099 = vmul.f32 %v1947, %v2003
      %v2100 = vmul.f32 %v1944, %v2004
      %v2101 = vmul.f32 %v1945, %v2005
      %v2102 = vmul.f32 %v1946, %v2006
      %v2103 = vmul.f32 %v1947, %v2007
      %v2104 = vmul.f32 %v1944, %v2008
      %v2105 = vmul.f32 %v1945, %v2009
      %v2106 = vmul.f32 %v1946, %v2010
      %v2107 = vmul.f32 %v1947, %v2011
      %v2108 = vmul.f32 %v1944, %v2012
      %v2109 = vmul.f32 %v1945, %v2013
      %v2110 = vmul.f32 %v1946, %v2014
      %v2111 = vmul.f32 %v1947, %v2015
      %v2112 = vmul.f32 %v1944, %v2016
      %v2113 = vmul.f32 %v1945, %v2017
      %v2114 = vmul.f32 %v1946, %v2018
      %v2115 = vmul.f32 %v1947, %v2019
      %v2116 = vmul.f32 %v1944, %v2020
      %v2117 = vmul.f32 %v1945, %v2021
      %v2118 = vmul.f32 %v1946, %v2022
      %v2119 = vmul.f32 %v1947, %v2023
      %v2120 = vmul.f32 %v1944, %v2024
      %v2121 = vmul.f32 %v1945, %v2025
      %v2122 = vmul.f32 %v1946, %v2026
      %v2123 = vmul.f32 %v1947, %v2027
      %v2124 = vmul.f32 %v1944, %v2028
      %v2125 = vmul.f32 %v1945, %v2029
      %v2126 = vmul.f32 %v1946, %v2030
      %v2127 = vmul.f32 %v1947, %v2031
      %v2128 = vmul.f32 %v1944, %v2032
      %v2129 = vmul.f32 %v1945, %v2033
      %v2130 = vmul.f32 %v1946, %v2034
      %v2131 = vmul.f32 %v1947, %v2035
      %v2132 = vmul.f32 %v1944, %v2036
      %v2133 = vmul.f32 %v1945, %v2037
      %v2134 = vmul.f32 %v1946, %v2038
      %v2135 = vmul.f32 %v1947, %v2039
      %v2136 = vmul.f32 %v1944, %v2040
      %v2137 = vmul.f32 %v1945, %v2041
      %v2138 = vmul.f32 %v1946, %v2042
      %v2139 = vmul.f32 %v1947, %v2043
      %v2140 = vpack.c.bf16 %v2045, %v2044
      %v2141 = vpack.c.bf16 %v2047, %v2046
      %v2142 = vpack.c.bf16 %v2049, %v2048
      %v2143 = vpack.c.bf16 %v2051, %v2050
      %v2144 = vpack.c.bf16 %v2053, %v2052
      %v2145 = vpack.c.bf16 %v2055, %v2054
      %v2146 = vpack.c.bf16 %v2057, %v2056
      %v2147 = vpack.c.bf16 %v2059, %v2058
      %v2148 = vpack.c.bf16 %v2061, %v2060
      %v2149 = vpack.c.bf16 %v2063, %v2062
      %v2150 = vpack.c.bf16 %v2065, %v2064
      %v2151 = vpack.c.bf16 %v2067, %v2066
      %v2152 = vpack.c.bf16 %v2069, %v2068
      %v2153 = vpack.c.bf16 %v2071, %v2070
      %v2154 = vpack.c.bf16 %v2073, %v2072
      %v2155 = vpack.c.bf16 %v2075, %v2074
      %v2156 = vpack.c.bf16 %v2077, %v2076
      %v2157 = vpack.c.bf16 %v2079, %v2078
      %v2158 = vpack.c.bf16 %v2081, %v2080
      %v2159 = vpack.c.bf16 %v2083, %v2082
      %v2160 = vpack.c.bf16 %v2085, %v2084
      %v2161 = vpack.c.bf16 %v2087, %v2086
      %v2162 = vpack.c.bf16 %v2089, %v2088
      %v2163 = vpack.c.bf16 %v2091, %v2090
      %v2164 = vpack.c.bf16 %v2093, %v2092
      %v2165 = vpack.c.bf16 %v2095, %v2094
      %v2166 = vpack.c.bf16 %v2097, %v2096
      %v2167 = vpack.c.bf16 %v2099, %v2098
      %v2168 = vpack.c.bf16 %v2101, %v2100
      %v2169 = vpack.c.bf16 %v2103, %v2102
      %v2170 = vpack.c.bf16 %v2105, %v2104
      %v2171 = vpack.c.bf16 %v2107, %v2106
      %v2172 = vpack.c.bf16 %v2109, %v2108
      %v2173 = vpack.c.bf16 %v2111, %v2110
      %v2174 = vpack.c.bf16 %v2113, %v2112
      %v2175 = vpack.c.bf16 %v2115, %v2114
      %v2176 = vpack.c.bf16 %v2117, %v2116
      %v2177 = vpack.c.bf16 %v2119, %v2118
      %v2178 = vpack.c.bf16 %v2121, %v2120
      %v2179 = vpack.c.bf16 %v2123, %v2122
      %v2180 = vpack.c.bf16 %v2125, %v2124
      %v2181 = vpack.c.bf16 %v2127, %v2126
      %v2182 = vpack.c.bf16 %v2129, %v2128
      %v2183 = vpack.c.bf16 %v2131, %v2130
      %v2184 = vpack.c.bf16 %v2133, %v2132
      %v2185 = vpack.c.bf16 %v2135, %v2134
      %v2186 = vpack.c.bf16 %v2137, %v2136
      %v2187 = vpack.c.bf16 %v2139, %v2138
      %v2236 = vunpack.c.l.b16 %v1686
      %v2237 = vunpack.c.h.b16 %v1686
      %v2238 = vunpack.c.l.b16 %v1687
      %v2239 = vunpack.c.h.b16 %v1687
      %v2240 = vunpack.c.l.b16 %v1688
      %v2241 = vunpack.c.h.b16 %v1688
      %v2242 = vunpack.c.l.b16 %v1689
      %v2243 = vunpack.c.h.b16 %v1689
      %v2244 = vunpack.c.l.b16 %v1690
      %v2245 = vunpack.c.h.b16 %v1690
      %v2246 = vunpack.c.l.b16 %v1691
      %v2247 = vunpack.c.h.b16 %v1691
      %v2248 = vunpack.c.l.b16 %v1692
      %v2249 = vunpack.c.h.b16 %v1692
      %v2250 = vunpack.c.l.b16 %v1693
      %v2251 = vunpack.c.h.b16 %v1693
      %v2252 = vunpack.c.l.b16 %v1694
      %v2253 = vunpack.c.h.b16 %v1694
      %v2254 = vunpack.c.l.b16 %v1695
      %v2255 = vunpack.c.h.b16 %v1695
      %v2256 = vunpack.c.l.b16 %v1696
      %v2257 = vunpack.c.h.b16 %v1696
      %v2258 = vunpack.c.l.b16 %v1697
      %v2259 = vunpack.c.h.b16 %v1697
      %v2260 = vunpack.c.l.b16 %v1698
      %v2261 = vunpack.c.h.b16 %v1698
      %v2262 = vunpack.c.l.b16 %v1699
      %v2263 = vunpack.c.h.b16 %v1699
      %v2264 = vunpack.c.l.b16 %v1700
      %v2265 = vunpack.c.h.b16 %v1700
      %v2266 = vunpack.c.l.b16 %v1701
      %v2267 = vunpack.c.h.b16 %v1701
      %v2268 = vunpack.c.l.b16 %v1702
      %v2269 = vunpack.c.h.b16 %v1702
      %v2270 = vunpack.c.l.b16 %v1703
      %v2271 = vunpack.c.h.b16 %v1703
      %v2272 = vunpack.c.l.b16 %v1704
      %v2273 = vunpack.c.h.b16 %v1704
      %v2274 = vunpack.c.l.b16 %v1705
      %v2275 = vunpack.c.h.b16 %v1705
      %v2276 = vunpack.c.l.b16 %v1706
      %v2277 = vunpack.c.h.b16 %v1706
      %v2278 = vunpack.c.l.b16 %v1707
      %v2279 = vunpack.c.h.b16 %v1707
      %v2280 = vunpack.c.l.b16 %v1708
      %v2281 = vunpack.c.h.b16 %v1708
      %v2282 = vunpack.c.l.b16 %v1709
      %v2283 = vunpack.c.h.b16 %v1709
      %v2284 = vunpack.c.l.b16 %v1710
      %v2285 = vunpack.c.h.b16 %v1710
      %v2286 = vunpack.c.l.b16 %v1711
      %v2287 = vunpack.c.h.b16 %v1711
      %v2288 = vunpack.c.l.b16 %v1712
      %v2289 = vunpack.c.h.b16 %v1712
      %v2290 = vunpack.c.l.b16 %v1713
      %v2291 = vunpack.c.h.b16 %v1713
      %v2292 = vunpack.c.l.b16 %v1714
      %v2293 = vunpack.c.h.b16 %v1714
      %v2294 = vunpack.c.l.b16 %v1715
      %v2295 = vunpack.c.h.b16 %v1715
      %v2296 = vunpack.c.l.b16 %v1716
      %v2297 = vunpack.c.h.b16 %v1716
      %v2298 = vunpack.c.l.b16 %v1717
      %v2299 = vunpack.c.h.b16 %v1717
      %v2300 = vunpack.c.l.b16 %v1718
      %v2301 = vunpack.c.h.b16 %v1718
      %v2302 = vunpack.c.l.b16 %v1719
      %v2303 = vunpack.c.h.b16 %v1719
      %v2304 = vunpack.c.l.b16 %v1720
      %v2305 = vunpack.c.h.b16 %v1720
      %v2306 = vunpack.c.l.b16 %v1721
      %v2307 = vunpack.c.h.b16 %v1721
      %v2308 = vunpack.c.l.b16 %v1722
      %v2309 = vunpack.c.h.b16 %v1722
      %v2310 = vunpack.c.l.b16 %v1723
      %v2311 = vunpack.c.h.b16 %v1723
      %v2312 = vunpack.c.l.b16 %v1724
      %v2313 = vunpack.c.h.b16 %v1724
      %v2314 = vunpack.c.l.b16 %v1725
      %v2315 = vunpack.c.h.b16 %v1725
      %v2316 = vunpack.c.l.b16 %v1726
      %v2317 = vunpack.c.h.b16 %v1726
      %v2318 = vunpack.c.l.b16 %v1727
      %v2319 = vunpack.c.h.b16 %v1727
      %v2320 = vunpack.c.l.b16 %v1728
      %v2321 = vunpack.c.h.b16 %v1728
      %v2322 = vunpack.c.l.b16 %v1729
      %v2323 = vunpack.c.h.b16 %v1729
      %v2324 = vunpack.c.l.b16 %v1730
      %v2325 = vunpack.c.h.b16 %v1730
      %v2326 = vunpack.c.l.b16 %v1731
      %v2327 = vunpack.c.h.b16 %v1731
      %v2328 = vunpack.c.l.b16 %v1732
      %v2329 = vunpack.c.h.b16 %v1732
      %v2330 = vunpack.c.l.b16 %v1733
      %v2331 = vunpack.c.h.b16 %v1733
      %v2332 = vpack.c.b16 %v2240, %v2236
      %v2333 = vpack.c.b16 %v2241, %v2237
      %v2334 = vpack.c.b16 %v2242, %v2238
      %v2335 = vpack.c.b16 %v2243, %v2239
      %v2336 = vpack.c.b16 %v2248, %v2244
      %v2337 = vpack.c.b16 %v2249, %v2245
      %v2338 = vpack.c.b16 %v2250, %v2246
      %v2339 = vpack.c.b16 %v2251, %v2247
      %v2340 = vpack.c.b16 %v2256, %v2252
      %v2341 = vpack.c.b16 %v2257, %v2253
      %v2342 = vpack.c.b16 %v2258, %v2254
      %v2343 = vpack.c.b16 %v2259, %v2255
      %v2344 = vpack.c.b16 %v2264, %v2260
      %v2345 = vpack.c.b16 %v2265, %v2261
      %v2346 = vpack.c.b16 %v2266, %v2262
      %v2347 = vpack.c.b16 %v2267, %v2263
      %v2348 = vpack.c.b16 %v2272, %v2268
      %v2349 = vpack.c.b16 %v2273, %v2269
      %v2350 = vpack.c.b16 %v2274, %v2270
      %v2351 = vpack.c.b16 %v2275, %v2271
      %v2352 = vpack.c.b16 %v2280, %v2276
      %v2353 = vpack.c.b16 %v2281, %v2277
      %v2354 = vpack.c.b16 %v2282, %v2278
      %v2355 = vpack.c.b16 %v2283, %v2279
      %v2356 = vpack.c.b16 %v2288, %v2284
      %v2357 = vpack.c.b16 %v2289, %v2285
      %v2358 = vpack.c.b16 %v2290, %v2286
      %v2359 = vpack.c.b16 %v2291, %v2287
      %v2360 = vpack.c.b16 %v2296, %v2292
      %v2361 = vpack.c.b16 %v2297, %v2293
      %v2362 = vpack.c.b16 %v2298, %v2294
      %v2363 = vpack.c.b16 %v2299, %v2295
      %v2364 = vpack.c.b16 %v2304, %v2300
      %v2365 = vpack.c.b16 %v2305, %v2301
      %v2366 = vpack.c.b16 %v2306, %v2302
      %v2367 = vpack.c.b16 %v2307, %v2303
      %v2368 = vpack.c.b16 %v2312, %v2308
      %v2369 = vpack.c.b16 %v2313, %v2309
      %v2370 = vpack.c.b16 %v2314, %v2310
      %v2371 = vpack.c.b16 %v2315, %v2311
      %v2372 = vpack.c.b16 %v2320, %v2316
      %v2373 = vpack.c.b16 %v2321, %v2317
      %v2374 = vpack.c.b16 %v2322, %v2318
      %v2375 = vpack.c.b16 %v2323, %v2319
      %v2376 = vpack.c.b16 %v2328, %v2324
      %v2377 = vpack.c.b16 %v2329, %v2325
      %v2378 = vpack.c.b16 %v2330, %v2326
      %v2379 = vpack.c.b16 %v2331, %v2327
      %v2476 = vunpack.c.l.b16 %v2140
      %v2477 = vunpack.c.h.b16 %v2140
      %v2478 = vunpack.c.l.b16 %v2141
      %v2479 = vunpack.c.h.b16 %v2141
      %v2480 = vunpack.c.l.b16 %v2142
      %v2481 = vunpack.c.h.b16 %v2142
      %v2482 = vunpack.c.l.b16 %v2143
      %v2483 = vunpack.c.h.b16 %v2143
      %v2484 = vunpack.c.l.b16 %v2144
      %v2485 = vunpack.c.h.b16 %v2144
      %v2486 = vunpack.c.l.b16 %v2145
      %v2487 = vunpack.c.h.b16 %v2145
      %v2488 = vunpack.c.l.b16 %v2146
      %v2489 = vunpack.c.h.b16 %v2146
      %v2490 = vunpack.c.l.b16 %v2147
      %v2491 = vunpack.c.h.b16 %v2147
      %v2492 = vunpack.c.l.b16 %v2148
      %v2493 = vunpack.c.h.b16 %v2148
      %v2494 = vunpack.c.l.b16 %v2149
      %v2495 = vunpack.c.h.b16 %v2149
      %v2496 = vunpack.c.l.b16 %v2150
      %v2497 = vunpack.c.h.b16 %v2150
      %v2498 = vunpack.c.l.b16 %v2151
      %v2499 = vunpack.c.h.b16 %v2151
      %v2500 = vunpack.c.l.b16 %v2152
      %v2501 = vunpack.c.h.b16 %v2152
      %v2502 = vunpack.c.l.b16 %v2153
      %v2503 = vunpack.c.h.b16 %v2153
      %v2504 = vunpack.c.l.b16 %v2154
      %v2505 = vunpack.c.h.b16 %v2154
      %v2506 = vunpack.c.l.b16 %v2155
      %v2507 = vunpack.c.h.b16 %v2155
      %v2508 = vunpack.c.l.b16 %v2156
      %v2509 = vunpack.c.h.b16 %v2156
      %v2510 = vunpack.c.l.b16 %v2157
      %v2511 = vunpack.c.h.b16 %v2157
      %v2512 = vunpack.c.l.b16 %v2158
      %v2513 = vunpack.c.h.b16 %v2158
      %v2514 = vunpack.c.l.b16 %v2159
      %v2515 = vunpack.c.h.b16 %v2159
      %v2516 = vunpack.c.l.b16 %v2160
      %v2517 = vunpack.c.h.b16 %v2160
      %v2518 = vunpack.c.l.b16 %v2161
      %v2519 = vunpack.c.h.b16 %v2161
      %v2520 = vunpack.c.l.b16 %v2162
      %v2521 = vunpack.c.h.b16 %v2162
      %v2522 = vunpack.c.l.b16 %v2163
      %v2523 = vunpack.c.h.b16 %v2163
      %v2524 = vunpack.c.l.b16 %v2164
      %v2525 = vunpack.c.h.b16 %v2164
      %v2526 = vunpack.c.l.b16 %v2165
      %v2527 = vunpack.c.h.b16 %v2165
      %v2528 = vunpack.c.l.b16 %v2166
      %v2529 = vunpack.c.h.b16 %v2166
      %v2530 = vunpack.c.l.b16 %v2167
      %v2531 = vunpack.c.h.b16 %v2167
      %v2532 = vunpack.c.l.b16 %v2168
      %v2533 = vunpack.c.h.b16 %v2168
      %v2534 = vunpack.c.l.b16 %v2169
      %v2535 = vunpack.c.h.b16 %v2169
      %v2536 = vunpack.c.l.b16 %v2170
      %v2537 = vunpack.c.h.b16 %v2170
      %v2538 = vunpack.c.l.b16 %v2171
      %v2539 = vunpack.c.h.b16 %v2171
      %v2540 = vunpack.c.l.b16 %v2172
      %v2541 = vunpack.c.h.b16 %v2172
      %v2542 = vunpack.c.l.b16 %v2173
      %v2543 = vunpack.c.h.b16 %v2173
      %v2544 = vunpack.c.l.b16 %v2174
      %v2545 = vunpack.c.h.b16 %v2174
      %v2546 = vunpack.c.l.b16 %v2175
      %v2547 = vunpack.c.h.b16 %v2175
      %v2548 = vunpack.c.l.b16 %v2176
      %v2549 = vunpack.c.h.b16 %v2176
      %v2550 = vunpack.c.l.b16 %v2177
      %v2551 = vunpack.c.h.b16 %v2177
      %v2552 = vunpack.c.l.b16 %v2178
      %v2553 = vunpack.c.h.b16 %v2178
      %v2554 = vunpack.c.l.b16 %v2179
      %v2555 = vunpack.c.h.b16 %v2179
      %v2556 = vunpack.c.l.b16 %v2180
      %v2557 = vunpack.c.h.b16 %v2180
      %v2558 = vunpack.c.l.b16 %v2181
      %v2559 = vunpack.c.h.b16 %v2181
      %v2560 = vunpack.c.l.b16 %v2182
      %v2561 = vunpack.c.h.b16 %v2182
      %v2562 = vunpack.c.l.b16 %v2183
      %v2563 = vunpack.c.h.b16 %v2183
      %v2564 = vunpack.c.l.b16 %v2184
      %v2565 = vunpack.c.h.b16 %v2184
      %v2566 = vunpack.c.l.b16 %v2185
      %v2567 = vunpack.c.h.b16 %v2185
      %v2568 = vunpack.c.l.b16 %v2186
      %v2569 = vunpack.c.h.b16 %v2186
      %v2570 = vunpack.c.l.b16 %v2187
      %v2571 = vunpack.c.h.b16 %v2187
      %v2572 = vpack.c.b16 %v2480, %v2476
      %v2573 = vpack.c.b16 %v2481, %v2477
      %v2574 = vpack.c.b16 %v2482, %v2478
      %v2575 = vpack.c.b16 %v2483, %v2479
      %v2576 = vpack.c.b16 %v2488, %v2484
      %v2577 = vpack.c.b16 %v2489, %v2485
      %v2578 = vpack.c.b16 %v2490, %v2486
      %v2579 = vpack.c.b16 %v2491, %v2487
      %v2580 = vpack.c.b16 %v2496, %v2492
      %v2581 = vpack.c.b16 %v2497, %v2493
      %v2582 = vpack.c.b16 %v2498, %v2494
      %v2583 = vpack.c.b16 %v2499, %v2495
      %v2584 = vpack.c.b16 %v2504, %v2500
      %v2585 = vpack.c.b16 %v2505, %v2501
      %v2586 = vpack.c.b16 %v2506, %v2502
      %v2587 = vpack.c.b16 %v2507, %v2503
      %v2588 = vpack.c.b16 %v2512, %v2508
      %v2589 = vpack.c.b16 %v2513, %v2509
      %v2590 = vpack.c.b16 %v2514, %v2510
      %v2591 = vpack.c.b16 %v2515, %v2511
      %v2592 = vpack.c.b16 %v2520, %v2516
      %v2593 = vpack.c.b16 %v2521, %v2517
      %v2594 = vpack.c.b16 %v2522, %v2518
      %v2595 = vpack.c.b16 %v2523, %v2519
      %v2596 = vpack.c.b16 %v2528, %v2524
      %v2597 = vpack.c.b16 %v2529, %v2525
      %v2598 = vpack.c.b16 %v2530, %v2526
      %v2599 = vpack.c.b16 %v2531, %v2527
      %v2600 = vpack.c.b16 %v2536, %v2532
      %v2601 = vpack.c.b16 %v2537, %v2533
      %v2602 = vpack.c.b16 %v2538, %v2534
      %v2603 = vpack.c.b16 %v2539, %v2535
      %v2604 = vpack.c.b16 %v2544, %v2540
      %v2605 = vpack.c.b16 %v2545, %v2541
      %v2606 = vpack.c.b16 %v2546, %v2542
      %v2607 = vpack.c.b16 %v2547, %v2543
      %v2608 = vpack.c.b16 %v2552, %v2548
      %v2609 = vpack.c.b16 %v2553, %v2549
      %v2610 = vpack.c.b16 %v2554, %v2550
      %v2611 = vpack.c.b16 %v2555, %v2551
      %v2612 = vpack.c.b16 %v2560, %v2556
      %v2613 = vpack.c.b16 %v2561, %v2557
      %v2614 = vpack.c.b16 %v2562, %v2558
      %v2615 = vpack.c.b16 %v2563, %v2559
      %v2616 = vpack.c.b16 %v2568, %v2564
      %v2617 = vpack.c.b16 %v2569, %v2565
      %v2618 = vpack.c.b16 %v2570, %v2566
      %v2619 = vpack.c.b16 %v2571, %v2567
      %v2668 = vld [vmem:[%s4] sm:$0xff]
      %v2669 = vld [vmem:[%s4 + $0x8] sm:$0xff]
      %v2670 = vld [vmem:[%s4 + $0x10] sm:$0xf]
      %v2671 = vld [vmem:[%s4 + $0x14] sm:$0xff]
      %v2672 = vld [vmem:[%s4 + $0x1c] sm:$0xff]
      %v2673 = vld [vmem:[%s4 + $0x24] sm:$0xf]
      %v2674 = vld [vmem:[%s4 + $0x28] sm:$0xff]
      %v2675 = vld [vmem:[%s4 + $0x30] sm:$0xff]
      %v2676 = vld [vmem:[%s4 + $0x38] sm:$0xf]
      %v2677 = vld [vmem:[%s4 + $0x3c] sm:$0xff]
      %v2678 = vld [vmem:[%s4 + $0x44] sm:$0xff]
      %v2679 = vld [vmem:[%s4 + $0x4c] sm:$0xf]
      %v2680 = vld [vmem:[%s4 + $0x50] sm:$0xff]
      %v2681 = vld [vmem:[%s4 + $0x58] sm:$0xff]
      %v2682 = vld [vmem:[%s4 + $0x60] sm:$0xf]
      %v2683 = vld [vmem:[%s4 + $0x64] sm:$0xff]
      %v2684 = vld [vmem:[%s4 + $0x6c] sm:$0xff]
      %v2685 = vld [vmem:[%s4 + $0x74] sm:$0xf]
      %v2686 = vld [vmem:[%s4 + $0x78] sm:$0xff]
      %v2687 = vld [vmem:[%s4 + $0x80] sm:$0xff]
      %v2688 = vld [vmem:[%s4 + $0x88] sm:$0xf]
      %v2689 = vld [vmem:[%s4 + $0x8c] sm:$0xff]
      %v2690 = vld [vmem:[%s4 + $0x94] sm:$0xff]
      %v2691 = vld [vmem:[%s4 + $0x9c] sm:$0xf]
      %v2692 = vld [vmem:[%s5] sm:$0xff]
      %v2693 = vld [vmem:[%s5 + $0x8] sm:$0xff]
      %v2694 = vld [vmem:[%s5 + $0x10] sm:$0xff]
      %v2695 = vld [vmem:[%s5 + $0x18] sm:$0xff]
      %v2696 = vld [vmem:[%s5 + $0x20] sm:$0xff]
      %v2697 = vld [vmem:[%s5 + $0x28] sm:$0xff]
      %v2698 = vld [vmem:[%s5 + $0x30] sm:$0xff]
      %v2699 = vld [vmem:[%s5 + $0x38] sm:$0xff]
      %2701 = vset.pattern.permute.xlu0 0
      %2702 = vperm.xlu0 %2701, %v2692
      %v2703 = vpop.permute.xlu0 %2702
      %2706 = vset.pattern.permute.xlu0 0
      %2707 = vperm.xlu0 %2706, %v2693
      %v2708 = vpop.permute.xlu0 %2707
      %2711 = vset.pattern.permute.xlu0 0
      %2712 = vperm.xlu0 %2711, %v2694
      %v2713 = vpop.permute.xlu0 %2712
      %2716 = vset.pattern.permute.xlu0 0
      %2717 = vperm.xlu0 %2716, %v2695
      %v2718 = vpop.permute.xlu0 %2717
      %2721 = vset.pattern.permute.xlu0 0
      %2722 = vperm.xlu0 %2721, %v2696
      %v2723 = vpop.permute.xlu0 %2722
      %2726 = vset.pattern.permute.xlu0 0
      %2727 = vperm.xlu0 %2726, %v2697
      %v2728 = vpop.permute.xlu0 %2727
      %2731 = vset.pattern.permute.xlu0 0
      %2732 = vperm.xlu0 %2731, %v2698
      %v2733 = vpop.permute.xlu0 %2732
      %2736 = vset.pattern.permute.xlu0 0
      %2737 = vperm.xlu0 %2736, %v2699
      %v2738 = vpop.permute.xlu0 %2737
      %v2764 = vunpack.c.l.b16 %v2668
      %v2765 = vunpack.c.h.b16 %v2668
      %v2766 = vunpack.c.l.b16 %v2669
      %v2767 = vunpack.c.h.b16 %v2669
      %v2768 = vunpack.c.l.b16 %v2670
      %v2769 = vunpack.c.l.b16 %v2671
      %v2770 = vunpack.c.h.b16 %v2671
      %v2771 = vunpack.c.l.b16 %v2672
      %v2772 = vunpack.c.h.b16 %v2672
      %v2773 = vunpack.c.l.b16 %v2673
      %v2774 = vunpack.c.l.b16 %v2674
      %v2775 = vunpack.c.h.b16 %v2674
      %v2776 = vunpack.c.l.b16 %v2675
      %v2777 = vunpack.c.h.b16 %v2675
      %v2778 = vunpack.c.l.b16 %v2676
      %v2779 = vunpack.c.l.b16 %v2677
      %v2780 = vunpack.c.h.b16 %v2677
      %v2781 = vunpack.c.l.b16 %v2678
      %v2782 = vunpack.c.h.b16 %v2678
      %v2783 = vunpack.c.l.b16 %v2679
      %v2784 = vunpack.c.l.b16 %v2680
      %v2785 = vunpack.c.h.b16 %v2680
      %v2786 = vunpack.c.l.b16 %v2681
      %v2787 = vunpack.c.h.b16 %v2681
      %v2788 = vunpack.c.l.b16 %v2682
      %v2789 = vunpack.c.l.b16 %v2683
      %v2790 = vunpack.c.h.b16 %v2683
      %v2791 = vunpack.c.l.b16 %v2684
      %v2792 = vunpack.c.h.b16 %v2684
      %v2793 = vunpack.c.l.b16 %v2685
      %v2794 = vunpack.c.l.b16 %v2686
      %v2795 = vunpack.c.h.b16 %v2686
      %v2796 = vunpack.c.l.b16 %v2687
      %v2797 = vunpack.c.h.b16 %v2687
      %v2798 = vunpack.c.l.b16 %v2688
      %v2799 = vunpack.c.l.b16 %v2689
      %v2800 = vunpack.c.h.b16 %v2689
      %v2801 = vunpack.c.l.b16 %v2690
      %v2802 = vunpack.c.h.b16 %v2690
      %v2803 = vunpack.c.l.b16 %v2691
      %v2804 = vpack.c.b16 %v2769, %v2764
      %v2805 = vpack.c.b16 %v2770, %v2765
      %v2806 = vpack.c.b16 %v2771, %v2766
      %v2807 = vpack.c.b16 %v2772, %v2767
      %v2808 = vpack.c.b16 %v2773, %v2768
      %v2809 = vpack.c.b16 %v2779, %v2774
      %v2810 = vpack.c.b16 %v2780, %v2775
      %v2811 = vpack.c.b16 %v2781, %v2776
      %v2812 = vpack.c.b16 %v2782, %v2777
      %v2813 = vpack.c.b16 %v2783, %v2778
      %v2814 = vpack.c.b16 %v2789, %v2784
      %v2815 = vpack.c.b16 %v2790, %v2785
      %v2816 = vpack.c.b16 %v2791, %v2786
      %v2817 = vpack.c.b16 %v2792, %v2787
      %v2818 = vpack.c.b16 %v2793, %v2788
      %v2819 = vpack.c.b16 %v2799, %v2794
      %v2820 = vpack.c.b16 %v2800, %v2795
      %v2821 = vpack.c.b16 %v2801, %v2796
      %v2822 = vpack.c.b16 %v2802, %v2797
      %v2823 = vpack.c.b16 %v2803, %v2798
      %vm2840 = vcmask 523264
      %v2842 = vsel %vm2840, %v2808, 0
      %v2845 = vsel %vm2840, %v2813, 0
      %v2848 = vsel %vm2840, %v2818, 0
      %v2851 = vsel %vm2840, %v2823, 0
      %2853 = vmatpush.bf16.msra.mxu0 %v2360
      %2854 = vmatpush.bf16.msra.mxu0 %v2356
      %2855 = vmatpush.bf16.msra.mxu0 %v2352
      %2856 = vmatpush.bf16.msra.mxu0 %v2348
      %2857 = vmatpush.bf16.msra.mxu0 %v2344
      %2858 = vmatpush.bf16.msra.mxu0 %v2340
      %2859 = vmatpush.bf16.msra.mxu0 %v2336
      %2860 = vmatpush.bf16.msra.mxu0 %v2332
      %2861 = vmatmul.bf16.gmra.mxu0 %v2804
      %v2862 = vpop.f32.mrf.mxu0
      %v2863 = vadd.f32 %v2703, %v2862
      %v2864 = vpop.f32.mrf.mxu0
      %v2865 = vadd.f32 %v2708, %v2864
      %2866 = vmatmul.bf16.gmra.mxu0 %v2809
      %v2867 = vpop.f32.mrf.mxu0
      %v2868 = vadd.f32 %v2713, %v2867
      %v2869 = vpop.f32.mrf.mxu0
      %v2870 = vadd.f32 %v2718, %v2869
      %2871 = vmatmul.bf16.gmra.mxu0 %v2814
      %v2872 = vpop.f32.mrf.mxu0
      %v2873 = vadd.f32 %v2723, %v2872
      %v2874 = vpop.f32.mrf.mxu0
      %v2875 = vadd.f32 %v2728, %v2874
      %2876 = vmatmul.bf16.gmra.mxu0 %v2819
      %v2877 = vpop.f32.mrf.mxu0
      %v2878 = vadd.f32 %v2733, %v2877
      %v2879 = vpop.f32.mrf.mxu0
      %v2880 = vadd.f32 %v2738, %v2879
      %2881 = vdwg.mxu0
      %2882 = vmatpush.bf16.msra.mxu0 %v1164
      %2883 = vmatpush.bf16.msra.mxu0 %v1160
      %2884 = vmatpush.bf16.msra.mxu0 %v1156
      %2885 = vmatpush.bf16.msra.mxu0 %v1152
      %2886 = vmatpush.bf16.msra.mxu0 %v2376
      %2887 = vmatpush.bf16.msra.mxu0 %v2372
      %2888 = vmatpush.bf16.msra.mxu0 %v2368
      %2889 = vmatpush.bf16.msra.mxu0 %v2364
      %2890 = vmatmul.bf16.gmra.mxu0 %v2805
      %v2891 = vpop.f32.mrf.mxu0
      %v2892 = vadd.f32 %v2863, %v2891
      %v2893 = vpop.f32.mrf.mxu0
      %v2894 = vadd.f32 %v2865, %v2893
      %2895 = vmatmul.bf16.gmra.mxu0 %v2810
      %v2896 = vpop.f32.mrf.mxu0
      %v2897 = vadd.f32 %v2868, %v2896
      %v2898 = vpop.f32.mrf.mxu0
      %v2899 = vadd.f32 %v2870, %v2898
      %2900 = vmatmul.bf16.gmra.mxu0 %v2815
      %v2901 = vpop.f32.mrf.mxu0
      %v2902 = vadd.f32 %v2873, %v2901
      %v2903 = vpop.f32.mrf.mxu0
      %v2904 = vadd.f32 %v2875, %v2903
      %2905 = vmatmul.bf16.gmra.mxu0 %v2820
      %v2906 = vpop.f32.mrf.mxu0
      %v2907 = vadd.f32 %v2878, %v2906
      %v2908 = vpop.f32.mrf.mxu0
      %v2909 = vadd.f32 %v2880, %v2908
      %2910 = vdwg.mxu0
      %2911 = vmatpush.bf16.msra.mxu0 %v1260
      %2912 = vmatpush.bf16.msra.mxu0 %v1256
      %2913 = vmatpush.bf16.msra.mxu0 %v1252
      %2914 = vmatpush.bf16.msra.mxu0 %v1248
      %2915 = vmatpush.bf16.msra.mxu0 %v749
      %2916 = vmatpush.bf16.msra.mxu0 %v745
      %2917 = vmatpush.bf16.msra.mxu0 %v741
      %2918 = vmatpush.bf16.msra.mxu0 %v737
      %2919 = vmatmul.bf16.gmra.mxu0 %v2806
      %v2920 = vpop.f32.mrf.mxu0
      %v2921 = vadd.f32 %v2892, %v2920
      %v2922 = vpop.f32.mrf.mxu0
      %v2923 = vadd.f32 %v2894, %v2922
      %2924 = vmatmul.bf16.gmra.mxu0 %v2811
      %v2925 = vpop.f32.mrf.mxu0
      %v2926 = vadd.f32 %v2897, %v2925
      %v2927 = vpop.f32.mrf.mxu0
      %v2928 = vadd.f32 %v2899, %v2927
      %2929 = vmatmul.bf16.gmra.mxu0 %v2816
      %v2930 = vpop.f32.mrf.mxu0
      %v2931 = vadd.f32 %v2902, %v2930
      %v2932 = vpop.f32.mrf.mxu0
      %v2933 = vadd.f32 %v2904, %v2932
      %2934 = vmatmul.bf16.gmra.mxu0 %v2821
      %v2935 = vpop.f32.mrf.mxu0
      %v2936 = vadd.f32 %v2907, %v2935
      %v2937 = vpop.f32.mrf.mxu0
      %v2938 = vadd.f32 %v2909, %v2937
      %2939 = vdwg.mxu0
      %2940 = vmatpush.bf16.msra.mxu0 %v2600
      %2941 = vmatpush.bf16.msra.mxu0 %v2596
      %2942 = vmatpush.bf16.msra.mxu0 %v2592
      %2943 = vmatpush.bf16.msra.mxu0 %v2588
      %2944 = vmatpush.bf16.msra.mxu0 %v2584
      %2945 = vmatpush.bf16.msra.mxu0 %v2580
      %2946 = vmatpush.bf16.msra.mxu0 %v2576
      %2947 = vmatpush.bf16.msra.mxu0 %v2572
      %2948 = vmatmul.bf16.gmra.mxu0 %v2807
      %v2949 = vpop.f32.mrf.mxu0
      %v2950 = vadd.f32 %v2921, %v2949
      %v2951 = vpop.f32.mrf.mxu0
      %v2952 = vadd.f32 %v2923, %v2951
      %2953 = vmatmul.bf16.gmra.mxu0 %v2812
      %v2954 = vpop.f32.mrf.mxu0
      %v2955 = vadd.f32 %v2926, %v2954
      %v2956 = vpop.f32.mrf.mxu0
      %v2957 = vadd.f32 %v2928, %v2956
      %2958 = vmatmul.bf16.gmra.mxu0 %v2817
      %v2959 = vpop.f32.mrf.mxu0
      %v2960 = vadd.f32 %v2931, %v2959
      %v2961 = vpop.f32.mrf.mxu0
      %v2962 = vadd.f32 %v2933, %v2961
      %2963 = vmatmul.bf16.gmra.mxu0 %v2822
      %v2964 = vpop.f32.mrf.mxu0
      %v2965 = vadd.f32 %v2936, %v2964
      %v2966 = vpop.f32.mrf.mxu0
      %v2967 = vadd.f32 %v2938, %v2966
      %2968 = vdwg.mxu0
      %2969 = vmatpush.bf16.msra.mxu0 0
      %2970 = vmatpush.bf16.msra.mxu0 0
      %2971 = vmatpush.bf16.msra.mxu0 0
      %2972 = vmatpush.bf16.msra.mxu0 0
      %2973 = vmatpush.bf16.msra.mxu0 %v2616
      %2974 = vmatpush.bf16.msra.mxu0 %v2612
      %2975 = vmatpush.bf16.msra.mxu0 %v2608
      %2976 = vmatpush.bf16.msra.mxu0 %v2604
      %2977 = vmatmul.bf16.gmra.mxu0 %v2842
      %v2978 = vpop.f32.mrf.mxu0
      %v2979 = vadd.f32 %v2950, %v2978
      %v2980 = vpop.f32.mrf.mxu0
      %v2981 = vadd.f32 %v2952, %v2980
      %2982 = vmatmul.bf16.gmra.mxu0 %v2845
      %v2983 = vpop.f32.mrf.mxu0
      %v2984 = vadd.f32 %v2955, %v2983
      %v2985 = vpop.f32.mrf.mxu0
      %v2986 = vadd.f32 %v2957, %v2985
      %2987 = vmatmul.bf16.gmra.mxu0 %v2848
      %v2988 = vpop.f32.mrf.mxu0
      %v2989 = vadd.f32 %v2960, %v2988
      %v2990 = vpop.f32.mrf.mxu0
      %v2991 = vadd.f32 %v2962, %v2990
      %2992 = vmatmul.bf16.gmra.mxu0 %v2851
      %v2993 = vpop.f32.mrf.mxu0
      %v2994 = vadd.f32 %v2965, %v2993
      %v2995 = vpop.f32.mrf.mxu0
      %v2996 = vadd.f32 %v2967, %v2995
      %2997 = vdwg.mxu0
      %2998 = vmatpush.bf16.msra.mxu0 %v2361
      %2999 = vmatpush.bf16.msra.mxu0 %v2357
      %3000 = vmatpush.bf16.msra.mxu0 %v2353
      %3001 = vmatpush.bf16.msra.mxu0 %v2349
      %3002 = vmatpush.bf16.msra.mxu0 %v2345
      %3003 = vmatpush.bf16.msra.mxu0 %v2341
      %3004 = vmatpush.bf16.msra.mxu0 %v2337
      %3005 = vmatpush.bf16.msra.mxu0 %v2333
      %3006 = vmatmul.bf16.gmra.mxu0 %v2804
      %v3007 = vpop.f32.mrf.mxu0
      %v3008 = vadd.f32 %v2703, %v3007
      %v3009 = vpop.f32.mrf.mxu0
      %v3010 = vadd.f32 %v2708, %v3009
      %3011 = vmatmul.bf16.gmra.mxu0 %v2809
      %v3012 = vpop.f32.mrf.mxu0
      %v3013 = vadd.f32 %v2713, %v3012
      %v3014 = vpop.f32.mrf.mxu0
      %v3015 = vadd.f32 %v2718, %v3014
      %3016 = vmatmul.bf16.gmra.mxu0 %v2814
      %v3017 = vpop.f32.mrf.mxu0
      %v3018 = vadd.f32 %v2723, %v3017
      %v3019 = vpop.f32.mrf.mxu0
      %v3020 = vadd.f32 %v2728, %v3019
      %3021 = vmatmul.bf16.gmra.mxu0 %v2819
      %v3022 = vpop.f32.mrf.mxu0
      %v3023 = vadd.f32 %v2733, %v3022
      %v3024 = vpop.f32.mrf.mxu0
      %v3025 = vadd.f32 %v2738, %v3024
      %3026 = vdwg.mxu0
      %3027 = vmatpush.bf16.msra.mxu0 %v1165
      %3028 = vmatpush.bf16.msra.mxu0 %v1161
      %3029 = vmatpush.bf16.msra.mxu0 %v1157
      %3030 = vmatpush.bf16.msra.mxu0 %v1153
      %3031 = vmatpush.bf16.msra.mxu0 %v2377
      %3032 = vmatpush.bf16.msra.mxu0 %v2373
      %3033 = vmatpush.bf16.msra.mxu0 %v2369
      %3034 = vmatpush.bf16.msra.mxu0 %v2365
      %3035 = vmatmul.bf16.gmra.mxu0 %v2805
      %v3036 = vpop.f32.mrf.mxu0
      %v3037 = vadd.f32 %v3008, %v3036
      %v3038 = vpop.f32.mrf.mxu0
      %v3039 = vadd.f32 %v3010, %v3038
      %3040 = vmatmul.bf16.gmra.mxu0 %v2810
      %v3041 = vpop.f32.mrf.mxu0
      %v3042 = vadd.f32 %v3013, %v3041
      %v3043 = vpop.f32.mrf.mxu0
      %v3044 = vadd.f32 %v3015, %v3043
      %3045 = vmatmul.bf16.gmra.mxu0 %v2815
      %v3046 = vpop.f32.mrf.mxu0
      %v3047 = vadd.f32 %v3018, %v3046
      %v3048 = vpop.f32.mrf.mxu0
      %v3049 = vadd.f32 %v3020, %v3048
      %3050 = vmatmul.bf16.gmra.mxu0 %v2820
      %v3051 = vpop.f32.mrf.mxu0
      %v3052 = vadd.f32 %v3023, %v3051
      %v3053 = vpop.f32.mrf.mxu0
      %v3054 = vadd.f32 %v3025, %v3053
      %3055 = vdwg.mxu0
      %3056 = vmatpush.bf16.msra.mxu0 %v1261
      %3057 = vmatpush.bf16.msra.mxu0 %v1257
      %3058 = vmatpush.bf16.msra.mxu0 %v1253
      %3059 = vmatpush.bf16.msra.mxu0 %v1249
      %3060 = vmatpush.bf16.msra.mxu0 %v750
      %3061 = vmatpush.bf16.msra.mxu0 %v746
      %3062 = vmatpush.bf16.msra.mxu0 %v742
      %3063 = vmatpush.bf16.msra.mxu0 %v738
      %3064 = vmatmul.bf16.gmra.mxu0 %v2806
      %v3065 = vpop.f32.mrf.mxu0
      %v3066 = vadd.f32 %v3037, %v3065
      %v3067 = vpop.f32.mrf.mxu0
      %v3068 = vadd.f32 %v3039, %v3067
      %3069 = vmatmul.bf16.gmra.mxu0 %v2811
      %v3070 = vpop.f32.mrf.mxu0
      %v3071 = vadd.f32 %v3042, %v3070
      %v3072 = vpop.f32.mrf.mxu0
      %v3073 = vadd.f32 %v3044, %v3072
      %3074 = vmatmul.bf16.gmra.mxu0 %v2816
      %v3075 = vpop.f32.mrf.mxu0
      %v3076 = vadd.f32 %v3047, %v3075
      %v3077 = vpop.f32.mrf.mxu0
      %v3078 = vadd.f32 %v3049, %v3077
      %3079 = vmatmul.bf16.gmra.mxu0 %v2821
      %v3080 = vpop.f32.mrf.mxu0
      %v3081 = vadd.f32 %v3052, %v3080
      %v3082 = vpop.f32.mrf.mxu0
      %v3083 = vadd.f32 %v3054, %v3082
      %3084 = vdwg.mxu0
      %3085 = vmatpush.bf16.msra.mxu0 %v2601
      %3086 = vmatpush.bf16.msra.mxu0 %v2597
      %3087 = vmatpush.bf16.msra.mxu0 %v2593
      %3088 = vmatpush.bf16.msra.mxu0 %v2589
      %3089 = vmatpush.bf16.msra.mxu0 %v2585
      %3090 = vmatpush.bf16.msra.mxu0 %v2581
      %3091 = vmatpush.bf16.msra.mxu0 %v2577
      %3092 = vmatpush.bf16.msra.mxu0 %v2573
      %3093 = vmatmul.bf16.gmra.mxu0 %v2807
      %v3094 = vpop.f32.mrf.mxu0
      %v3095 = vadd.f32 %v3066, %v3094
      %v3096 = vpop.f32.mrf.mxu0
      %v3097 = vadd.f32 %v3068, %v3096
      %3098 = vmatmul.bf16.gmra.mxu0 %v2812
      %v3099 = vpop.f32.mrf.mxu0
      %v3100 = vadd.f32 %v3071, %v3099
      %v3101 = vpop.f32.mrf.mxu0
      %v3102 = vadd.f32 %v3073, %v3101
      %3103 = vmatmul.bf16.gmra.mxu0 %v2817
      %v3104 = vpop.f32.mrf.mxu0
      %v3105 = vadd.f32 %v3076, %v3104
      %v3106 = vpop.f32.mrf.mxu0
      %v3107 = vadd.f32 %v3078, %v3106
      %3108 = vmatmul.bf16.gmra.mxu0 %v2822
      %v3109 = vpop.f32.mrf.mxu0
      %v3110 = vadd.f32 %v3081, %v3109
      %v3111 = vpop.f32.mrf.mxu0
      %v3112 = vadd.f32 %v3083, %v3111
      %3113 = vdwg.mxu0
      %3114 = vmatpush.bf16.msra.mxu0 0
      %3115 = vmatpush.bf16.msra.mxu0 0
      %3116 = vmatpush.bf16.msra.mxu0 0
      %3117 = vmatpush.bf16.msra.mxu0 0
      %3118 = vmatpush.bf16.msra.mxu0 %v2617
      %3119 = vmatpush.bf16.msra.mxu0 %v2613
      %3120 = vmatpush.bf16.msra.mxu0 %v2609
      %3121 = vmatpush.bf16.msra.mxu0 %v2605
      %3122 = vmatmul.bf16.gmra.mxu0 %v2842
      %v3123 = vpop.f32.mrf.mxu0
      %v3124 = vadd.f32 %v3095, %v3123
      %v3125 = vpop.f32.mrf.mxu0
      %v3126 = vadd.f32 %v3097, %v3125
      %3127 = vmatmul.bf16.gmra.mxu0 %v2845
      %v3128 = vpop.f32.mrf.mxu0
      %v3129 = vadd.f32 %v3100, %v3128
      %v3130 = vpop.f32.mrf.mxu0
      %v3131 = vadd.f32 %v3102, %v3130
      %3132 = vmatmul.bf16.gmra.mxu0 %v2848
      %v3133 = vpop.f32.mrf.mxu0
      %v3134 = vadd.f32 %v3105, %v3133
      %v3135 = vpop.f32.mrf.mxu0
      %v3136 = vadd.f32 %v3107, %v3135
      %3137 = vmatmul.bf16.gmra.mxu0 %v2851
      %v3138 = vpop.f32.mrf.mxu0
      %v3139 = vadd.f32 %v3110, %v3138
      %v3140 = vpop.f32.mrf.mxu0
      %v3141 = vadd.f32 %v3112, %v3140
      %3142 = vdwg.mxu0
      %3143 = vmatpush.bf16.msra.mxu0 %v2362
      %3144 = vmatpush.bf16.msra.mxu0 %v2358
      %3145 = vmatpush.bf16.msra.mxu0 %v2354
      %3146 = vmatpush.bf16.msra.mxu0 %v2350
      %3147 = vmatpush.bf16.msra.mxu0 %v2346
      %3148 = vmatpush.bf16.msra.mxu0 %v2342
      %3149 = vmatpush.bf16.msra.mxu0 %v2338
      %3150 = vmatpush.bf16.msra.mxu0 %v2334
      %3151 = vmatmul.bf16.gmra.mxu0 %v2804
      %v3152 = vpop.f32.mrf.mxu0
      %v3153 = vadd.f32 %v2703, %v3152
      %v3154 = vpop.f32.mrf.mxu0
      %v3155 = vadd.f32 %v2708, %v3154
      %3156 = vmatmul.bf16.gmra.mxu0 %v2809
      %v3157 = vpop.f32.mrf.mxu0
      %v3158 = vadd.f32 %v2713, %v3157
      %v3159 = vpop.f32.mrf.mxu0
      %v3160 = vadd.f32 %v2718, %v3159
      %3161 = vmatmul.bf16.gmra.mxu0 %v2814
      %v3162 = vpop.f32.mrf.mxu0
      %v3163 = vadd.f32 %v2723, %v3162
      %v3164 = vpop.f32.mrf.mxu0
      %v3165 = vadd.f32 %v2728, %v3164
      %3166 = vmatmul.bf16.gmra.mxu0 %v2819
      %v3167 = vpop.f32.mrf.mxu0
      %v3168 = vadd.f32 %v2733, %v3167
      %v3169 = vpop.f32.mrf.mxu0
      %v3170 = vadd.f32 %v2738, %v3169
      %3171 = vdwg.mxu0
      %3172 = vmatpush.bf16.msra.mxu0 %v1166
      %3173 = vmatpush.bf16.msra.mxu0 %v1162
      %3174 = vmatpush.bf16.msra.mxu0 %v1158
      %3175 = vmatpush.bf16.msra.mxu0 %v1154
      %3176 = vmatpush.bf16.msra.mxu0 %v2378
      %3177 = vmatpush.bf16.msra.mxu0 %v2374
      %3178 = vmatpush.bf16.msra.mxu0 %v2370
      %3179 = vmatpush.bf16.msra.mxu0 %v2366
      %3180 = vmatmul.bf16.gmra.mxu0 %v2805
      %v3181 = vpop.f32.mrf.mxu0
      %v3182 = vadd.f32 %v3153, %v3181
      %v3183 = vpop.f32.mrf.mxu0
      %v3184 = vadd.f32 %v3155, %v3183
      %3185 = vmatmul.bf16.gmra.mxu0 %v2810
      %v3186 = vpop.f32.mrf.mxu0
      %v3187 = vadd.f32 %v3158, %v3186
      %v3188 = vpop.f32.mrf.mxu0
      %v3189 = vadd.f32 %v3160, %v3188
      %3190 = vmatmul.bf16.gmra.mxu0 %v2815
      %v3191 = vpop.f32.mrf.mxu0
      %v3192 = vadd.f32 %v3163, %v3191
      %v3193 = vpop.f32.mrf.mxu0
      %v3194 = vadd.f32 %v3165, %v3193
      %3195 = vmatmul.bf16.gmra.mxu0 %v2820
      %v3196 = vpop.f32.mrf.mxu0
      %v3197 = vadd.f32 %v3168, %v3196
      %v3198 = vpop.f32.mrf.mxu0
      %v3199 = vadd.f32 %v3170, %v3198
      %3200 = vdwg.mxu0
      %3201 = vmatpush.bf16.msra.mxu0 %v1262
      %3202 = vmatpush.bf16.msra.mxu0 %v1258
      %3203 = vmatpush.bf16.msra.mxu0 %v1254
      %3204 = vmatpush.bf16.msra.mxu0 %v1250
      %3205 = vmatpush.bf16.msra.mxu0 %v751
      %3206 = vmatpush.bf16.msra.mxu0 %v747
      %3207 = vmatpush.bf16.msra.mxu0 %v743
      %3208 = vmatpush.bf16.msra.mxu0 %v739
      %3209 = vmatmul.bf16.gmra.mxu0 %v2806
      %v3210 = vpop.f32.mrf.mxu0
      %v3211 = vadd.f32 %v3182, %v3210
      %v3212 = vpop.f32.mrf.mxu0
      %v3213 = vadd.f32 %v3184, %v3212
      %3214 = vmatmul.bf16.gmra.mxu0 %v2811
      %v3215 = vpop.f32.mrf.mxu0
      %v3216 = vadd.f32 %v3187, %v3215
      %v3217 = vpop.f32.mrf.mxu0
      %v3218 = vadd.f32 %v3189, %v3217
      %3219 = vmatmul.bf16.gmra.mxu0 %v2816
      %v3220 = vpop.f32.mrf.mxu0
      %v3221 = vadd.f32 %v3192, %v3220
      %v3222 = vpop.f32.mrf.mxu0
      %v3223 = vadd.f32 %v3194, %v3222
      %3224 = vmatmul.bf16.gmra.mxu0 %v2821
      %v3225 = vpop.f32.mrf.mxu0
      %v3226 = vadd.f32 %v3197, %v3225
      %v3227 = vpop.f32.mrf.mxu0
      %v3228 = vadd.f32 %v3199, %v3227
      %3229 = vdwg.mxu0
      %3230 = vmatpush.bf16.msra.mxu0 %v2602
      %3231 = vmatpush.bf16.msra.mxu0 %v2598
      %3232 = vmatpush.bf16.msra.mxu0 %v2594
      %3233 = vmatpush.bf16.msra.mxu0 %v2590
      %3234 = vmatpush.bf16.msra.mxu0 %v2586
      %3235 = vmatpush.bf16.msra.mxu0 %v2582
      %3236 = vmatpush.bf16.msra.mxu0 %v2578
      %3237 = vmatpush.bf16.msra.mxu0 %v2574
      %3238 = vmatmul.bf16.gmra.mxu0 %v2807
      %v3239 = vpop.f32.mrf.mxu0
      %v3240 = vadd.f32 %v3211, %v3239
      %v3241 = vpop.f32.mrf.mxu0
      %v3242 = vadd.f32 %v3213, %v3241
      %3243 = vmatmul.bf16.gmra.mxu0 %v2812
      %v3244 = vpop.f32.mrf.mxu0
      %v3245 = vadd.f32 %v3216, %v3244
      %v3246 = vpop.f32.mrf.mxu0
      %v3247 = vadd.f32 %v3218, %v3246
      %3248 = vmatmul.bf16.gmra.mxu0 %v2817
      %v3249 = vpop.f32.mrf.mxu0
      %v3250 = vadd.f32 %v3221, %v3249
      %v3251 = vpop.f32.mrf.mxu0
      %v3252 = vadd.f32 %v3223, %v3251
      %3253 = vmatmul.bf16.gmra.mxu0 %v2822
      %v3254 = vpop.f32.mrf.mxu0
      %v3255 = vadd.f32 %v3226, %v3254
      %v3256 = vpop.f32.mrf.mxu0
      %v3257 = vadd.f32 %v3228, %v3256
      %3258 = vdwg.mxu0
      %3259 = vmatpush.bf16.msra.mxu0 0
      %3260 = vmatpush.bf16.msra.mxu0 0
      %3261 = vmatpush.bf16.msra.mxu0 0
      %3262 = vmatpush.bf16.msra.mxu0 0
      %3263 = vmatpush.bf16.msra.mxu0 %v2618
      %3264 = vmatpush.bf16.msra.mxu0 %v2614
      %3265 = vmatpush.bf16.msra.mxu0 %v2610
      %3266 = vmatpush.bf16.msra.mxu0 %v2606
      %3267 = vmatmul.bf16.gmra.mxu0 %v2842
      %v3268 = vpop.f32.mrf.mxu0
      %v3269 = vadd.f32 %v3240, %v3268
      %v3270 = vpop.f32.mrf.mxu0
      %v3271 = vadd.f32 %v3242, %v3270
      %3272 = vmatmul.bf16.gmra.mxu0 %v2845
      %v3273 = vpop.f32.mrf.mxu0
      %v3274 = vadd.f32 %v3245, %v3273
      %v3275 = vpop.f32.mrf.mxu0
      %v3276 = vadd.f32 %v3247, %v3275
      %3277 = vmatmul.bf16.gmra.mxu0 %v2848
      %v3278 = vpop.f32.mrf.mxu0
      %v3279 = vadd.f32 %v3250, %v3278
      %v3280 = vpop.f32.mrf.mxu0
      %v3281 = vadd.f32 %v3252, %v3280
      %3282 = vmatmul.bf16.gmra.mxu0 %v2851
      %v3283 = vpop.f32.mrf.mxu0
      %v3284 = vadd.f32 %v3255, %v3283
      %v3285 = vpop.f32.mrf.mxu0
      %v3286 = vadd.f32 %v3257, %v3285
      %3287 = vdwg.mxu0
      %3288 = vmatpush.bf16.msra.mxu0 %v2363
      %3289 = vmatpush.bf16.msra.mxu0 %v2359
      %3290 = vmatpush.bf16.msra.mxu0 %v2355
      %3291 = vmatpush.bf16.msra.mxu0 %v2351
      %3292 = vmatpush.bf16.msra.mxu0 %v2347
      %3293 = vmatpush.bf16.msra.mxu0 %v2343
      %3294 = vmatpush.bf16.msra.mxu0 %v2339
      %3295 = vmatpush.bf16.msra.mxu0 %v2335
      %3296 = vmatmul.bf16.gmra.mxu0 %v2804
      %v3297 = vpop.f32.mrf.mxu0
      %v3298 = vadd.f32 %v2703, %v3297
      %v3299 = vpop.f32.mrf.mxu0
      %v3300 = vadd.f32 %v2708, %v3299
      %3301 = vmatmul.bf16.gmra.mxu0 %v2809
      %v3302 = vpop.f32.mrf.mxu0
      %v3303 = vadd.f32 %v2713, %v3302
      %v3304 = vpop.f32.mrf.mxu0
      %v3305 = vadd.f32 %v2718, %v3304
      %3306 = vmatmul.bf16.gmra.mxu0 %v2814
      %v3307 = vpop.f32.mrf.mxu0
      %v3308 = vadd.f32 %v2723, %v3307
      %v3309 = vpop.f32.mrf.mxu0
      %v3310 = vadd.f32 %v2728, %v3309
      %3311 = vmatmul.bf16.gmra.mxu0 %v2819
      %v3312 = vpop.f32.mrf.mxu0
      %v3313 = vadd.f32 %v2733, %v3312
      %v3314 = vpop.f32.mrf.mxu0
      %v3315 = vadd.f32 %v2738, %v3314
      %3316 = vdwg.mxu0
      %3317 = vmatpush.bf16.msra.mxu0 %v1167
      %3318 = vmatpush.bf16.msra.mxu0 %v1163
      %3319 = vmatpush.bf16.msra.mxu0 %v1159
      %3320 = vmatpush.bf16.msra.mxu0 %v1155
      %3321 = vmatpush.bf16.msra.mxu0 %v2379
      %3322 = vmatpush.bf16.msra.mxu0 %v2375
      %3323 = vmatpush.bf16.msra.mxu0 %v2371
      %3324 = vmatpush.bf16.msra.mxu0 %v2367
      %3325 = vmatmul.bf16.gmra.mxu0 %v2805
      %v3326 = vpop.f32.mrf.mxu0
      %v3327 = vadd.f32 %v3298, %v3326
      %v3328 = vpop.f32.mrf.mxu0
      %v3329 = vadd.f32 %v3300, %v3328
      %3330 = vmatmul.bf16.gmra.mxu0 %v2810
      %v3331 = vpop.f32.mrf.mxu0
      %v3332 = vadd.f32 %v3303, %v3331
      %v3333 = vpop.f32.mrf.mxu0
      %v3334 = vadd.f32 %v3305, %v3333
      %3335 = vmatmul.bf16.gmra.mxu0 %v2815
      %v3336 = vpop.f32.mrf.mxu0
      %v3337 = vadd.f32 %v3308, %v3336
      %v3338 = vpop.f32.mrf.mxu0
      %v3339 = vadd.f32 %v3310, %v3338
      %3340 = vmatmul.bf16.gmra.mxu0 %v2820
      %v3341 = vpop.f32.mrf.mxu0
      %v3342 = vadd.f32 %v3313, %v3341
      %v3343 = vpop.f32.mrf.mxu0
      %v3344 = vadd.f32 %v3315, %v3343
      %3345 = vdwg.mxu0
      %3346 = vmatpush.bf16.msra.mxu0 %v1263
      %3347 = vmatpush.bf16.msra.mxu0 %v1259
      %3348 = vmatpush.bf16.msra.mxu0 %v1255
      %3349 = vmatpush.bf16.msra.mxu0 %v1251
      %3350 = vmatpush.bf16.msra.mxu0 %v752
      %3351 = vmatpush.bf16.msra.mxu0 %v748
      %3352 = vmatpush.bf16.msra.mxu0 %v744
      %3353 = vmatpush.bf16.msra.mxu0 %v740
      %3354 = vmatmul.bf16.gmra.mxu0 %v2806
      %v3355 = vpop.f32.mrf.mxu0
      %v3356 = vadd.f32 %v3327, %v3355
      %v3357 = vpop.f32.mrf.mxu0
      %v3358 = vadd.f32 %v3329, %v3357
      %3359 = vmatmul.bf16.gmra.mxu0 %v2811
      %v3360 = vpop.f32.mrf.mxu0
      %v3361 = vadd.f32 %v3332, %v3360
      %v3362 = vpop.f32.mrf.mxu0
      %v3363 = vadd.f32 %v3334, %v3362
      %3364 = vmatmul.bf16.gmra.mxu0 %v2816
      %v3365 = vpop.f32.mrf.mxu0
      %v3366 = vadd.f32 %v3337, %v3365
      %v3367 = vpop.f32.mrf.mxu0
      %v3368 = vadd.f32 %v3339, %v3367
      %3369 = vmatmul.bf16.gmra.mxu0 %v2821
      %v3370 = vpop.f32.mrf.mxu0
      %v3371 = vadd.f32 %v3342, %v3370
      %v3372 = vpop.f32.mrf.mxu0
      %v3373 = vadd.f32 %v3344, %v3372
      %3374 = vdwg.mxu0
      %3375 = vmatpush.bf16.msra.mxu0 %v2603
      %3376 = vmatpush.bf16.msra.mxu0 %v2599
      %3377 = vmatpush.bf16.msra.mxu0 %v2595
      %3378 = vmatpush.bf16.msra.mxu0 %v2591
      %3379 = vmatpush.bf16.msra.mxu0 %v2587
      %3380 = vmatpush.bf16.msra.mxu0 %v2583
      %3381 = vmatpush.bf16.msra.mxu0 %v2579
      %3382 = vmatpush.bf16.msra.mxu0 %v2575
      %3383 = vmatmul.bf16.gmra.mxu0 %v2807
      %v3384 = vpop.f32.mrf.mxu0
      %v3385 = vadd.f32 %v3356, %v3384
      %v3386 = vpop.f32.mrf.mxu0
      %v3387 = vadd.f32 %v3358, %v3386
      %3388 = vmatmul.bf16.gmra.mxu0 %v2812
      %v3389 = vpop.f32.mrf.mxu0
      %v3390 = vadd.f32 %v3361, %v3389
      %v3391 = vpop.f32.mrf.mxu0
      %v3392 = vadd.f32 %v3363, %v3391
      %3393 = vmatmul.bf16.gmra.mxu0 %v2817
      %v3394 = vpop.f32.mrf.mxu0
      %v3395 = vadd.f32 %v3366, %v3394
      %v3396 = vpop.f32.mrf.mxu0
      %v3397 = vadd.f32 %v3368, %v3396
      %3398 = vmatmul.bf16.gmra.mxu0 %v2822
      %v3399 = vpop.f32.mrf.mxu0
      %v3400 = vadd.f32 %v3371, %v3399
      %v3401 = vpop.f32.mrf.mxu0
      %v3402 = vadd.f32 %v3373, %v3401
      %3403 = vdwg.mxu0
      %3404 = vmatpush.bf16.msra.mxu0 0
      %3405 = vmatpush.bf16.msra.mxu0 0
      %3406 = vmatpush.bf16.msra.mxu0 0
      %3407 = vmatpush.bf16.msra.mxu0 0
      %3408 = vmatpush.bf16.msra.mxu0 %v2619
      %3409 = vmatpush.bf16.msra.mxu0 %v2615
      %3410 = vmatpush.bf16.msra.mxu0 %v2611
      %3411 = vmatpush.bf16.msra.mxu0 %v2607
      %3412 = vmatmul.bf16.gmra.mxu0 %v2842
      %v3413 = vpop.f32.mrf.mxu0
      %v3414 = vadd.f32 %v3385, %v3413
      %v3415 = vpop.f32.mrf.mxu0
      %v3416 = vadd.f32 %v3387, %v3415
      %3417 = vmatmul.bf16.gmra.mxu0 %v2845
      %v3418 = vpop.f32.mrf.mxu0
      %v3419 = vadd.f32 %v3390, %v3418
      %v3420 = vpop.f32.mrf.mxu0
      %v3421 = vadd.f32 %v3392, %v3420
      %3422 = vmatmul.bf16.gmra.mxu0 %v2848
      %v3423 = vpop.f32.mrf.mxu0
      %v3424 = vadd.f32 %v3395, %v3423
      %v3425 = vpop.f32.mrf.mxu0
      %v3426 = vadd.f32 %v3397, %v3425
      %3427 = vmatmul.bf16.gmra.mxu0 %v2851
      %v3428 = vpop.f32.mrf.mxu0
      %v3429 = vadd.f32 %v3400, %v3428
      %v3430 = vpop.f32.mrf.mxu0
      %v3431 = vadd.f32 %v3402, %v3430
      %3432 = vdwg.mxu0
      %v3433 = vmax.f32 %v2979, 0.0
      %v3434 = vmax.f32 %v3124, 0.0
      %v3435 = vmax.f32 %v3269, 0.0
      %v3436 = vmax.f32 %v3414, 0.0
      %v3437 = vmax.f32 %v2981, 0.0
      %v3438 = vmax.f32 %v3126, 0.0
      %v3439 = vmax.f32 %v3271, 0.0
      %v3440 = vmax.f32 %v3416, 0.0
      %v3441 = vmax.f32 %v2984, 0.0
      %v3442 = vmax.f32 %v3129, 0.0
      %v3443 = vmax.f32 %v3274, 0.0
      %v3444 = vmax.f32 %v3419, 0.0
      %v3445 = vmax.f32 %v2986, 0.0
      %v3446 = vmax.f32 %v3131, 0.0
      %v3447 = vmax.f32 %v3276, 0.0
      %v3448 = vmax.f32 %v3421, 0.0
      %v3449 = vmax.f32 %v2989, 0.0
      %v3450 = vmax.f32 %v3134, 0.0
      %v3451 = vmax.f32 %v3279, 0.0
      %v3452 = vmax.f32 %v3424, 0.0
      %v3453 = vmax.f32 %v2991, 0.0
      %v3454 = vmax.f32 %v3136, 0.0
      %v3455 = vmax.f32 %v3281, 0.0
      %v3456 = vmax.f32 %v3426, 0.0
      %v3457 = vmax.f32 %v2994, 0.0
      %v3458 = vmax.f32 %v3139, 0.0
      %v3459 = vmax.f32 %v3284, 0.0
      %v3460 = vmax.f32 %v3429, 0.0
      %v3461 = vmax.f32 %v2996, 0.0
      %v3462 = vmax.f32 %v3141, 0.0
      %v3463 = vmax.f32 %v3286, 0.0
      %v3464 = vmax.f32 %v3431, 0.0
      %v3465 = vpack.c.bf16 %v3434, %v3433
      %v3466 = vpack.c.bf16 %v3436, %v3435
      %v3467 = vpack.c.bf16 %v3438, %v3437
      %v3468 = vpack.c.bf16 %v3440, %v3439
      %v3469 = vpack.c.bf16 %v3442, %v3441
      %v3470 = vpack.c.bf16 %v3444, %v3443
      %v3471 = vpack.c.bf16 %v3446, %v3445
      %v3472 = vpack.c.bf16 %v3448, %v3447
      %v3473 = vpack.c.bf16 %v3450, %v3449
      %v3474 = vpack.c.bf16 %v3452, %v3451
      %v3475 = vpack.c.bf16 %v3454, %v3453
      %v3476 = vpack.c.bf16 %v3456, %v3455
      %v3477 = vpack.c.bf16 %v3458, %v3457
      %v3478 = vpack.c.bf16 %v3460, %v3459
      %v3479 = vpack.c.bf16 %v3462, %v3461
      %v3480 = vpack.c.bf16 %v3464, %v3463
      %v3497 = vunpack.c.l.b16 %v3465
      %v3498 = vunpack.c.h.b16 %v3465
      %v3499 = vunpack.c.l.b16 %v3466
      %v3500 = vunpack.c.h.b16 %v3466
      %v3501 = vunpack.c.l.b16 %v3467
      %v3502 = vunpack.c.h.b16 %v3467
      %v3503 = vunpack.c.l.b16 %v3468
      %v3504 = vunpack.c.h.b16 %v3468
      %v3505 = vunpack.c.l.b16 %v3469
      %v3506 = vunpack.c.h.b16 %v3469
      %v3507 = vunpack.c.l.b16 %v3470
      %v3508 = vunpack.c.h.b16 %v3470
      %v3509 = vunpack.c.l.b16 %v3471
      %v3510 = vunpack.c.h.b16 %v3471
      %v3511 = vunpack.c.l.b16 %v3472
      %v3512 = vunpack.c.h.b16 %v3472
      %v3513 = vunpack.c.l.b16 %v3473
      %v3514 = vunpack.c.h.b16 %v3473
      %v3515 = vunpack.c.l.b16 %v3474
      %v3516 = vunpack.c.h.b16 %v3474
      %v3517 = vunpack.c.l.b16 %v3475
      %v3518 = vunpack.c.h.b16 %v3475
      %v3519 = vunpack.c.l.b16 %v3476
      %v3520 = vunpack.c.h.b16 %v3476
      %v3521 = vunpack.c.l.b16 %v3477
      %v3522 = vunpack.c.h.b16 %v3477
      %v3523 = vunpack.c.l.b16 %v3478
      %v3524 = vunpack.c.h.b16 %v3478
      %v3525 = vunpack.c.l.b16 %v3479
      %v3526 = vunpack.c.h.b16 %v3479
      %v3527 = vunpack.c.l.b16 %v3480
      %v3528 = vunpack.c.h.b16 %v3480
      %v3529 = vpack.c.b16 %v3501, %v3497
      %v3530 = vpack.c.b16 %v3502, %v3498
      %v3531 = vpack.c.b16 %v3503, %v3499
      %v3532 = vpack.c.b16 %v3504, %v3500
      %v3533 = vpack.c.b16 %v3509, %v3505
      %v3534 = vpack.c.b16 %v3510, %v3506
      %v3535 = vpack.c.b16 %v3511, %v3507
      %v3536 = vpack.c.b16 %v3512, %v3508
      %v3537 = vpack.c.b16 %v3517, %v3513
      %v3538 = vpack.c.b16 %v3518, %v3514
      %v3539 = vpack.c.b16 %v3519, %v3515
      %v3540 = vpack.c.b16 %v3520, %v3516
      %v3541 = vpack.c.b16 %v3525, %v3521
      %v3542 = vpack.c.b16 %v3526, %v3522
      %v3543 = vpack.c.b16 %v3527, %v3523
      %v3544 = vpack.c.b16 %v3528, %v3524
      %3545 = vrot.lane.b32.xlu0 %v3529, 1
      %v3546 = vpop.permute.xlu0 %3545
      %3547 = vrot.lane.b32.xlu0 %v3530, 1
      %v3548 = vpop.permute.xlu0 %3547
      %3549 = vrot.lane.b32.xlu0 %v3531, 1
      %v3550 = vpop.permute.xlu0 %3549
      %3551 = vrot.lane.b32.xlu0 %v3532, 1
      %v3552 = vpop.permute.xlu0 %3551
      %3553 = vrot.lane.b32.xlu0 %v3533, 1
      %v3554 = vpop.permute.xlu0 %3553
      %3555 = vrot.lane.b32.xlu0 %v3534, 1
      %v3556 = vpop.permute.xlu0 %3555
      %3557 = vrot.lane.b32.xlu0 %v3535, 1
      %v3558 = vpop.permute.xlu0 %3557
      %3559 = vrot.lane.b32.xlu0 %v3536, 1
      %v3560 = vpop.permute.xlu0 %3559
      %3561 = vrot.lane.b32.xlu0 %v3537, 1
      %v3562 = vpop.permute.xlu0 %3561
      %3563 = vrot.lane.b32.xlu0 %v3538, 1
      %v3564 = vpop.permute.xlu0 %3563
      %3565 = vrot.lane.b32.xlu0 %v3539, 1
      %v3566 = vpop.permute.xlu0 %3565
      %3567 = vrot.lane.b32.xlu0 %v3540, 1
      %v3568 = vpop.permute.xlu0 %3567
      %3569 = vrot.lane.b32.xlu0 %v3541, 1
      %v3570 = vpop.permute.xlu0 %3569
      %3571 = vrot.lane.b32.xlu0 %v3542, 1
      %v3572 = vpop.permute.xlu0 %3571
      %3573 = vrot.lane.b32.xlu0 %v3543, 1
      %v3574 = vpop.permute.xlu0 %3573
      %3575 = vrot.lane.b32.xlu0 %v3544, 1
      %v3576 = vpop.permute.xlu0 %3575
      %v3577 = vsel %vm785, %v3546, %v3548
      %v3578 = vsel %vm785, %v3548, %v3550
      %v3579 = vsel %vm785, %v3550, %v3552
      %v3580 = vsel %vm785, %v3554, %v3556
      %v3581 = vsel %vm785, %v3556, %v3558
      %v3582 = vsel %vm785, %v3558, %v3560
      %v3583 = vsel %vm785, %v3562, %v3564
      %v3584 = vsel %vm785, %v3564, %v3566
      %v3585 = vsel %vm785, %v3566, %v3568
      %v3586 = vsel %vm785, %v3570, %v3572
      %v3587 = vsel %vm785, %v3572, %v3574
      %v3588 = vsel %vm785, %v3574, %v3576
      %v3602 = vsel %vm810, 0, %v3546
      %v3605 = vsel %vm810, 0, %v3554
      %v3608 = vsel %vm810, 0, %v3562
      %v3611 = vsel %vm810, 0, %v3570
      %v3613 = vunpack.c.l.bf16 %v3602
      %v3614 = vunpack.c.l.bf16 %v3577
      %v3615 = vunpack.c.l.bf16 %v3578
      %v3616 = vunpack.c.l.bf16 %v3579
      %v3617 = vunpack.c.h.bf16 %v3602
      %v3618 = vunpack.c.h.bf16 %v3577
      %v3619 = vunpack.c.h.bf16 %v3578
      %v3620 = vunpack.c.h.bf16 %v3579
      %v3621 = vunpack.c.l.bf16 %v3605
      %v3622 = vunpack.c.l.bf16 %v3580
      %v3623 = vunpack.c.l.bf16 %v3581
      %v3624 = vunpack.c.l.bf16 %v3582
      %v3625 = vunpack.c.h.bf16 %v3605
      %v3626 = vunpack.c.h.bf16 %v3580
      %v3627 = vunpack.c.h.bf16 %v3581
      %v3628 = vunpack.c.h.bf16 %v3582
      %v3629 = vunpack.c.l.bf16 %v3608
      %v3630 = vunpack.c.l.bf16 %v3583
      %v3631 = vunpack.c.l.bf16 %v3584
      %v3632 = vunpack.c.l.bf16 %v3585
      %v3633 = vunpack.c.h.bf16 %v3608
      %v3634 = vunpack.c.h.bf16 %v3583
      %v3635 = vunpack.c.h.bf16 %v3584
      %v3636 = vunpack.c.h.bf16 %v3585
      %v3637 = vunpack.c.l.bf16 %v3611
      %v3638 = vunpack.c.l.bf16 %v3586
      %v3639 = vunpack.c.l.bf16 %v3587
      %v3640 = vunpack.c.l.bf16 %v3588
      %v3641 = vunpack.c.h.bf16 %v3611
      %v3642 = vunpack.c.h.bf16 %v3586
      %v3643 = vunpack.c.h.bf16 %v3587
      %v3644 = vunpack.c.h.bf16 %v3588
      %v3645 = vmul.f32 %v850, %v3613
      %v3646 = vmul.f32 %v851, %v3614
      %v3647 = vmul.f32 %v852, %v3615
      %v3648 = vmul.f32 %v853, %v3616
      %v3649 = vmul.f32 %v850, %v3617
      %v3650 = vmul.f32 %v851, %v3618
      %v3651 = vmul.f32 %v852, %v3619
      %v3652 = vmul.f32 %v853, %v3620
      %v3653 = vmul.f32 %v850, %v3621
      %v3654 = vmul.f32 %v851, %v3622
      %v3655 = vmul.f32 %v852, %v3623
      %v3656 = vmul.f32 %v853, %v3624
      %v3657 = vmul.f32 %v850, %v3625
      %v3658 = vmul.f32 %v851, %v3626
      %v3659 = vmul.f32 %v852, %v3627
      %v3660 = vmul.f32 %v853, %v3628
      %v3661 = vmul.f32 %v850, %v3629
      %v3662 = vmul.f32 %v851, %v3630
      %v3663 = vmul.f32 %v852, %v3631
      %v3664 = vmul.f32 %v853, %v3632
      %v3665 = vmul.f32 %v850, %v3633
      %v3666 = vmul.f32 %v851, %v3634
      %v3667 = vmul.f32 %v852, %v3635
      %v3668 = vmul.f32 %v853, %v3636
      %v3669 = vmul.f32 %v850, %v3637
      %v3670 = vmul.f32 %v851, %v3638
      %v3671 = vmul.f32 %v852, %v3639
      %v3672 = vmul.f32 %v853, %v3640
      %v3673 = vmul.f32 %v850, %v3641
      %v3674 = vmul.f32 %v851, %v3642
      %v3675 = vmul.f32 %v852, %v3643
      %v3676 = vmul.f32 %v853, %v3644
      %v3677 = vpack.c.bf16 %v3646, %v3645
      %v3678 = vpack.c.bf16 %v3648, %v3647
      %v3679 = vpack.c.bf16 %v3650, %v3649
      %v3680 = vpack.c.bf16 %v3652, %v3651
      %v3681 = vpack.c.bf16 %v3654, %v3653
      %v3682 = vpack.c.bf16 %v3656, %v3655
      %v3683 = vpack.c.bf16 %v3658, %v3657
      %v3684 = vpack.c.bf16 %v3660, %v3659
      %v3685 = vpack.c.bf16 %v3662, %v3661
      %v3686 = vpack.c.bf16 %v3664, %v3663
      %v3687 = vpack.c.bf16 %v3666, %v3665
      %v3688 = vpack.c.bf16 %v3668, %v3667
      %v3689 = vpack.c.bf16 %v3670, %v3669
      %v3690 = vpack.c.bf16 %v3672, %v3671
      %v3691 = vpack.c.bf16 %v3674, %v3673
      %v3692 = vpack.c.bf16 %v3676, %v3675
      %3693 = vrot.lane.b32.xlu0 %v3529, 127
      %v3694 = vpop.permute.xlu0 %3693
      %3695 = vrot.lane.b32.xlu0 %v3530, 127
      %v3696 = vpop.permute.xlu0 %3695
      %3697 = vrot.lane.b32.xlu0 %v3531, 127
      %v3698 = vpop.permute.xlu0 %3697
      %3699 = vrot.lane.b32.xlu0 %v3532, 127
      %v3700 = vpop.permute.xlu0 %3699
      %3701 = vrot.lane.b32.xlu0 %v3533, 127
      %v3702 = vpop.permute.xlu0 %3701
      %3703 = vrot.lane.b32.xlu0 %v3534, 127
      %v3704 = vpop.permute.xlu0 %3703
      %3705 = vrot.lane.b32.xlu0 %v3535, 127
      %v3706 = vpop.permute.xlu0 %3705
      %3707 = vrot.lane.b32.xlu0 %v3536, 127
      %v3708 = vpop.permute.xlu0 %3707
      %3709 = vrot.lane.b32.xlu0 %v3537, 127
      %v3710 = vpop.permute.xlu0 %3709
      %3711 = vrot.lane.b32.xlu0 %v3538, 127
      %v3712 = vpop.permute.xlu0 %3711
      %3713 = vrot.lane.b32.xlu0 %v3539, 127
      %v3714 = vpop.permute.xlu0 %3713
      %3715 = vrot.lane.b32.xlu0 %v3540, 127
      %v3716 = vpop.permute.xlu0 %3715
      %3717 = vrot.lane.b32.xlu0 %v3541, 127
      %v3718 = vpop.permute.xlu0 %3717
      %3719 = vrot.lane.b32.xlu0 %v3542, 127
      %v3720 = vpop.permute.xlu0 %3719
      %3721 = vrot.lane.b32.xlu0 %v3543, 127
      %v3722 = vpop.permute.xlu0 %3721
      %3723 = vrot.lane.b32.xlu0 %v3544, 127
      %v3724 = vpop.permute.xlu0 %3723
      %v3725 = vsel %vm966, %v3694, %v3696
      %v3726 = vsel %vm966, %v3696, %v3698
      %v3727 = vsel %vm966, %v3698, %v3700
      %v3728 = vsel %vm966, %v3702, %v3704
      %v3729 = vsel %vm966, %v3704, %v3706
      %v3730 = vsel %vm966, %v3706, %v3708
      %v3731 = vsel %vm966, %v3710, %v3712
      %v3732 = vsel %vm966, %v3712, %v3714
      %v3733 = vsel %vm966, %v3714, %v3716
      %v3734 = vsel %vm966, %v3718, %v3720
      %v3735 = vsel %vm966, %v3720, %v3722
      %v3736 = vsel %vm966, %v3722, %v3724
      %v3750 = vsel %vm991, %v3700, 0
      %v3753 = vsel %vm991, %v3708, 0
      %v3756 = vsel %vm991, %v3716, 0
      %v3759 = vsel %vm991, %v3724, 0
      %v3761 = vunpack.c.l.bf16 %v3725
      %v3762 = vunpack.c.l.bf16 %v3726
      %v3763 = vunpack.c.l.bf16 %v3727
      %v3764 = vunpack.c.l.bf16 %v3750
      %v3765 = vunpack.c.h.bf16 %v3725
      %v3766 = vunpack.c.h.bf16 %v3726
      %v3767 = vunpack.c.h.bf16 %v3727
      %v3768 = vunpack.c.h.bf16 %v3750
      %v3769 = vunpack.c.l.bf16 %v3728
      %v3770 = vunpack.c.l.bf16 %v3729
      %v3771 = vunpack.c.l.bf16 %v3730
      %v3772 = vunpack.c.l.bf16 %v3753
      %v3773 = vunpack.c.h.bf16 %v3728
      %v3774 = vunpack.c.h.bf16 %v3729
      %v3775 = vunpack.c.h.bf16 %v3730
      %v3776 = vunpack.c.h.bf16 %v3753
      %v3777 = vunpack.c.l.bf16 %v3731
      %v3778 = vunpack.c.l.bf16 %v3732
      %v3779 = vunpack.c.l.bf16 %v3733
      %v3780 = vunpack.c.l.bf16 %v3756
      %v3781 = vunpack.c.h.bf16 %v3731
      %v3782 = vunpack.c.h.bf16 %v3732
      %v3783 = vunpack.c.h.bf16 %v3733
      %v3784 = vunpack.c.h.bf16 %v3756
      %v3785 = vunpack.c.l.bf16 %v3734
      %v3786 = vunpack.c.l.bf16 %v3735
      %v3787 = vunpack.c.l.bf16 %v3736
      %v3788 = vunpack.c.l.bf16 %v3759
      %v3789 = vunpack.c.h.bf16 %v3734
      %v3790 = vunpack.c.h.bf16 %v3735
      %v3791 = vunpack.c.h.bf16 %v3736
      %v3792 = vunpack.c.h.bf16 %v3759
      %v3793 = vmul.f32 %v1020, %v3761
      %v3794 = vmul.f32 %v1021, %v3762
      %v3795 = vmul.f32 %v1022, %v3763
      %v3796 = vmul.f32 %v1023, %v3764
      %v3797 = vmul.f32 %v1020, %v3765
      %v3798 = vmul.f32 %v1021, %v3766
      %v3799 = vmul.f32 %v1022, %v3767
      %v3800 = vmul.f32 %v1023, %v3768
      %v3801 = vmul.f32 %v1020, %v3769
      %v3802 = vmul.f32 %v1021, %v3770
      %v3803 = vmul.f32 %v1022, %v3771
      %v3804 = vmul.f32 %v1023, %v3772
      %v3805 = vmul.f32 %v1020, %v3773
      %v3806 = vmul.f32 %v1021, %v3774
      %v3807 = vmul.f32 %v1022, %v3775
      %v3808 = vmul.f32 %v1023, %v3776
      %v3809 = vmul.f32 %v1020, %v3777
      %v3810 = vmul.f32 %v1021, %v3778
      %v3811 = vmul.f32 %v1022, %v3779
      %v3812 = vmul.f32 %v1023, %v3780
      %v3813 = vmul.f32 %v1020, %v3781
      %v3814 = vmul.f32 %v1021, %v3782
      %v3815 = vmul.f32 %v1022, %v3783
      %v3816 = vmul.f32 %v1023, %v3784
      %v3817 = vmul.f32 %v1020, %v3785
      %v3818 = vmul.f32 %v1021, %v3786
      %v3819 = vmul.f32 %v1022, %v3787
      %v3820 = vmul.f32 %v1023, %v3788
      %v3821 = vmul.f32 %v1020, %v3789
      %v3822 = vmul.f32 %v1021, %v3790
      %v3823 = vmul.f32 %v1022, %v3791
      %v3824 = vmul.f32 %v1023, %v3792
      %v3825 = vpack.c.bf16 %v3794, %v3793
      %v3826 = vpack.c.bf16 %v3796, %v3795
      %v3827 = vpack.c.bf16 %v3798, %v3797
      %v3828 = vpack.c.bf16 %v3800, %v3799
      %v3829 = vpack.c.bf16 %v3802, %v3801
      %v3830 = vpack.c.bf16 %v3804, %v3803
      %v3831 = vpack.c.bf16 %v3806, %v3805
      %v3832 = vpack.c.bf16 %v3808, %v3807
      %v3833 = vpack.c.bf16 %v3810, %v3809
      %v3834 = vpack.c.bf16 %v3812, %v3811
      %v3835 = vpack.c.bf16 %v3814, %v3813
      %v3836 = vpack.c.bf16 %v3816, %v3815
      %v3837 = vpack.c.bf16 %v3818, %v3817
      %v3838 = vpack.c.bf16 %v3820, %v3819
      %v3839 = vpack.c.bf16 %v3822, %v3821
      %v3840 = vpack.c.bf16 %v3824, %v3823
      %v3857 = vunpack.c.l.b16 %v3677
      %v3858 = vunpack.c.h.b16 %v3677
      %v3859 = vunpack.c.l.b16 %v3678
      %v3860 = vunpack.c.h.b16 %v3678
      %v3861 = vunpack.c.l.b16 %v3679
      %v3862 = vunpack.c.h.b16 %v3679
      %v3863 = vunpack.c.l.b16 %v3680
      %v3864 = vunpack.c.h.b16 %v3680
      %v3865 = vunpack.c.l.b16 %v3681
      %v3866 = vunpack.c.h.b16 %v3681
      %v3867 = vunpack.c.l.b16 %v3682
      %v3868 = vunpack.c.h.b16 %v3682
      %v3869 = vunpack.c.l.b16 %v3683
      %v3870 = vunpack.c.h.b16 %v3683
      %v3871 = vunpack.c.l.b16 %v3684
      %v3872 = vunpack.c.h.b16 %v3684
      %v3873 = vunpack.c.l.b16 %v3685
      %v3874 = vunpack.c.h.b16 %v3685
      %v3875 = vunpack.c.l.b16 %v3686
      %v3876 = vunpack.c.h.b16 %v3686
      %v3877 = vunpack.c.l.b16 %v3687
      %v3878 = vunpack.c.h.b16 %v3687
      %v3879 = vunpack.c.l.b16 %v3688
      %v3880 = vunpack.c.h.b16 %v3688
      %v3881 = vunpack.c.l.b16 %v3689
      %v3882 = vunpack.c.h.b16 %v3689
      %v3883 = vunpack.c.l.b16 %v3690
      %v3884 = vunpack.c.h.b16 %v3690
      %v3885 = vunpack.c.l.b16 %v3691
      %v3886 = vunpack.c.h.b16 %v3691
      %v3887 = vunpack.c.l.b16 %v3692
      %v3888 = vunpack.c.h.b16 %v3692
      %v3889 = vpack.c.b16 %v3861, %v3857
      %v3890 = vpack.c.b16 %v3862, %v3858
      %v3891 = vpack.c.b16 %v3863, %v3859
      %v3892 = vpack.c.b16 %v3864, %v3860
      %v3893 = vpack.c.b16 %v3869, %v3865
      %v3894 = vpack.c.b16 %v3870, %v3866
      %v3895 = vpack.c.b16 %v3871, %v3867
      %v3896 = vpack.c.b16 %v3872, %v3868
      %v3897 = vpack.c.b16 %v3877, %v3873
      %v3898 = vpack.c.b16 %v3878, %v3874
      %v3899 = vpack.c.b16 %v3879, %v3875
      %v3900 = vpack.c.b16 %v3880, %v3876
      %v3901 = vpack.c.b16 %v3885, %v3881
      %v3902 = vpack.c.b16 %v3886, %v3882
      %v3903 = vpack.c.b16 %v3887, %v3883
      %v3904 = vpack.c.b16 %v3888, %v3884
      %v3953 = vunpack.c.l.b16 %v3825
      %v3954 = vunpack.c.h.b16 %v3825
      %v3955 = vunpack.c.l.b16 %v3826
      %v3956 = vunpack.c.h.b16 %v3826
      %v3957 = vunpack.c.l.b16 %v3827
      %v3958 = vunpack.c.h.b16 %v3827
      %v3959 = vunpack.c.l.b16 %v3828
      %v3960 = vunpack.c.h.b16 %v3828
      %v3961 = vunpack.c.l.b16 %v3829
      %v3962 = vunpack.c.h.b16 %v3829
      %v3963 = vunpack.c.l.b16 %v3830
      %v3964 = vunpack.c.h.b16 %v3830
      %v3965 = vunpack.c.l.b16 %v3831
      %v3966 = vunpack.c.h.b16 %v3831
      %v3967 = vunpack.c.l.b16 %v3832
      %v3968 = vunpack.c.h.b16 %v3832
      %v3969 = vunpack.c.l.b16 %v3833
      %v3970 = vunpack.c.h.b16 %v3833
      %v3971 = vunpack.c.l.b16 %v3834
      %v3972 = vunpack.c.h.b16 %v3834
      %v3973 = vunpack.c.l.b16 %v3835
      %v3974 = vunpack.c.h.b16 %v3835
      %v3975 = vunpack.c.l.b16 %v3836
      %v3976 = vunpack.c.h.b16 %v3836
      %v3977 = vunpack.c.l.b16 %v3837
      %v3978 = vunpack.c.h.b16 %v3837
      %v3979 = vunpack.c.l.b16 %v3838
      %v3980 = vunpack.c.h.b16 %v3838
      %v3981 = vunpack.c.l.b16 %v3839
      %v3982 = vunpack.c.h.b16 %v3839
      %v3983 = vunpack.c.l.b16 %v3840
      %v3984 = vunpack.c.h.b16 %v3840
      %v3985 = vpack.c.b16 %v3957, %v3953
      %v3986 = vpack.c.b16 %v3958, %v3954
      %v3987 = vpack.c.b16 %v3959, %v3955
      %v3988 = vpack.c.b16 %v3960, %v3956
      %v3989 = vpack.c.b16 %v3965, %v3961
      %v3990 = vpack.c.b16 %v3966, %v3962
      %v3991 = vpack.c.b16 %v3967, %v3963
      %v3992 = vpack.c.b16 %v3968, %v3964
      %v3993 = vpack.c.b16 %v3973, %v3969
      %v3994 = vpack.c.b16 %v3974, %v3970
      %v3995 = vpack.c.b16 %v3975, %v3971
      %v3996 = vpack.c.b16 %v3976, %v3972
      %v3997 = vpack.c.b16 %v3981, %v3977
      %v3998 = vpack.c.b16 %v3982, %v3978
      %v3999 = vpack.c.b16 %v3983, %v3979
      %v4000 = vpack.c.b16 %v3984, %v3980
      %4017 = vrot.lane.b32.xlu0 %v3889, 16
      %v4018 = vpop.permute.xlu0 %4017
      %4019 = vrot.lane.b32.xlu0 %v3890, 16
      %v4020 = vpop.permute.xlu0 %4019
      %4021 = vrot.lane.b32.xlu0 %v3891, 16
      %v4022 = vpop.permute.xlu0 %4021
      %4023 = vrot.lane.b32.xlu0 %v3892, 16
      %v4024 = vpop.permute.xlu0 %4023
      %4025 = vrot.lane.b32.xlu0 %v3893, 16
      %v4026 = vpop.permute.xlu0 %4025
      %4027 = vrot.lane.b32.xlu0 %v3894, 16
      %v4028 = vpop.permute.xlu0 %4027
      %4029 = vrot.lane.b32.xlu0 %v3895, 16
      %v4030 = vpop.permute.xlu0 %4029
      %4031 = vrot.lane.b32.xlu0 %v3896, 16
      %v4032 = vpop.permute.xlu0 %4031
      %4033 = vrot.lane.b32.xlu0 %v3897, 16
      %v4034 = vpop.permute.xlu0 %4033
      %4035 = vrot.lane.b32.xlu0 %v3898, 16
      %v4036 = vpop.permute.xlu0 %4035
      %4037 = vrot.lane.b32.xlu0 %v3899, 16
      %v4038 = vpop.permute.xlu0 %4037
      %4039 = vrot.lane.b32.xlu0 %v3900, 16
      %v4040 = vpop.permute.xlu0 %4039
      %4041 = vrot.lane.b32.xlu0 %v3901, 16
      %v4042 = vpop.permute.xlu0 %4041
      %4043 = vrot.lane.b32.xlu0 %v3902, 16
      %v4044 = vpop.permute.xlu0 %4043
      %4045 = vrot.lane.b32.xlu0 %v3903, 16
      %v4046 = vpop.permute.xlu0 %4045
      %4047 = vrot.lane.b32.xlu0 %v3904, 16
      %v4048 = vpop.permute.xlu0 %4047
      %4049 = vrot.lane.b32.xlu0 %v3529, 16
      %v4050 = vpop.permute.xlu0 %4049
      %4051 = vrot.lane.b32.xlu0 %v3530, 16
      %v4052 = vpop.permute.xlu0 %4051
      %4053 = vrot.lane.b32.xlu0 %v3531, 16
      %v4054 = vpop.permute.xlu0 %4053
      %4055 = vrot.lane.b32.xlu0 %v3532, 16
      %v4056 = vpop.permute.xlu0 %4055
      %4057 = vrot.lane.b32.xlu0 %v3533, 16
      %v4058 = vpop.permute.xlu0 %4057
      %4059 = vrot.lane.b32.xlu0 %v3534, 16
      %v4060 = vpop.permute.xlu0 %4059
      %4061 = vrot.lane.b32.xlu0 %v3535, 16
      %v4062 = vpop.permute.xlu0 %4061
      %4063 = vrot.lane.b32.xlu0 %v3536, 16
      %v4064 = vpop.permute.xlu0 %4063
      %4065 = vrot.lane.b32.xlu0 %v3537, 16
      %v4066 = vpop.permute.xlu0 %4065
      %4067 = vrot.lane.b32.xlu0 %v3538, 16
      %v4068 = vpop.permute.xlu0 %4067
      %4069 = vrot.lane.b32.xlu0 %v3539, 16
      %v4070 = vpop.permute.xlu0 %4069
      %4071 = vrot.lane.b32.xlu0 %v3540, 16
      %v4072 = vpop.permute.xlu0 %4071
      %4073 = vrot.lane.b32.xlu0 %v3541, 16
      %v4074 = vpop.permute.xlu0 %4073
      %4075 = vrot.lane.b32.xlu0 %v3542, 16
      %v4076 = vpop.permute.xlu0 %4075
      %4077 = vrot.lane.b32.xlu0 %v3543, 16
      %v4078 = vpop.permute.xlu0 %4077
      %4079 = vrot.lane.b32.xlu0 %v3544, 16
      %v4080 = vpop.permute.xlu0 %4079
      %4081 = vrot.lane.b32.xlu0 %v3985, 16
      %v4082 = vpop.permute.xlu0 %4081
      %4083 = vrot.lane.b32.xlu0 %v3986, 16
      %v4084 = vpop.permute.xlu0 %4083
      %4085 = vrot.lane.b32.xlu0 %v3987, 16
      %v4086 = vpop.permute.xlu0 %4085
      %4087 = vrot.lane.b32.xlu0 %v3988, 16
      %v4088 = vpop.permute.xlu0 %4087
      %4089 = vrot.lane.b32.xlu0 %v3989, 16
      %v4090 = vpop.permute.xlu0 %4089
      %4091 = vrot.lane.b32.xlu0 %v3990, 16
      %v4092 = vpop.permute.xlu0 %4091
      %4093 = vrot.lane.b32.xlu0 %v3991, 16
      %v4094 = vpop.permute.xlu0 %4093
      %4095 = vrot.lane.b32.xlu0 %v3992, 16
      %v4096 = vpop.permute.xlu0 %4095
      %4097 = vrot.lane.b32.xlu0 %v3993, 16
      %v4098 = vpop.permute.xlu0 %4097
      %4099 = vrot.lane.b32.xlu0 %v3994, 16
      %v4100 = vpop.permute.xlu0 %4099
      %4101 = vrot.lane.b32.xlu0 %v3995, 16
      %v4102 = vpop.permute.xlu0 %4101
      %4103 = vrot.lane.b32.xlu0 %v3996, 16
      %v4104 = vpop.permute.xlu0 %4103
      %4105 = vrot.lane.b32.xlu0 %v3997, 16
      %v4106 = vpop.permute.xlu0 %4105
      %4107 = vrot.lane.b32.xlu0 %v3998, 16
      %v4108 = vpop.permute.xlu0 %4107
      %4109 = vrot.lane.b32.xlu0 %v3999, 16
      %v4110 = vpop.permute.xlu0 %4109
      %4111 = vrot.lane.b32.xlu0 %v4000, 16
      %v4112 = vpop.permute.xlu0 %4111
      %v4113 = vsel %vm1376, %v4018, %v4020
      %v4114 = vsel %vm1376, %v4020, %v4022
      %v4115 = vsel %vm1376, %v4022, %v4024
      %v4116 = vsel %vm1376, %v4026, %v4028
      %v4117 = vsel %vm1376, %v4028, %v4030
      %v4118 = vsel %vm1376, %v4030, %v4032
      %v4119 = vsel %vm1376, %v4034, %v4036
      %v4120 = vsel %vm1376, %v4036, %v4038
      %v4121 = vsel %vm1376, %v4038, %v4040
      %v4122 = vsel %vm1376, %v4042, %v4044
      %v4123 = vsel %vm1376, %v4044, %v4046
      %v4124 = vsel %vm1376, %v4046, %v4048
      %v4125 = vsel %vm1376, %v4050, %v4052
      %v4126 = vsel %vm1376, %v4052, %v4054
      %v4127 = vsel %vm1376, %v4054, %v4056
      %v4128 = vsel %vm1376, %v4058, %v4060
      %v4129 = vsel %vm1376, %v4060, %v4062
      %v4130 = vsel %vm1376, %v4062, %v4064
      %v4131 = vsel %vm1376, %v4066, %v4068
      %v4132 = vsel %vm1376, %v4068, %v4070
      %v4133 = vsel %vm1376, %v4070, %v4072
      %v4134 = vsel %vm1376, %v4074, %v4076
      %v4135 = vsel %vm1376, %v4076, %v4078
      %v4136 = vsel %vm1376, %v4078, %v4080
      %v4137 = vsel %vm1376, %v4082, %v4084
      %v4138 = vsel %vm1376, %v4084, %v4086
      %v4139 = vsel %vm1376, %v4086, %v4088
      %v4140 = vsel %vm1376, %v4090, %v4092
      %v4141 = vsel %vm1376, %v4092, %v4094
      %v4142 = vsel %vm1376, %v4094, %v4096
      %v4143 = vsel %vm1376, %v4098, %v4100
      %v4144 = vsel %vm1376, %v4100, %v4102
      %v4145 = vsel %vm1376, %v4102, %v4104
      %v4146 = vsel %vm1376, %v4106, %v4108
      %v4147 = vsel %vm1376, %v4108, %v4110
      %v4148 = vsel %vm1376, %v4110, %v4112
      %v4186 = vsel %vm1449, 0, %v4018
      %v4189 = vsel %vm1449, 0, %v4026
      %v4192 = vsel %vm1449, 0, %v4034
      %v4195 = vsel %vm1449, 0, %v4042
      %v4198 = vsel %vm1449, 0, %v4050
      %v4201 = vsel %vm1449, 0, %v4058
      %v4204 = vsel %vm1449, 0, %v4066
      %v4207 = vsel %vm1449, 0, %v4074
      %v4210 = vsel %vm1449, 0, %v4082
      %v4213 = vsel %vm1449, 0, %v4090
      %v4216 = vsel %vm1449, 0, %v4098
      %v4219 = vsel %vm1449, 0, %v4106
      %v4221 = vunpack.c.l.bf16 %v4186
      %v4222 = vunpack.c.l.bf16 %v4113
      %v4223 = vunpack.c.l.bf16 %v4114
      %v4224 = vunpack.c.l.bf16 %v4115
      %v4225 = vunpack.c.h.bf16 %v4186
      %v4226 = vunpack.c.h.bf16 %v4113
      %v4227 = vunpack.c.h.bf16 %v4114
      %v4228 = vunpack.c.h.bf16 %v4115
      %v4229 = vunpack.c.l.bf16 %v4189
      %v4230 = vunpack.c.l.bf16 %v4116
      %v4231 = vunpack.c.l.bf16 %v4117
      %v4232 = vunpack.c.l.bf16 %v4118
      %v4233 = vunpack.c.h.bf16 %v4189
      %v4234 = vunpack.c.h.bf16 %v4116
      %v4235 = vunpack.c.h.bf16 %v4117
      %v4236 = vunpack.c.h.bf16 %v4118
      %v4237 = vunpack.c.l.bf16 %v4192
      %v4238 = vunpack.c.l.bf16 %v4119
      %v4239 = vunpack.c.l.bf16 %v4120
      %v4240 = vunpack.c.l.bf16 %v4121
      %v4241 = vunpack.c.h.bf16 %v4192
      %v4242 = vunpack.c.h.bf16 %v4119
      %v4243 = vunpack.c.h.bf16 %v4120
      %v4244 = vunpack.c.h.bf16 %v4121
      %v4245 = vunpack.c.l.bf16 %v4195
      %v4246 = vunpack.c.l.bf16 %v4122
      %v4247 = vunpack.c.l.bf16 %v4123
      %v4248 = vunpack.c.l.bf16 %v4124
      %v4249 = vunpack.c.h.bf16 %v4195
      %v4250 = vunpack.c.h.bf16 %v4122
      %v4251 = vunpack.c.h.bf16 %v4123
      %v4252 = vunpack.c.h.bf16 %v4124
      %v4253 = vunpack.c.l.bf16 %v4198
      %v4254 = vunpack.c.l.bf16 %v4125
      %v4255 = vunpack.c.l.bf16 %v4126
      %v4256 = vunpack.c.l.bf16 %v4127
      %v4257 = vunpack.c.h.bf16 %v4198
      %v4258 = vunpack.c.h.bf16 %v4125
      %v4259 = vunpack.c.h.bf16 %v4126
      %v4260 = vunpack.c.h.bf16 %v4127
      %v4261 = vunpack.c.l.bf16 %v4201
      %v4262 = vunpack.c.l.bf16 %v4128
      %v4263 = vunpack.c.l.bf16 %v4129
      %v4264 = vunpack.c.l.bf16 %v4130
      %v4265 = vunpack.c.h.bf16 %v4201
      %v4266 = vunpack.c.h.bf16 %v4128
      %v4267 = vunpack.c.h.bf16 %v4129
      %v4268 = vunpack.c.h.bf16 %v4130
      %v4269 = vunpack.c.l.bf16 %v4204
      %v4270 = vunpack.c.l.bf16 %v4131
      %v4271 = vunpack.c.l.bf16 %v4132
      %v4272 = vunpack.c.l.bf16 %v4133
      %v4273 = vunpack.c.h.bf16 %v4204
      %v4274 = vunpack.c.h.bf16 %v4131
      %v4275 = vunpack.c.h.bf16 %v4132
      %v4276 = vunpack.c.h.bf16 %v4133
      %v4277 = vunpack.c.l.bf16 %v4207
      %v4278 = vunpack.c.l.bf16 %v4134
      %v4279 = vunpack.c.l.bf16 %v4135
      %v4280 = vunpack.c.l.bf16 %v4136
      %v4281 = vunpack.c.h.bf16 %v4207
      %v4282 = vunpack.c.h.bf16 %v4134
      %v4283 = vunpack.c.h.bf16 %v4135
      %v4284 = vunpack.c.h.bf16 %v4136
      %v4285 = vunpack.c.l.bf16 %v4210
      %v4286 = vunpack.c.l.bf16 %v4137
      %v4287 = vunpack.c.l.bf16 %v4138
      %v4288 = vunpack.c.l.bf16 %v4139
      %v4289 = vunpack.c.h.bf16 %v4210
      %v4290 = vunpack.c.h.bf16 %v4137
      %v4291 = vunpack.c.h.bf16 %v4138
      %v4292 = vunpack.c.h.bf16 %v4139
      %v4293 = vunpack.c.l.bf16 %v4213
      %v4294 = vunpack.c.l.bf16 %v4140
      %v4295 = vunpack.c.l.bf16 %v4141
      %v4296 = vunpack.c.l.bf16 %v4142
      %v4297 = vunpack.c.h.bf16 %v4213
      %v4298 = vunpack.c.h.bf16 %v4140
      %v4299 = vunpack.c.h.bf16 %v4141
      %v4300 = vunpack.c.h.bf16 %v4142
      %v4301 = vunpack.c.l.bf16 %v4216
      %v4302 = vunpack.c.l.bf16 %v4143
      %v4303 = vunpack.c.l.bf16 %v4144
      %v4304 = vunpack.c.l.bf16 %v4145
      %v4305 = vunpack.c.h.bf16 %v4216
      %v4306 = vunpack.c.h.bf16 %v4143
      %v4307 = vunpack.c.h.bf16 %v4144
      %v4308 = vunpack.c.h.bf16 %v4145
      %v4309 = vunpack.c.l.bf16 %v4219
      %v4310 = vunpack.c.l.bf16 %v4146
      %v4311 = vunpack.c.l.bf16 %v4147
      %v4312 = vunpack.c.l.bf16 %v4148
      %v4313 = vunpack.c.h.bf16 %v4219
      %v4314 = vunpack.c.h.bf16 %v4146
      %v4315 = vunpack.c.h.bf16 %v4147
      %v4316 = vunpack.c.h.bf16 %v4148
      %v4317 = vmul.f32 %v1490, %v4221
      %v4318 = vmul.f32 %v1491, %v4222
      %v4319 = vmul.f32 %v1492, %v4223
      %v4320 = vmul.f32 %v1493, %v4224
      %v4321 = vmul.f32 %v1490, %v4225
      %v4322 = vmul.f32 %v1491, %v4226
      %v4323 = vmul.f32 %v1492, %v4227
      %v4324 = vmul.f32 %v1493, %v4228
      %v4325 = vmul.f32 %v1490, %v4229
      %v4326 = vmul.f32 %v1491, %v4230
      %v4327 = vmul.f32 %v1492, %v4231
      %v4328 = vmul.f32 %v1493, %v4232
      %v4329 = vmul.f32 %v1490, %v4233
      %v4330 = vmul.f32 %v1491, %v4234
      %v4331 = vmul.f32 %v1492, %v4235
      %v4332 = vmul.f32 %v1493, %v4236
      %v4333 = vmul.f32 %v1490, %v4237
      %v4334 = vmul.f32 %v1491, %v4238
      %v4335 = vmul.f32 %v1492, %v4239
      %v4336 = vmul.f32 %v1493, %v4240
      %v4337 = vmul.f32 %v1490, %v4241
      %v4338 = vmul.f32 %v1491, %v4242
      %v4339 = vmul.f32 %v1492, %v4243
      %v4340 = vmul.f32 %v1493, %v4244
      %v4341 = vmul.f32 %v1490, %v4245
      %v4342 = vmul.f32 %v1491, %v4246
      %v4343 = vmul.f32 %v1492, %v4247
      %v4344 = vmul.f32 %v1493, %v4248
      %v4345 = vmul.f32 %v1490, %v4249
      %v4346 = vmul.f32 %v1491, %v4250
      %v4347 = vmul.f32 %v1492, %v4251
      %v4348 = vmul.f32 %v1493, %v4252
      %v4349 = vmul.f32 %v1490, %v4253
      %v4350 = vmul.f32 %v1491, %v4254
      %v4351 = vmul.f32 %v1492, %v4255
      %v4352 = vmul.f32 %v1493, %v4256
      %v4353 = vmul.f32 %v1490, %v4257
      %v4354 = vmul.f32 %v1491, %v4258
      %v4355 = vmul.f32 %v1492, %v4259
      %v4356 = vmul.f32 %v1493, %v4260
      %v4357 = vmul.f32 %v1490, %v4261
      %v4358 = vmul.f32 %v1491, %v4262
      %v4359 = vmul.f32 %v1492, %v4263
      %v4360 = vmul.f32 %v1493, %v4264
      %v4361 = vmul.f32 %v1490, %v4265
      %v4362 = vmul.f32 %v1491, %v4266
      %v4363 = vmul.f32 %v1492, %v4267
      %v4364 = vmul.f32 %v1493, %v4268
      %v4365 = vmul.f32 %v1490, %v4269
      %v4366 = vmul.f32 %v1491, %v4270
      %v4367 = vmul.f32 %v1492, %v4271
      %v4368 = vmul.f32 %v1493, %v4272
      %v4369 = vmul.f32 %v1490, %v4273
      %v4370 = vmul.f32 %v1491, %v4274
      %v4371 = vmul.f32 %v1492, %v4275
      %v4372 = vmul.f32 %v1493, %v4276
      %v4373 = vmul.f32 %v1490, %v4277
      %v4374 = vmul.f32 %v1491, %v4278
      %v4375 = vmul.f32 %v1492, %v4279
      %v4376 = vmul.f32 %v1493, %v4280
      %v4377 = vmul.f32 %v1490, %v4281
      %v4378 = vmul.f32 %v1491, %v4282
      %v4379 = vmul.f32 %v1492, %v4283
      %v4380 = vmul.f32 %v1493, %v4284
      %v4381 = vmul.f32 %v1490, %v4285
      %v4382 = vmul.f32 %v1491, %v4286
      %v4383 = vmul.f32 %v1492, %v4287
      %v4384 = vmul.f32 %v1493, %v4288
      %v4385 = vmul.f32 %v1490, %v4289
      %v4386 = vmul.f32 %v1491, %v4290
      %v4387 = vmul.f32 %v1492, %v4291
      %v4388 = vmul.f32 %v1493, %v4292
      %v4389 = vmul.f32 %v1490, %v4293
      %v4390 = vmul.f32 %v1491, %v4294
      %v4391 = vmul.f32 %v1492, %v4295
      %v4392 = vmul.f32 %v1493, %v4296
      %v4393 = vmul.f32 %v1490, %v4297
      %v4394 = vmul.f32 %v1491, %v4298
      %v4395 = vmul.f32 %v1492, %v4299
      %v4396 = vmul.f32 %v1493, %v4300
      %v4397 = vmul.f32 %v1490, %v4301
      %v4398 = vmul.f32 %v1491, %v4302
      %v4399 = vmul.f32 %v1492, %v4303
      %v4400 = vmul.f32 %v1493, %v4304
      %v4401 = vmul.f32 %v1490, %v4305
      %v4402 = vmul.f32 %v1491, %v4306
      %v4403 = vmul.f32 %v1492, %v4307
      %v4404 = vmul.f32 %v1493, %v4308
      %v4405 = vmul.f32 %v1490, %v4309
      %v4406 = vmul.f32 %v1491, %v4310
      %v4407 = vmul.f32 %v1492, %v4311
      %v4408 = vmul.f32 %v1493, %v4312
      %v4409 = vmul.f32 %v1490, %v4313
      %v4410 = vmul.f32 %v1491, %v4314
      %v4411 = vmul.f32 %v1492, %v4315
      %v4412 = vmul.f32 %v1493, %v4316
      %v4413 = vpack.c.bf16 %v4318, %v4317
      %v4414 = vpack.c.bf16 %v4320, %v4319
      %v4415 = vpack.c.bf16 %v4322, %v4321
      %v4416 = vpack.c.bf16 %v4324, %v4323
      %v4417 = vpack.c.bf16 %v4326, %v4325
      %v4418 = vpack.c.bf16 %v4328, %v4327
      %v4419 = vpack.c.bf16 %v4330, %v4329
      %v4420 = vpack.c.bf16 %v4332, %v4331
      %v4421 = vpack.c.bf16 %v4334, %v4333
      %v4422 = vpack.c.bf16 %v4336, %v4335
      %v4423 = vpack.c.bf16 %v4338, %v4337
      %v4424 = vpack.c.bf16 %v4340, %v4339
      %v4425 = vpack.c.bf16 %v4342, %v4341
      %v4426 = vpack.c.bf16 %v4344, %v4343
      %v4427 = vpack.c.bf16 %v4346, %v4345
      %v4428 = vpack.c.bf16 %v4348, %v4347
      %v4429 = vpack.c.bf16 %v4350, %v4349
      %v4430 = vpack.c.bf16 %v4352, %v4351
      %v4431 = vpack.c.bf16 %v4354, %v4353
      %v4432 = vpack.c.bf16 %v4356, %v4355
      %v4433 = vpack.c.bf16 %v4358, %v4357
      %v4434 = vpack.c.bf16 %v4360, %v4359
      %v4435 = vpack.c.bf16 %v4362, %v4361
      %v4436 = vpack.c.bf16 %v4364, %v4363
      %v4437 = vpack.c.bf16 %v4366, %v4365
      %v4438 = vpack.c.bf16 %v4368, %v4367
      %v4439 = vpack.c.bf16 %v4370, %v4369
      %v4440 = vpack.c.bf16 %v4372, %v4371
      %v4441 = vpack.c.bf16 %v4374, %v4373
      %v4442 = vpack.c.bf16 %v4376, %v4375
      %v4443 = vpack.c.bf16 %v4378, %v4377
      %v4444 = vpack.c.bf16 %v4380, %v4379
      %v4445 = vpack.c.bf16 %v4382, %v4381
      %v4446 = vpack.c.bf16 %v4384, %v4383
      %v4447 = vpack.c.bf16 %v4386, %v4385
      %v4448 = vpack.c.bf16 %v4388, %v4387
      %v4449 = vpack.c.bf16 %v4390, %v4389
      %v4450 = vpack.c.bf16 %v4392, %v4391
      %v4451 = vpack.c.bf16 %v4394, %v4393
      %v4452 = vpack.c.bf16 %v4396, %v4395
      %v4453 = vpack.c.bf16 %v4398, %v4397
      %v4454 = vpack.c.bf16 %v4400, %v4399
      %v4455 = vpack.c.bf16 %v4402, %v4401
      %v4456 = vpack.c.bf16 %v4404, %v4403
      %v4457 = vpack.c.bf16 %v4406, %v4405
      %v4458 = vpack.c.bf16 %v4408, %v4407
      %v4459 = vpack.c.bf16 %v4410, %v4409
      %v4460 = vpack.c.bf16 %v4412, %v4411
      %4461 = vrot.lane.b32.xlu0 %v3889, 112
      %v4462 = vpop.permute.xlu0 %4461
      %4463 = vrot.lane.b32.xlu0 %v3890, 112
      %v4464 = vpop.permute.xlu0 %4463
      %4465 = vrot.lane.b32.xlu0 %v3891, 112
      %v4466 = vpop.permute.xlu0 %4465
      %4467 = vrot.lane.b32.xlu0 %v3892, 112
      %v4468 = vpop.permute.xlu0 %4467
      %4469 = vrot.lane.b32.xlu0 %v3893, 112
      %v4470 = vpop.permute.xlu0 %4469
      %4471 = vrot.lane.b32.xlu0 %v3894, 112
      %v4472 = vpop.permute.xlu0 %4471
      %4473 = vrot.lane.b32.xlu0 %v3895, 112
      %v4474 = vpop.permute.xlu0 %4473
      %4475 = vrot.lane.b32.xlu0 %v3896, 112
      %v4476 = vpop.permute.xlu0 %4475
      %4477 = vrot.lane.b32.xlu0 %v3897, 112
      %v4478 = vpop.permute.xlu0 %4477
      %4479 = vrot.lane.b32.xlu0 %v3898, 112
      %v4480 = vpop.permute.xlu0 %4479
      %4481 = vrot.lane.b32.xlu0 %v3899, 112
      %v4482 = vpop.permute.xlu0 %4481
      %4483 = vrot.lane.b32.xlu0 %v3900, 112
      %v4484 = vpop.permute.xlu0 %4483
      %4485 = vrot.lane.b32.xlu0 %v3901, 112
      %v4486 = vpop.permute.xlu0 %4485
      %4487 = vrot.lane.b32.xlu0 %v3902, 112
      %v4488 = vpop.permute.xlu0 %4487
      %4489 = vrot.lane.b32.xlu0 %v3903, 112
      %v4490 = vpop.permute.xlu0 %4489
      %4491 = vrot.lane.b32.xlu0 %v3904, 112
      %v4492 = vpop.permute.xlu0 %4491
      %4493 = vrot.lane.b32.xlu0 %v3529, 112
      %v4494 = vpop.permute.xlu0 %4493
      %4495 = vrot.lane.b32.xlu0 %v3530, 112
      %v4496 = vpop.permute.xlu0 %4495
      %4497 = vrot.lane.b32.xlu0 %v3531, 112
      %v4498 = vpop.permute.xlu0 %4497
      %4499 = vrot.lane.b32.xlu0 %v3532, 112
      %v4500 = vpop.permute.xlu0 %4499
      %4501 = vrot.lane.b32.xlu0 %v3533, 112
      %v4502 = vpop.permute.xlu0 %4501
      %4503 = vrot.lane.b32.xlu0 %v3534, 112
      %v4504 = vpop.permute.xlu0 %4503
      %4505 = vrot.lane.b32.xlu0 %v3535, 112
      %v4506 = vpop.permute.xlu0 %4505
      %4507 = vrot.lane.b32.xlu0 %v3536, 112
      %v4508 = vpop.permute.xlu0 %4507
      %4509 = vrot.lane.b32.xlu0 %v3537, 112
      %v4510 = vpop.permute.xlu0 %4509
      %4511 = vrot.lane.b32.xlu0 %v3538, 112
      %v4512 = vpop.permute.xlu0 %4511
      %4513 = vrot.lane.b32.xlu0 %v3539, 112
      %v4514 = vpop.permute.xlu0 %4513
      %4515 = vrot.lane.b32.xlu0 %v3540, 112
      %v4516 = vpop.permute.xlu0 %4515
      %4517 = vrot.lane.b32.xlu0 %v3541, 112
      %v4518 = vpop.permute.xlu0 %4517
      %4519 = vrot.lane.b32.xlu0 %v3542, 112
      %v4520 = vpop.permute.xlu0 %4519
      %4521 = vrot.lane.b32.xlu0 %v3543, 112
      %v4522 = vpop.permute.xlu0 %4521
      %4523 = vrot.lane.b32.xlu0 %v3544, 112
      %v4524 = vpop.permute.xlu0 %4523
      %4525 = vrot.lane.b32.xlu0 %v3985, 112
      %v4526 = vpop.permute.xlu0 %4525
      %4527 = vrot.lane.b32.xlu0 %v3986, 112
      %v4528 = vpop.permute.xlu0 %4527
      %4529 = vrot.lane.b32.xlu0 %v3987, 112
      %v4530 = vpop.permute.xlu0 %4529
      %4531 = vrot.lane.b32.xlu0 %v3988, 112
      %v4532 = vpop.permute.xlu0 %4531
      %4533 = vrot.lane.b32.xlu0 %v3989, 112
      %v4534 = vpop.permute.xlu0 %4533
      %4535 = vrot.lane.b32.xlu0 %v3990, 112
      %v4536 = vpop.permute.xlu0 %4535
      %4537 = vrot.lane.b32.xlu0 %v3991, 112
      %v4538 = vpop.permute.xlu0 %4537
      %4539 = vrot.lane.b32.xlu0 %v3992, 112
      %v4540 = vpop.permute.xlu0 %4539
      %4541 = vrot.lane.b32.xlu0 %v3993, 112
      %v4542 = vpop.permute.xlu0 %4541
      %4543 = vrot.lane.b32.xlu0 %v3994, 112
      %v4544 = vpop.permute.xlu0 %4543
      %4545 = vrot.lane.b32.xlu0 %v3995, 112
      %v4546 = vpop.permute.xlu0 %4545
      %4547 = vrot.lane.b32.xlu0 %v3996, 112
      %v4548 = vpop.permute.xlu0 %4547
      %4549 = vrot.lane.b32.xlu0 %v3997, 112
      %v4550 = vpop.permute.xlu0 %4549
      %4551 = vrot.lane.b32.xlu0 %v3998, 112
      %v4552 = vpop.permute.xlu0 %4551
      %4553 = vrot.lane.b32.xlu0 %v3999, 112
      %v4554 = vpop.permute.xlu0 %4553
      %4555 = vrot.lane.b32.xlu0 %v4000, 112
      %v4556 = vpop.permute.xlu0 %4555
      %v4557 = vsel %vm1830, %v4462, %v4464
      %v4558 = vsel %vm1830, %v4464, %v4466
      %v4559 = vsel %vm1830, %v4466, %v4468
      %v4560 = vsel %vm1830, %v4470, %v4472
      %v4561 = vsel %vm1830, %v4472, %v4474
      %v4562 = vsel %vm1830, %v4474, %v4476
      %v4563 = vsel %vm1830, %v4478, %v4480
      %v4564 = vsel %vm1830, %v4480, %v4482
      %v4565 = vsel %vm1830, %v4482, %v4484
      %v4566 = vsel %vm1830, %v4486, %v4488
      %v4567 = vsel %vm1830, %v4488, %v4490
      %v4568 = vsel %vm1830, %v4490, %v4492
      %v4569 = vsel %vm1830, %v4494, %v4496
      %v4570 = vsel %vm1830, %v4496, %v4498
      %v4571 = vsel %vm1830, %v4498, %v4500
      %v4572 = vsel %vm1830, %v4502, %v4504
      %v4573 = vsel %vm1830, %v4504, %v4506
      %v4574 = vsel %vm1830, %v4506, %v4508
      %v4575 = vsel %vm1830, %v4510, %v4512
      %v4576 = vsel %vm1830, %v4512, %v4514
      %v4577 = vsel %vm1830, %v4514, %v4516
      %v4578 = vsel %vm1830, %v4518, %v4520
      %v4579 = vsel %vm1830, %v4520, %v4522
      %v4580 = vsel %vm1830, %v4522, %v4524
      %v4581 = vsel %vm1830, %v4526, %v4528
      %v4582 = vsel %vm1830, %v4528, %v4530
      %v4583 = vsel %vm1830, %v4530, %v4532
      %v4584 = vsel %vm1830, %v4534, %v4536
      %v4585 = vsel %vm1830, %v4536, %v4538
      %v4586 = vsel %vm1830, %v4538, %v4540
      %v4587 = vsel %vm1830, %v4542, %v4544
      %v4588 = vsel %vm1830, %v4544, %v4546
      %v4589 = vsel %vm1830, %v4546, %v4548
      %v4590 = vsel %vm1830, %v4550, %v4552
      %v4591 = vsel %vm1830, %v4552, %v4554
      %v4592 = vsel %vm1830, %v4554, %v4556
      %v4630 = vsel %vm1903, %v4468, 0
      %v4633 = vsel %vm1903, %v4476, 0
      %v4636 = vsel %vm1903, %v4484, 0
      %v4639 = vsel %vm1903, %v4492, 0
      %v4642 = vsel %vm1903, %v4500, 0
      %v4645 = vsel %vm1903, %v4508, 0
      %v4648 = vsel %vm1903, %v4516, 0
      %v4651 = vsel %vm1903, %v4524, 0
      %v4654 = vsel %vm1903, %v4532, 0
      %v4657 = vsel %vm1903, %v4540, 0
      %v4660 = vsel %vm1903, %v4548, 0
      %v4663 = vsel %vm1903, %v4556, 0
      %v4665 = vunpack.c.l.bf16 %v4557
      %v4666 = vunpack.c.l.bf16 %v4558
      %v4667 = vunpack.c.l.bf16 %v4559
      %v4668 = vunpack.c.l.bf16 %v4630
      %v4669 = vunpack.c.h.bf16 %v4557
      %v4670 = vunpack.c.h.bf16 %v4558
      %v4671 = vunpack.c.h.bf16 %v4559
      %v4672 = vunpack.c.h.bf16 %v4630
      %v4673 = vunpack.c.l.bf16 %v4560
      %v4674 = vunpack.c.l.bf16 %v4561
      %v4675 = vunpack.c.l.bf16 %v4562
      %v4676 = vunpack.c.l.bf16 %v4633
      %v4677 = vunpack.c.h.bf16 %v4560
      %v4678 = vunpack.c.h.bf16 %v4561
      %v4679 = vunpack.c.h.bf16 %v4562
      %v4680 = vunpack.c.h.bf16 %v4633
      %v4681 = vunpack.c.l.bf16 %v4563
      %v4682 = vunpack.c.l.bf16 %v4564
      %v4683 = vunpack.c.l.bf16 %v4565
      %v4684 = vunpack.c.l.bf16 %v4636
      %v4685 = vunpack.c.h.bf16 %v4563
      %v4686 = vunpack.c.h.bf16 %v4564
      %v4687 = vunpack.c.h.bf16 %v4565
      %v4688 = vunpack.c.h.bf16 %v4636
      %v4689 = vunpack.c.l.bf16 %v4566
      %v4690 = vunpack.c.l.bf16 %v4567
      %v4691 = vunpack.c.l.bf16 %v4568
      %v4692 = vunpack.c.l.bf16 %v4639
      %v4693 = vunpack.c.h.bf16 %v4566
      %v4694 = vunpack.c.h.bf16 %v4567
      %v4695 = vunpack.c.h.bf16 %v4568
      %v4696 = vunpack.c.h.bf16 %v4639
      %v4697 = vunpack.c.l.bf16 %v4569
      %v4698 = vunpack.c.l.bf16 %v4570
      %v4699 = vunpack.c.l.bf16 %v4571
      %v4700 = vunpack.c.l.bf16 %v4642
      %v4701 = vunpack.c.h.bf16 %v4569
      %v4702 = vunpack.c.h.bf16 %v4570
      %v4703 = vunpack.c.h.bf16 %v4571
      %v4704 = vunpack.c.h.bf16 %v4642
      %v4705 = vunpack.c.l.bf16 %v4572
      %v4706 = vunpack.c.l.bf16 %v4573
      %v4707 = vunpack.c.l.bf16 %v4574
      %v4708 = vunpack.c.l.bf16 %v4645
      %v4709 = vunpack.c.h.bf16 %v4572
      %v4710 = vunpack.c.h.bf16 %v4573
      %v4711 = vunpack.c.h.bf16 %v4574
      %v4712 = vunpack.c.h.bf16 %v4645
      %v4713 = vunpack.c.l.bf16 %v4575
      %v4714 = vunpack.c.l.bf16 %v4576
      %v4715 = vunpack.c.l.bf16 %v4577
      %v4716 = vunpack.c.l.bf16 %v4648
      %v4717 = vunpack.c.h.bf16 %v4575
      %v4718 = vunpack.c.h.bf16 %v4576
      %v4719 = vunpack.c.h.bf16 %v4577
      %v4720 = vunpack.c.h.bf16 %v4648
      %v4721 = vunpack.c.l.bf16 %v4578
      %v4722 = vunpack.c.l.bf16 %v4579
      %v4723 = vunpack.c.l.bf16 %v4580
      %v4724 = vunpack.c.l.bf16 %v4651
      %v4725 = vunpack.c.h.bf16 %v4578
      %v4726 = vunpack.c.h.bf16 %v4579
      %v4727 = vunpack.c.h.bf16 %v4580
      %v4728 = vunpack.c.h.bf16 %v4651
      %v4729 = vunpack.c.l.bf16 %v4581
      %v4730 = vunpack.c.l.bf16 %v4582
      %v4731 = vunpack.c.l.bf16 %v4583
      %v4732 = vunpack.c.l.bf16 %v4654
      %v4733 = vunpack.c.h.bf16 %v4581
      %v4734 = vunpack.c.h.bf16 %v4582
      %v4735 = vunpack.c.h.bf16 %v4583
      %v4736 = vunpack.c.h.bf16 %v4654
      %v4737 = vunpack.c.l.bf16 %v4584
      %v4738 = vunpack.c.l.bf16 %v4585
      %v4739 = vunpack.c.l.bf16 %v4586
      %v4740 = vunpack.c.l.bf16 %v4657
      %v4741 = vunpack.c.h.bf16 %v4584
      %v4742 = vunpack.c.h.bf16 %v4585
      %v4743 = vunpack.c.h.bf16 %v4586
      %v4744 = vunpack.c.h.bf16 %v4657
      %v4745 = vunpack.c.l.bf16 %v4587
      %v4746 = vunpack.c.l.bf16 %v4588
      %v4747 = vunpack.c.l.bf16 %v4589
      %v4748 = vunpack.c.l.bf16 %v4660
      %v4749 = vunpack.c.h.bf16 %v4587
      %v4750 = vunpack.c.h.bf16 %v4588
      %v4751 = vunpack.c.h.bf16 %v4589
      %v4752 = vunpack.c.h.bf16 %v4660
      %v4753 = vunpack.c.l.bf16 %v4590
      %v4754 = vunpack.c.l.bf16 %v4591
      %v4755 = vunpack.c.l.bf16 %v4592
      %v4756 = vunpack.c.l.bf16 %v4663
      %v4757 = vunpack.c.h.bf16 %v4590
      %v4758 = vunpack.c.h.bf16 %v4591
      %v4759 = vunpack.c.h.bf16 %v4592
      %v4760 = vunpack.c.h.bf16 %v4663
      %v4761 = vmul.f32 %v1944, %v4665
      %v4762 = vmul.f32 %v1945, %v4666
      %v4763 = vmul.f32 %v1946, %v4667
      %v4764 = vmul.f32 %v1947, %v4668
      %v4765 = vmul.f32 %v1944, %v4669
      %v4766 = vmul.f32 %v1945, %v4670
      %v4767 = vmul.f32 %v1946, %v4671
      %v4768 = vmul.f32 %v1947, %v4672
      %v4769 = vmul.f32 %v1944, %v4673
      %v4770 = vmul.f32 %v1945, %v4674
      %v4771 = vmul.f32 %v1946, %v4675
      %v4772 = vmul.f32 %v1947, %v4676
      %v4773 = vmul.f32 %v1944, %v4677
      %v4774 = vmul.f32 %v1945, %v4678
      %v4775 = vmul.f32 %v1946, %v4679
      %v4776 = vmul.f32 %v1947, %v4680
      %v4777 = vmul.f32 %v1944, %v4681
      %v4778 = vmul.f32 %v1945, %v4682
      %v4779 = vmul.f32 %v1946, %v4683
      %v4780 = vmul.f32 %v1947, %v4684
      %v4781 = vmul.f32 %v1944, %v4685
      %v4782 = vmul.f32 %v1945, %v4686
      %v4783 = vmul.f32 %v1946, %v4687
      %v4784 = vmul.f32 %v1947, %v4688
      %v4785 = vmul.f32 %v1944, %v4689
      %v4786 = vmul.f32 %v1945, %v4690
      %v4787 = vmul.f32 %v1946, %v4691
      %v4788 = vmul.f32 %v1947, %v4692
      %v4789 = vmul.f32 %v1944, %v4693
      %v4790 = vmul.f32 %v1945, %v4694
      %v4791 = vmul.f32 %v1946, %v4695
      %v4792 = vmul.f32 %v1947, %v4696
      %v4793 = vmul.f32 %v1944, %v4697
      %v4794 = vmul.f32 %v1945, %v4698
      %v4795 = vmul.f32 %v1946, %v4699
      %v4796 = vmul.f32 %v1947, %v4700
      %v4797 = vmul.f32 %v1944, %v4701
      %v4798 = vmul.f32 %v1945, %v4702
      %v4799 = vmul.f32 %v1946, %v4703
      %v4800 = vmul.f32 %v1947, %v4704
      %v4801 = vmul.f32 %v1944, %v4705
      %v4802 = vmul.f32 %v1945, %v4706
      %v4803 = vmul.f32 %v1946, %v4707
      %v4804 = vmul.f32 %v1947, %v4708
      %v4805 = vmul.f32 %v1944, %v4709
      %v4806 = vmul.f32 %v1945, %v4710
      %v4807 = vmul.f32 %v1946, %v4711
      %v4808 = vmul.f32 %v1947, %v4712
      %v4809 = vmul.f32 %v1944, %v4713
      %v4810 = vmul.f32 %v1945, %v4714
      %v4811 = vmul.f32 %v1946, %v4715
      %v4812 = vmul.f32 %v1947, %v4716
      %v4813 = vmul.f32 %v1944, %v4717
      %v4814 = vmul.f32 %v1945, %v4718
      %v4815 = vmul.f32 %v1946, %v4719
      %v4816 = vmul.f32 %v1947, %v4720
      %v4817 = vmul.f32 %v1944, %v4721
      %v4818 = vmul.f32 %v1945, %v4722
      %v4819 = vmul.f32 %v1946, %v4723
      %v4820 = vmul.f32 %v1947, %v4724
      %v4821 = vmul.f32 %v1944, %v4725
      %v4822 = vmul.f32 %v1945, %v4726
      %v4823 = vmul.f32 %v1946, %v4727
      %v4824 = vmul.f32 %v1947, %v4728
      %v4825 = vmul.f32 %v1944, %v4729
      %v4826 = vmul.f32 %v1945, %v4730
      %v4827 = vmul.f32 %v1946, %v4731
      %v4828 = vmul.f32 %v1947, %v4732
      %v4829 = vmul.f32 %v1944, %v4733
      %v4830 = vmul.f32 %v1945, %v4734
      %v4831 = vmul.f32 %v1946, %v4735
      %v4832 = vmul.f32 %v1947, %v4736
      %v4833 = vmul.f32 %v1944, %v4737
      %v4834 = vmul.f32 %v1945, %v4738
      %v4835 = vmul.f32 %v1946, %v4739
      %v4836 = vmul.f32 %v1947, %v4740
      %v4837 = vmul.f32 %v1944, %v4741
      %v4838 = vmul.f32 %v1945, %v4742
      %v4839 = vmul.f32 %v1946, %v4743
      %v4840 = vmul.f32 %v1947, %v4744
      %v4841 = vmul.f32 %v1944, %v4745
      %v4842 = vmul.f32 %v1945, %v4746
      %v4843 = vmul.f32 %v1946, %v4747
      %v4844 = vmul.f32 %v1947, %v4748
      %v4845 = vmul.f32 %v1944, %v4749
      %v4846 = vmul.f32 %v1945, %v4750
      %v4847 = vmul.f32 %v1946, %v4751
      %v4848 = vmul.f32 %v1947, %v4752
      %v4849 = vmul.f32 %v1944, %v4753
      %v4850 = vmul.f32 %v1945, %v4754
      %v4851 = vmul.f32 %v1946, %v4755
      %v4852 = vmul.f32 %v1947, %v4756
      %v4853 = vmul.f32 %v1944, %v4757
      %v4854 = vmul.f32 %v1945, %v4758
      %v4855 = vmul.f32 %v1946, %v4759
      %v4856 = vmul.f32 %v1947, %v4760
      %v4857 = vpack.c.bf16 %v4762, %v4761
      %v4858 = vpack.c.bf16 %v4764, %v4763
      %v4859 = vpack.c.bf16 %v4766, %v4765
      %v4860 = vpack.c.bf16 %v4768, %v4767
      %v4861 = vpack.c.bf16 %v4770, %v4769
      %v4862 = vpack.c.bf16 %v4772, %v4771
      %v4863 = vpack.c.bf16 %v4774, %v4773
      %v4864 = vpack.c.bf16 %v4776, %v4775
      %v4865 = vpack.c.bf16 %v4778, %v4777
      %v4866 = vpack.c.bf16 %v4780, %v4779
      %v4867 = vpack.c.bf16 %v4782, %v4781
      %v4868 = vpack.c.bf16 %v4784, %v4783
      %v4869 = vpack.c.bf16 %v4786, %v4785
      %v4870 = vpack.c.bf16 %v4788, %v4787
      %v4871 = vpack.c.bf16 %v4790, %v4789
      %v4872 = vpack.c.bf16 %v4792, %v4791
      %v4873 = vpack.c.bf16 %v4794, %v4793
      %v4874 = vpack.c.bf16 %v4796, %v4795
      %v4875 = vpack.c.bf16 %v4798, %v4797
      %v4876 = vpack.c.bf16 %v4800, %v4799
      %v4877 = vpack.c.bf16 %v4802, %v4801
      %v4878 = vpack.c.bf16 %v4804, %v4803
      %v4879 = vpack.c.bf16 %v4806, %v4805
      %v4880 = vpack.c.bf16 %v4808, %v4807
      %v4881 = vpack.c.bf16 %v4810, %v4809
      %v4882 = vpack.c.bf16 %v4812, %v4811
      %v4883 = vpack.c.bf16 %v4814, %v4813
      %v4884 = vpack.c.bf16 %v4816, %v4815
      %v4885 = vpack.c.bf16 %v4818, %v4817
      %v4886 = vpack.c.bf16 %v4820, %v4819
      %v4887 = vpack.c.bf16 %v4822, %v4821
      %v4888 = vpack.c.bf16 %v4824, %v4823
      %v4889 = vpack.c.bf16 %v4826, %v4825
      %v4890 = vpack.c.bf16 %v4828, %v4827
      %v4891 = vpack.c.bf16 %v4830, %v4829
      %v4892 = vpack.c.bf16 %v4832, %v4831
      %v4893 = vpack.c.bf16 %v4834, %v4833
      %v4894 = vpack.c.bf16 %v4836, %v4835
      %v4895 = vpack.c.bf16 %v4838, %v4837
      %v4896 = vpack.c.bf16 %v4840, %v4839
      %v4897 = vpack.c.bf16 %v4842, %v4841
      %v4898 = vpack.c.bf16 %v4844, %v4843
      %v4899 = vpack.c.bf16 %v4846, %v4845
      %v4900 = vpack.c.bf16 %v4848, %v4847
      %v4901 = vpack.c.bf16 %v4850, %v4849
      %v4902 = vpack.c.bf16 %v4852, %v4851
      %v4903 = vpack.c.bf16 %v4854, %v4853
      %v4904 = vpack.c.bf16 %v4856, %v4855
      %v4953 = vunpack.c.l.b16 %v4413
      %v4954 = vunpack.c.h.b16 %v4413
      %v4955 = vunpack.c.l.b16 %v4414
      %v4956 = vunpack.c.h.b16 %v4414
      %v4957 = vunpack.c.l.b16 %v4415
      %v4958 = vunpack.c.h.b16 %v4415
      %v4959 = vunpack.c.l.b16 %v4416
      %v4960 = vunpack.c.h.b16 %v4416
      %v4961 = vunpack.c.l.b16 %v4417
      %v4962 = vunpack.c.h.b16 %v4417
      %v4963 = vunpack.c.l.b16 %v4418
      %v4964 = vunpack.c.h.b16 %v4418
      %v4965 = vunpack.c.l.b16 %v4419
      %v4966 = vunpack.c.h.b16 %v4419
      %v4967 = vunpack.c.l.b16 %v4420
      %v4968 = vunpack.c.h.b16 %v4420
      %v4969 = vunpack.c.l.b16 %v4421
      %v4970 = vunpack.c.h.b16 %v4421
      %v4971 = vunpack.c.l.b16 %v4422
      %v4972 = vunpack.c.h.b16 %v4422
      %v4973 = vunpack.c.l.b16 %v4423
      %v4974 = vunpack.c.h.b16 %v4423
      %v4975 = vunpack.c.l.b16 %v4424
      %v4976 = vunpack.c.h.b16 %v4424
      %v4977 = vunpack.c.l.b16 %v4425
      %v4978 = vunpack.c.h.b16 %v4425
      %v4979 = vunpack.c.l.b16 %v4426
      %v4980 = vunpack.c.h.b16 %v4426
      %v4981 = vunpack.c.l.b16 %v4427
      %v4982 = vunpack.c.h.b16 %v4427
      %v4983 = vunpack.c.l.b16 %v4428
      %v4984 = vunpack.c.h.b16 %v4428
      %v4985 = vunpack.c.l.b16 %v4429
      %v4986 = vunpack.c.h.b16 %v4429
      %v4987 = vunpack.c.l.b16 %v4430
      %v4988 = vunpack.c.h.b16 %v4430
      %v4989 = vunpack.c.l.b16 %v4431
      %v4990 = vunpack.c.h.b16 %v4431
      %v4991 = vunpack.c.l.b16 %v4432
      %v4992 = vunpack.c.h.b16 %v4432
      %v4993 = vunpack.c.l.b16 %v4433
      %v4994 = vunpack.c.h.b16 %v4433
      %v4995 = vunpack.c.l.b16 %v4434
      %v4996 = vunpack.c.h.b16 %v4434
      %v4997 = vunpack.c.l.b16 %v4435
      %v4998 = vunpack.c.h.b16 %v4435
      %v4999 = vunpack.c.l.b16 %v4436
      %v5000 = vunpack.c.h.b16 %v4436
      %v5001 = vunpack.c.l.b16 %v4437
      %v5002 = vunpack.c.h.b16 %v4437
      %v5003 = vunpack.c.l.b16 %v4438
      %v5004 = vunpack.c.h.b16 %v4438
      %v5005 = vunpack.c.l.b16 %v4439
      %v5006 = vunpack.c.h.b16 %v4439
      %v5007 = vunpack.c.l.b16 %v4440
      %v5008 = vunpack.c.h.b16 %v4440
      %v5009 = vunpack.c.l.b16 %v4441
      %v5010 = vunpack.c.h.b16 %v4441
      %v5011 = vunpack.c.l.b16 %v4442
      %v5012 = vunpack.c.h.b16 %v4442
      %v5013 = vunpack.c.l.b16 %v4443
      %v5014 = vunpack.c.h.b16 %v4443
      %v5015 = vunpack.c.l.b16 %v4444
      %v5016 = vunpack.c.h.b16 %v4444
      %v5017 = vunpack.c.l.b16 %v4445
      %v5018 = vunpack.c.h.b16 %v4445
      %v5019 = vunpack.c.l.b16 %v4446
      %v5020 = vunpack.c.h.b16 %v4446
      %v5021 = vunpack.c.l.b16 %v4447
      %v5022 = vunpack.c.h.b16 %v4447
      %v5023 = vunpack.c.l.b16 %v4448
      %v5024 = vunpack.c.h.b16 %v4448
      %v5025 = vunpack.c.l.b16 %v4449
      %v5026 = vunpack.c.h.b16 %v4449
      %v5027 = vunpack.c.l.b16 %v4450
      %v5028 = vunpack.c.h.b16 %v4450
      %v5029 = vunpack.c.l.b16 %v4451
      %v5030 = vunpack.c.h.b16 %v4451
      %v5031 = vunpack.c.l.b16 %v4452
      %v5032 = vunpack.c.h.b16 %v4452
      %v5033 = vunpack.c.l.b16 %v4453
      %v5034 = vunpack.c.h.b16 %v4453
      %v5035 = vunpack.c.l.b16 %v4454
      %v5036 = vunpack.c.h.b16 %v4454
      %v5037 = vunpack.c.l.b16 %v4455
      %v5038 = vunpack.c.h.b16 %v4455
      %v5039 = vunpack.c.l.b16 %v4456
      %v5040 = vunpack.c.h.b16 %v4456
      %v5041 = vunpack.c.l.b16 %v4457
      %v5042 = vunpack.c.h.b16 %v4457
      %v5043 = vunpack.c.l.b16 %v4458
      %v5044 = vunpack.c.h.b16 %v4458
      %v5045 = vunpack.c.l.b16 %v4459
      %v5046 = vunpack.c.h.b16 %v4459
      %v5047 = vunpack.c.l.b16 %v4460
      %v5048 = vunpack.c.h.b16 %v4460
      %v5049 = vpack.c.b16 %v4957, %v4953
      %v5050 = vpack.c.b16 %v4958, %v4954
      %v5051 = vpack.c.b16 %v4959, %v4955
      %v5052 = vpack.c.b16 %v4960, %v4956
      %v5053 = vpack.c.b16 %v4965, %v4961
      %v5054 = vpack.c.b16 %v4966, %v4962
      %v5055 = vpack.c.b16 %v4967, %v4963
      %v5056 = vpack.c.b16 %v4968, %v4964
      %v5057 = vpack.c.b16 %v4973, %v4969
      %v5058 = vpack.c.b16 %v4974, %v4970
      %v5059 = vpack.c.b16 %v4975, %v4971
      %v5060 = vpack.c.b16 %v4976, %v4972
      %v5061 = vpack.c.b16 %v4981, %v4977
      %v5062 = vpack.c.b16 %v4982, %v4978
      %v5063 = vpack.c.b16 %v4983, %v4979
      %v5064 = vpack.c.b16 %v4984, %v4980
      %v5065 = vpack.c.b16 %v4989, %v4985
      %v5066 = vpack.c.b16 %v4990, %v4986
      %v5067 = vpack.c.b16 %v4991, %v4987
      %v5068 = vpack.c.b16 %v4992, %v4988
      %v5069 = vpack.c.b16 %v4997, %v4993
      %v5070 = vpack.c.b16 %v4998, %v4994
      %v5071 = vpack.c.b16 %v4999, %v4995
      %v5072 = vpack.c.b16 %v5000, %v4996
      %v5073 = vpack.c.b16 %v5005, %v5001
      %v5074 = vpack.c.b16 %v5006, %v5002
      %v5075 = vpack.c.b16 %v5007, %v5003
      %v5076 = vpack.c.b16 %v5008, %v5004
      %v5077 = vpack.c.b16 %v5013, %v5009
      %v5078 = vpack.c.b16 %v5014, %v5010
      %v5079 = vpack.c.b16 %v5015, %v5011
      %v5080 = vpack.c.b16 %v5016, %v5012
      %v5081 = vpack.c.b16 %v5021, %v5017
      %v5082 = vpack.c.b16 %v5022, %v5018
      %v5083 = vpack.c.b16 %v5023, %v5019
      %v5084 = vpack.c.b16 %v5024, %v5020
      %v5085 = vpack.c.b16 %v5029, %v5025
      %v5086 = vpack.c.b16 %v5030, %v5026
      %v5087 = vpack.c.b16 %v5031, %v5027
      %v5088 = vpack.c.b16 %v5032, %v5028
      %v5089 = vpack.c.b16 %v5037, %v5033
      %v5090 = vpack.c.b16 %v5038, %v5034
      %v5091 = vpack.c.b16 %v5039, %v5035
      %v5092 = vpack.c.b16 %v5040, %v5036
      %v5093 = vpack.c.b16 %v5045, %v5041
      %v5094 = vpack.c.b16 %v5046, %v5042
      %v5095 = vpack.c.b16 %v5047, %v5043
      %v5096 = vpack.c.b16 %v5048, %v5044
      %v5193 = vunpack.c.l.b16 %v4857
      %v5194 = vunpack.c.h.b16 %v4857
      %v5195 = vunpack.c.l.b16 %v4858
      %v5196 = vunpack.c.h.b16 %v4858
      %v5197 = vunpack.c.l.b16 %v4859
      %v5198 = vunpack.c.h.b16 %v4859
      %v5199 = vunpack.c.l.b16 %v4860
      %v5200 = vunpack.c.h.b16 %v4860
      %v5201 = vunpack.c.l.b16 %v4861
      %v5202 = vunpack.c.h.b16 %v4861
      %v5203 = vunpack.c.l.b16 %v4862
      %v5204 = vunpack.c.h.b16 %v4862
      %v5205 = vunpack.c.l.b16 %v4863
      %v5206 = vunpack.c.h.b16 %v4863
      %v5207 = vunpack.c.l.b16 %v4864
      %v5208 = vunpack.c.h.b16 %v4864
      %v5209 = vunpack.c.l.b16 %v4865
      %v5210 = vunpack.c.h.b16 %v4865
      %v5211 = vunpack.c.l.b16 %v4866
      %v5212 = vunpack.c.h.b16 %v4866
      %v5213 = vunpack.c.l.b16 %v4867
      %v5214 = vunpack.c.h.b16 %v4867
      %v5215 = vunpack.c.l.b16 %v4868
      %v5216 = vunpack.c.h.b16 %v4868
      %v5217 = vunpack.c.l.b16 %v4869
      %v5218 = vunpack.c.h.b16 %v4869
      %v5219 = vunpack.c.l.b16 %v4870
      %v5220 = vunpack.c.h.b16 %v4870
      %v5221 = vunpack.c.l.b16 %v4871
      %v5222 = vunpack.c.h.b16 %v4871
      %v5223 = vunpack.c.l.b16 %v4872
      %v5224 = vunpack.c.h.b16 %v4872
      %v5225 = vunpack.c.l.b16 %v4873
      %v5226 = vunpack.c.h.b16 %v4873
      %v5227 = vunpack.c.l.b16 %v4874
      %v5228 = vunpack.c.h.b16 %v4874
      %v5229 = vunpack.c.l.b16 %v4875
      %v5230 = vunpack.c.h.b16 %v4875
      %v5231 = vunpack.c.l.b16 %v4876
      %v5232 = vunpack.c.h.b16 %v4876
      %v5233 = vunpack.c.l.b16 %v4877
      %v5234 = vunpack.c.h.b16 %v4877
      %v5235 = vunpack.c.l.b16 %v4878
      %v5236 = vunpack.c.h.b16 %v4878
      %v5237 = vunpack.c.l.b16 %v4879
      %v5238 = vunpack.c.h.b16 %v4879
      %v5239 = vunpack.c.l.b16 %v4880
      %v5240 = vunpack.c.h.b16 %v4880
      %v5241 = vunpack.c.l.b16 %v4881
      %v5242 = vunpack.c.h.b16 %v4881
      %v5243 = vunpack.c.l.b16 %v4882
      %v5244 = vunpack.c.h.b16 %v4882
      %v5245 = vunpack.c.l.b16 %v4883
      %v5246 = vunpack.c.h.b16 %v4883
      %v5247 = vunpack.c.l.b16 %v4884
      %v5248 = vunpack.c.h.b16 %v4884
      %v5249 = vunpack.c.l.b16 %v4885
      %v5250 = vunpack.c.h.b16 %v4885
      %v5251 = vunpack.c.l.b16 %v4886
      %v5252 = vunpack.c.h.b16 %v4886
      %v5253 = vunpack.c.l.b16 %v4887
      %v5254 = vunpack.c.h.b16 %v4887
      %v5255 = vunpack.c.l.b16 %v4888
      %v5256 = vunpack.c.h.b16 %v4888
      %v5257 = vunpack.c.l.b16 %v4889
      %v5258 = vunpack.c.h.b16 %v4889
      %v5259 = vunpack.c.l.b16 %v4890
      %v5260 = vunpack.c.h.b16 %v4890
      %v5261 = vunpack.c.l.b16 %v4891
      %v5262 = vunpack.c.h.b16 %v4891
      %v5263 = vunpack.c.l.b16 %v4892
      %v5264 = vunpack.c.h.b16 %v4892
      %v5265 = vunpack.c.l.b16 %v4893
      %v5266 = vunpack.c.h.b16 %v4893
      %v5267 = vunpack.c.l.b16 %v4894
      %v5268 = vunpack.c.h.b16 %v4894
      %v5269 = vunpack.c.l.b16 %v4895
      %v5270 = vunpack.c.h.b16 %v4895
      %v5271 = vunpack.c.l.b16 %v4896
      %v5272 = vunpack.c.h.b16 %v4896
      %v5273 = vunpack.c.l.b16 %v4897
      %v5274 = vunpack.c.h.b16 %v4897
      %v5275 = vunpack.c.l.b16 %v4898
      %v5276 = vunpack.c.h.b16 %v4898
      %v5277 = vunpack.c.l.b16 %v4899
      %v5278 = vunpack.c.h.b16 %v4899
      %v5279 = vunpack.c.l.b16 %v4900
      %v5280 = vunpack.c.h.b16 %v4900
      %v5281 = vunpack.c.l.b16 %v4901
      %v5282 = vunpack.c.h.b16 %v4901
      %v5283 = vunpack.c.l.b16 %v4902
      %v5284 = vunpack.c.h.b16 %v4902
      %v5285 = vunpack.c.l.b16 %v4903
      %v5286 = vunpack.c.h.b16 %v4903
      %v5287 = vunpack.c.l.b16 %v4904
      %v5288 = vunpack.c.h.b16 %v4904
      %v5289 = vpack.c.b16 %v5197, %v5193
      %v5290 = vpack.c.b16 %v5198, %v5194
      %v5291 = vpack.c.b16 %v5199, %v5195
      %v5292 = vpack.c.b16 %v5200, %v5196
      %v5293 = vpack.c.b16 %v5205, %v5201
      %v5294 = vpack.c.b16 %v5206, %v5202
      %v5295 = vpack.c.b16 %v5207, %v5203
      %v5296 = vpack.c.b16 %v5208, %v5204
      %v5297 = vpack.c.b16 %v5213, %v5209
      %v5298 = vpack.c.b16 %v5214, %v5210
      %v5299 = vpack.c.b16 %v5215, %v5211
      %v5300 = vpack.c.b16 %v5216, %v5212
      %v5301 = vpack.c.b16 %v5221, %v5217
      %v5302 = vpack.c.b16 %v5222, %v5218
      %v5303 = vpack.c.b16 %v5223, %v5219
      %v5304 = vpack.c.b16 %v5224, %v5220
      %v5305 = vpack.c.b16 %v5229, %v5225
      %v5306 = vpack.c.b16 %v5230, %v5226
      %v5307 = vpack.c.b16 %v5231, %v5227
      %v5308 = vpack.c.b16 %v5232, %v5228
      %v5309 = vpack.c.b16 %v5237, %v5233
      %v5310 = vpack.c.b16 %v5238, %v5234
      %v5311 = vpack.c.b16 %v5239, %v5235
      %v5312 = vpack.c.b16 %v5240, %v5236
      %v5313 = vpack.c.b16 %v5245, %v5241
      %v5314 = vpack.c.b16 %v5246, %v5242
      %v5315 = vpack.c.b16 %v5247, %v5243
      %v5316 = vpack.c.b16 %v5248, %v5244
      %v5317 = vpack.c.b16 %v5253, %v5249
      %v5318 = vpack.c.b16 %v5254, %v5250
      %v5319 = vpack.c.b16 %v5255, %v5251
      %v5320 = vpack.c.b16 %v5256, %v5252
      %v5321 = vpack.c.b16 %v5261, %v5257
      %v5322 = vpack.c.b16 %v5262, %v5258
      %v5323 = vpack.c.b16 %v5263, %v5259
      %v5324 = vpack.c.b16 %v5264, %v5260
      %v5325 = vpack.c.b16 %v5269, %v5265
      %v5326 = vpack.c.b16 %v5270, %v5266
      %v5327 = vpack.c.b16 %v5271, %v5267
      %v5328 = vpack.c.b16 %v5272, %v5268
      %v5329 = vpack.c.b16 %v5277, %v5273
      %v5330 = vpack.c.b16 %v5278, %v5274
      %v5331 = vpack.c.b16 %v5279, %v5275
      %v5332 = vpack.c.b16 %v5280, %v5276
      %v5333 = vpack.c.b16 %v5285, %v5281
      %v5334 = vpack.c.b16 %v5286, %v5282
      %v5335 = vpack.c.b16 %v5287, %v5283
      %v5336 = vpack.c.b16 %v5288, %v5284
      %v5385 = vld [vmem:[%s6] sm:$0xff]
      %v5386 = vld [vmem:[%s6 + $0x8] sm:$0xff]
      %v5387 = vld [vmem:[%s6 + $0x10] sm:$0xf]
      %v5388 = vld [vmem:[%s6 + $0x14] sm:$0xff]
      %v5389 = vld [vmem:[%s6 + $0x1c] sm:$0xff]
      %v5390 = vld [vmem:[%s6 + $0x24] sm:$0xf]
      %v5391 = vld [vmem:[%s6 + $0x28] sm:$0xff]
      %v5392 = vld [vmem:[%s6 + $0x30] sm:$0xff]
      %v5393 = vld [vmem:[%s6 + $0x38] sm:$0xf]
      %v5394 = vld [vmem:[%s6 + $0x3c] sm:$0xff]
      %v5395 = vld [vmem:[%s6 + $0x44] sm:$0xff]
      %v5396 = vld [vmem:[%s6 + $0x4c] sm:$0xf]
      %v5397 = vld [vmem:[%s6 + $0x50] sm:$0xff]
      %v5398 = vld [vmem:[%s6 + $0x58] sm:$0xff]
      %v5399 = vld [vmem:[%s6 + $0x60] sm:$0xf]
      %v5400 = vld [vmem:[%s6 + $0x64] sm:$0xff]
      %v5401 = vld [vmem:[%s6 + $0x6c] sm:$0xff]
      %v5402 = vld [vmem:[%s6 + $0x74] sm:$0xf]
      %v5403 = vld [vmem:[%s6 + $0x78] sm:$0xff]
      %v5404 = vld [vmem:[%s6 + $0x80] sm:$0xff]
      %v5405 = vld [vmem:[%s6 + $0x88] sm:$0xf]
      %v5406 = vld [vmem:[%s6 + $0x8c] sm:$0xff]
      %v5407 = vld [vmem:[%s6 + $0x94] sm:$0xff]
      %v5408 = vld [vmem:[%s6 + $0x9c] sm:$0xf]
      %v5409 = vld [vmem:[%s7] sm:$0xff]
      %v5410 = vld [vmem:[%s7 + $0x8] sm:$0xff]
      %v5411 = vld [vmem:[%s7 + $0x10] sm:$0xff]
      %v5412 = vld [vmem:[%s7 + $0x18] sm:$0xff]
      %v5413 = vld [vmem:[%s7 + $0x20] sm:$0xff]
      %v5414 = vld [vmem:[%s7 + $0x28] sm:$0xff]
      %v5415 = vld [vmem:[%s7 + $0x30] sm:$0xff]
      %v5416 = vld [vmem:[%s7 + $0x38] sm:$0xff]
      %5418 = vset.pattern.permute.xlu0 0
      %5419 = vperm.xlu0 %5418, %v5409
      %v5420 = vpop.permute.xlu0 %5419
      %5423 = vset.pattern.permute.xlu0 0
      %5424 = vperm.xlu0 %5423, %v5410
      %v5425 = vpop.permute.xlu0 %5424
      %5428 = vset.pattern.permute.xlu0 0
      %5429 = vperm.xlu0 %5428, %v5411
      %v5430 = vpop.permute.xlu0 %5429
      %5433 = vset.pattern.permute.xlu0 0
      %5434 = vperm.xlu0 %5433, %v5412
      %v5435 = vpop.permute.xlu0 %5434
      %5438 = vset.pattern.permute.xlu0 0
      %5439 = vperm.xlu0 %5438, %v5413
      %v5440 = vpop.permute.xlu0 %5439
      %5443 = vset.pattern.permute.xlu0 0
      %5444 = vperm.xlu0 %5443, %v5414
      %v5445 = vpop.permute.xlu0 %5444
      %5448 = vset.pattern.permute.xlu0 0
      %5449 = vperm.xlu0 %5448, %v5415
      %v5450 = vpop.permute.xlu0 %5449
      %5453 = vset.pattern.permute.xlu0 0
      %5454 = vperm.xlu0 %5453, %v5416
      %v5455 = vpop.permute.xlu0 %5454
      %v5481 = vunpack.c.l.b16 %v5385
      %v5482 = vunpack.c.h.b16 %v5385
      %v5483 = vunpack.c.l.b16 %v5386
      %v5484 = vunpack.c.h.b16 %v5386
      %v5485 = vunpack.c.l.b16 %v5387
      %v5486 = vunpack.c.l.b16 %v5388
      %v5487 = vunpack.c.h.b16 %v5388
      %v5488 = vunpack.c.l.b16 %v5389
      %v5489 = vunpack.c.h.b16 %v5389
      %v5490 = vunpack.c.l.b16 %v5390
      %v5491 = vunpack.c.l.b16 %v5391
      %v5492 = vunpack.c.h.b16 %v5391
      %v5493 = vunpack.c.l.b16 %v5392
      %v5494 = vunpack.c.h.b16 %v5392
      %v5495 = vunpack.c.l.b16 %v5393
      %v5496 = vunpack.c.l.b16 %v5394
      %v5497 = vunpack.c.h.b16 %v5394
      %v5498 = vunpack.c.l.b16 %v5395
      %v5499 = vunpack.c.h.b16 %v5395
      %v5500 = vunpack.c.l.b16 %v5396
      %v5501 = vunpack.c.l.b16 %v5397
      %v5502 = vunpack.c.h.b16 %v5397
      %v5503 = vunpack.c.l.b16 %v5398
      %v5504 = vunpack.c.h.b16 %v5398
      %v5505 = vunpack.c.l.b16 %v5399
      %v5506 = vunpack.c.l.b16 %v5400
      %v5507 = vunpack.c.h.b16 %v5400
      %v5508 = vunpack.c.l.b16 %v5401
      %v5509 = vunpack.c.h.b16 %v5401
      %v5510 = vunpack.c.l.b16 %v5402
      %v5511 = vunpack.c.l.b16 %v5403
      %v5512 = vunpack.c.h.b16 %v5403
      %v5513 = vunpack.c.l.b16 %v5404
      %v5514 = vunpack.c.h.b16 %v5404
      %v5515 = vunpack.c.l.b16 %v5405
      %v5516 = vunpack.c.l.b16 %v5406
      %v5517 = vunpack.c.h.b16 %v5406
      %v5518 = vunpack.c.l.b16 %v5407
      %v5519 = vunpack.c.h.b16 %v5407
      %v5520 = vunpack.c.l.b16 %v5408
      %v5521 = vpack.c.b16 %v5486, %v5481
      %v5522 = vpack.c.b16 %v5487, %v5482
      %v5523 = vpack.c.b16 %v5488, %v5483
      %v5524 = vpack.c.b16 %v5489, %v5484
      %v5525 = vpack.c.b16 %v5490, %v5485
      %v5526 = vpack.c.b16 %v5496, %v5491
      %v5527 = vpack.c.b16 %v5497, %v5492
      %v5528 = vpack.c.b16 %v5498, %v5493
      %v5529 = vpack.c.b16 %v5499, %v5494
      %v5530 = vpack.c.b16 %v5500, %v5495
      %v5531 = vpack.c.b16 %v5506, %v5501
      %v5532 = vpack.c.b16 %v5507, %v5502
      %v5533 = vpack.c.b16 %v5508, %v5503
      %v5534 = vpack.c.b16 %v5509, %v5504
      %v5535 = vpack.c.b16 %v5510, %v5505
      %v5536 = vpack.c.b16 %v5516, %v5511
      %v5537 = vpack.c.b16 %v5517, %v5512
      %v5538 = vpack.c.b16 %v5518, %v5513
      %v5539 = vpack.c.b16 %v5519, %v5514
      %v5540 = vpack.c.b16 %v5520, %v5515
      %v5558 = vsel %vm2840, %v5525, 0
      %v5561 = vsel %vm2840, %v5530, 0
      %v5564 = vsel %vm2840, %v5535, 0
      %v5567 = vsel %vm2840, %v5540, 0
      %5569 = vmatpush.bf16.msra.mxu0 %v5077
      %5570 = vmatpush.bf16.msra.mxu0 %v5073
      %5571 = vmatpush.bf16.msra.mxu0 %v5069
      %5572 = vmatpush.bf16.msra.mxu0 %v5065
      %5573 = vmatpush.bf16.msra.mxu0 %v5061
      %5574 = vmatpush.bf16.msra.mxu0 %v5057
      %5575 = vmatpush.bf16.msra.mxu0 %v5053
      %5576 = vmatpush.bf16.msra.mxu0 %v5049
      %5577 = vmatmul.bf16.gmra.mxu0 %v5521
      %v5578 = vpop.f32.mrf.mxu0
      %v5579 = vadd.f32 %v5420, %v5578
      %v5580 = vpop.f32.mrf.mxu0
      %v5581 = vadd.f32 %v5425, %v5580
      %5582 = vmatmul.bf16.gmra.mxu0 %v5526
      %v5583 = vpop.f32.mrf.mxu0
      %v5584 = vadd.f32 %v5430, %v5583
      %v5585 = vpop.f32.mrf.mxu0
      %v5586 = vadd.f32 %v5435, %v5585
      %5587 = vmatmul.bf16.gmra.mxu0 %v5531
      %v5588 = vpop.f32.mrf.mxu0
      %v5589 = vadd.f32 %v5440, %v5588
      %v5590 = vpop.f32.mrf.mxu0
      %v5591 = vadd.f32 %v5445, %v5590
      %5592 = vmatmul.bf16.gmra.mxu0 %v5536
      %v5593 = vpop.f32.mrf.mxu0
      %v5594 = vadd.f32 %v5450, %v5593
      %v5595 = vpop.f32.mrf.mxu0
      %v5596 = vadd.f32 %v5455, %v5595
      %5597 = vdwg.mxu0
      %5598 = vmatpush.bf16.msra.mxu0 %v3901
      %5599 = vmatpush.bf16.msra.mxu0 %v3897
      %5600 = vmatpush.bf16.msra.mxu0 %v3893
      %5601 = vmatpush.bf16.msra.mxu0 %v3889
      %5602 = vmatpush.bf16.msra.mxu0 %v5093
      %5603 = vmatpush.bf16.msra.mxu0 %v5089
      %5604 = vmatpush.bf16.msra.mxu0 %v5085
      %5605 = vmatpush.bf16.msra.mxu0 %v5081
      %5606 = vmatmul.bf16.gmra.mxu0 %v5522
      %v5607 = vpop.f32.mrf.mxu0
      %v5608 = vadd.f32 %v5579, %v5607
      %v5609 = vpop.f32.mrf.mxu0
      %v5610 = vadd.f32 %v5581, %v5609
      %5611 = vmatmul.bf16.gmra.mxu0 %v5527
      %v5612 = vpop.f32.mrf.mxu0
      %v5613 = vadd.f32 %v5584, %v5612
      %v5614 = vpop.f32.mrf.mxu0
      %v5615 = vadd.f32 %v5586, %v5614
      %5616 = vmatmul.bf16.gmra.mxu0 %v5532
      %v5617 = vpop.f32.mrf.mxu0
      %v5618 = vadd.f32 %v5589, %v5617
      %v5619 = vpop.f32.mrf.mxu0
      %v5620 = vadd.f32 %v5591, %v5619
      %5621 = vmatmul.bf16.gmra.mxu0 %v5537
      %v5622 = vpop.f32.mrf.mxu0
      %v5623 = vadd.f32 %v5594, %v5622
      %v5624 = vpop.f32.mrf.mxu0
      %v5625 = vadd.f32 %v5596, %v5624
      %5626 = vdwg.mxu0
      %5627 = vmatpush.bf16.msra.mxu0 %v3997
      %5628 = vmatpush.bf16.msra.mxu0 %v3993
      %5629 = vmatpush.bf16.msra.mxu0 %v3989
      %5630 = vmatpush.bf16.msra.mxu0 %v3985
      %5631 = vmatpush.bf16.msra.mxu0 %v3541
      %5632 = vmatpush.bf16.msra.mxu0 %v3537
      %5633 = vmatpush.bf16.msra.mxu0 %v3533
      %5634 = vmatpush.bf16.msra.mxu0 %v3529
      %5635 = vmatmul.bf16.gmra.mxu0 %v5523
      %v5636 = vpop.f32.mrf.mxu0
      %v5637 = vadd.f32 %v5608, %v5636
      %v5638 = vpop.f32.mrf.mxu0
      %v5639 = vadd.f32 %v5610, %v5638
      %5640 = vmatmul.bf16.gmra.mxu0 %v5528
      %v5641 = vpop.f32.mrf.mxu0
      %v5642 = vadd.f32 %v5613, %v5641
      %v5643 = vpop.f32.mrf.mxu0
      %v5644 = vadd.f32 %v5615, %v5643
      %5645 = vmatmul.bf16.gmra.mxu0 %v5533
      %v5646 = vpop.f32.mrf.mxu0
      %v5647 = vadd.f32 %v5618, %v5646
      %v5648 = vpop.f32.mrf.mxu0
      %v5649 = vadd.f32 %v5620, %v5648
      %5650 = vmatmul.bf16.gmra.mxu0 %v5538
      %v5651 = vpop.f32.mrf.mxu0
      %v5652 = vadd.f32 %v5623, %v5651
      %v5653 = vpop.f32.mrf.mxu0
      %v5654 = vadd.f32 %v5625, %v5653
      %5655 = vdwg.mxu0
      %5656 = vmatpush.bf16.msra.mxu0 %v5317
      %5657 = vmatpush.bf16.msra.mxu0 %v5313
      %5658 = vmatpush.bf16.msra.mxu0 %v5309
      %5659 = vmatpush.bf16.msra.mxu0 %v5305
      %5660 = vmatpush.bf16.msra.mxu0 %v5301
      %5661 = vmatpush.bf16.msra.mxu0 %v5297
      %5662 = vmatpush.bf16.msra.mxu0 %v5293
      %5663 = vmatpush.bf16.msra.mxu0 %v5289
      %5664 = vmatmul.bf16.gmra.mxu0 %v5524
      %v5665 = vpop.f32.mrf.mxu0
      %v5666 = vadd.f32 %v5637, %v5665
      %v5667 = vpop.f32.mrf.mxu0
      %v5668 = vadd.f32 %v5639, %v5667
      %5669 = vmatmul.bf16.gmra.mxu0 %v5529
      %v5670 = vpop.f32.mrf.mxu0
      %v5671 = vadd.f32 %v5642, %v5670
      %v5672 = vpop.f32.mrf.mxu0
      %v5673 = vadd.f32 %v5644, %v5672
      %5674 = vmatmul.bf16.gmra.mxu0 %v5534
      %v5675 = vpop.f32.mrf.mxu0
      %v5676 = vadd.f32 %v5647, %v5675
      %v5677 = vpop.f32.mrf.mxu0
      %v5678 = vadd.f32 %v5649, %v5677
      %5679 = vmatmul.bf16.gmra.mxu0 %v5539
      %v5680 = vpop.f32.mrf.mxu0
      %v5681 = vadd.f32 %v5652, %v5680
      %v5682 = vpop.f32.mrf.mxu0
      %v5683 = vadd.f32 %v5654, %v5682
      %5684 = vdwg.mxu0
      %5685 = vmatpush.bf16.msra.mxu0 0
      %5686 = vmatpush.bf16.msra.mxu0 0
      %5687 = vmatpush.bf16.msra.mxu0 0
      %5688 = vmatpush.bf16.msra.mxu0 0
      %5689 = vmatpush.bf16.msra.mxu0 %v5333
      %5690 = vmatpush.bf16.msra.mxu0 %v5329
      %5691 = vmatpush.bf16.msra.mxu0 %v5325
      %5692 = vmatpush.bf16.msra.mxu0 %v5321
      %5693 = vmatmul.bf16.gmra.mxu0 %v5558
      %v5694 = vpop.f32.mrf.mxu0
      %v5695 = vadd.f32 %v5666, %v5694
      %v5696 = vpop.f32.mrf.mxu0
      %v5697 = vadd.f32 %v5668, %v5696
      %5698 = vmatmul.bf16.gmra.mxu0 %v5561
      %v5699 = vpop.f32.mrf.mxu0
      %v5700 = vadd.f32 %v5671, %v5699
      %v5701 = vpop.f32.mrf.mxu0
      %v5702 = vadd.f32 %v5673, %v5701
      %5703 = vmatmul.bf16.gmra.mxu0 %v5564
      %v5704 = vpop.f32.mrf.mxu0
      %v5705 = vadd.f32 %v5676, %v5704
      %v5706 = vpop.f32.mrf.mxu0
      %v5707 = vadd.f32 %v5678, %v5706
      %5708 = vmatmul.bf16.gmra.mxu0 %v5567
      %v5709 = vpop.f32.mrf.mxu0
      %v5710 = vadd.f32 %v5681, %v5709
      %v5711 = vpop.f32.mrf.mxu0
      %v5712 = vadd.f32 %v5683, %v5711
      %5713 = vdwg.mxu0
      %5714 = vmatpush.bf16.msra.mxu0 %v5078
      %5715 = vmatpush.bf16.msra.mxu0 %v5074
      %5716 = vmatpush.bf16.msra.mxu0 %v5070
      %5717 = vmatpush.bf16.msra.mxu0 %v5066
      %5718 = vmatpush.bf16.msra.mxu0 %v5062
      %5719 = vmatpush.bf16.msra.mxu0 %v5058
      %5720 = vmatpush.bf16.msra.mxu0 %v5054
      %5721 = vmatpush.bf16.msra.mxu0 %v5050
      %5722 = vmatmul.bf16.gmra.mxu0 %v5521
      %v5723 = vpop.f32.mrf.mxu0
      %v5724 = vadd.f32 %v5420, %v5723
      %v5725 = vpop.f32.mrf.mxu0
      %v5726 = vadd.f32 %v5425, %v5725
      %5727 = vmatmul.bf16.gmra.mxu0 %v5526
      %v5728 = vpop.f32.mrf.mxu0
      %v5729 = vadd.f32 %v5430, %v5728
      %v5730 = vpop.f32.mrf.mxu0
      %v5731 = vadd.f32 %v5435, %v5730
      %5732 = vmatmul.bf16.gmra.mxu0 %v5531
      %v5733 = vpop.f32.mrf.mxu0
      %v5734 = vadd.f32 %v5440, %v5733
      %v5735 = vpop.f32.mrf.mxu0
      %v5736 = vadd.f32 %v5445, %v5735
      %5737 = vmatmul.bf16.gmra.mxu0 %v5536
      %v5738 = vpop.f32.mrf.mxu0
      %v5739 = vadd.f32 %v5450, %v5738
      %v5740 = vpop.f32.mrf.mxu0
      %v5741 = vadd.f32 %v5455, %v5740
      %5742 = vdwg.mxu0
      %5743 = vmatpush.bf16.msra.mxu0 %v3902
      %5744 = vmatpush.bf16.msra.mxu0 %v3898
      %5745 = vmatpush.bf16.msra.mxu0 %v3894
      %5746 = vmatpush.bf16.msra.mxu0 %v3890
      %5747 = vmatpush.bf16.msra.mxu0 %v5094
      %5748 = vmatpush.bf16.msra.mxu0 %v5090
      %5749 = vmatpush.bf16.msra.mxu0 %v5086
      %5750 = vmatpush.bf16.msra.mxu0 %v5082
      %5751 = vmatmul.bf16.gmra.mxu0 %v5522
      %v5752 = vpop.f32.mrf.mxu0
      %v5753 = vadd.f32 %v5724, %v5752
      %v5754 = vpop.f32.mrf.mxu0
      %v5755 = vadd.f32 %v5726, %v5754
      %5756 = vmatmul.bf16.gmra.mxu0 %v5527
      %v5757 = vpop.f32.mrf.mxu0
      %v5758 = vadd.f32 %v5729, %v5757
      %v5759 = vpop.f32.mrf.mxu0
      %v5760 = vadd.f32 %v5731, %v5759
      %5761 = vmatmul.bf16.gmra.mxu0 %v5532
      %v5762 = vpop.f32.mrf.mxu0
      %v5763 = vadd.f32 %v5734, %v5762
      %v5764 = vpop.f32.mrf.mxu0
      %v5765 = vadd.f32 %v5736, %v5764
      %5766 = vmatmul.bf16.gmra.mxu0 %v5537
      %v5767 = vpop.f32.mrf.mxu0
      %v5768 = vadd.f32 %v5739, %v5767
      %v5769 = vpop.f32.mrf.mxu0
      %v5770 = vadd.f32 %v5741, %v5769
      %5771 = vdwg.mxu0
      %5772 = vmatpush.bf16.msra.mxu0 %v3998
      %5773 = vmatpush.bf16.msra.mxu0 %v3994
      %5774 = vmatpush.bf16.msra.mxu0 %v3990
      %5775 = vmatpush.bf16.msra.mxu0 %v3986
      %5776 = vmatpush.bf16.msra.mxu0 %v3542
      %5777 = vmatpush.bf16.msra.mxu0 %v3538
      %5778 = vmatpush.bf16.msra.mxu0 %v3534
      %5779 = vmatpush.bf16.msra.mxu0 %v3530
      %5780 = vmatmul.bf16.gmra.mxu0 %v5523
      %v5781 = vpop.f32.mrf.mxu0
      %v5782 = vadd.f32 %v5753, %v5781
      %v5783 = vpop.f32.mrf.mxu0
      %v5784 = vadd.f32 %v5755, %v5783
      %5785 = vmatmul.bf16.gmra.mxu0 %v5528
      %v5786 = vpop.f32.mrf.mxu0
      %v5787 = vadd.f32 %v5758, %v5786
      %v5788 = vpop.f32.mrf.mxu0
      %v5789 = vadd.f32 %v5760, %v5788
      %5790 = vmatmul.bf16.gmra.mxu0 %v5533
      %v5791 = vpop.f32.mrf.mxu0
      %v5792 = vadd.f32 %v5763, %v5791
      %v5793 = vpop.f32.mrf.mxu0
      %v5794 = vadd.f32 %v5765, %v5793
      %5795 = vmatmul.bf16.gmra.mxu0 %v5538
      %v5796 = vpop.f32.mrf.mxu0
      %v5797 = vadd.f32 %v5768, %v5796
      %v5798 = vpop.f32.mrf.mxu0
      %v5799 = vadd.f32 %v5770, %v5798
      %5800 = vdwg.mxu0
      %5801 = vmatpush.bf16.msra.mxu0 %v5318
      %5802 = vmatpush.bf16.msra.mxu0 %v5314
      %5803 = vmatpush.bf16.msra.mxu0 %v5310
      %5804 = vmatpush.bf16.msra.mxu0 %v5306
      %5805 = vmatpush.bf16.msra.mxu0 %v5302
      %5806 = vmatpush.bf16.msra.mxu0 %v5298
      %5807 = vmatpush.bf16.msra.mxu0 %v5294
      %5808 = vmatpush.bf16.msra.mxu0 %v5290
      %5809 = vmatmul.bf16.gmra.mxu0 %v5524
      %v5810 = vpop.f32.mrf.mxu0
      %v5811 = vadd.f32 %v5782, %v5810
      %v5812 = vpop.f32.mrf.mxu0
      %v5813 = vadd.f32 %v5784, %v5812
      %5814 = vmatmul.bf16.gmra.mxu0 %v5529
      %v5815 = vpop.f32.mrf.mxu0
      %v5816 = vadd.f32 %v5787, %v5815
      %v5817 = vpop.f32.mrf.mxu0
      %v5818 = vadd.f32 %v5789, %v5817
      %5819 = vmatmul.bf16.gmra.mxu0 %v5534
      %v5820 = vpop.f32.mrf.mxu0
      %v5821 = vadd.f32 %v5792, %v5820
      %v5822 = vpop.f32.mrf.mxu0
      %v5823 = vadd.f32 %v5794, %v5822
      %5824 = vmatmul.bf16.gmra.mxu0 %v5539
      %v5825 = vpop.f32.mrf.mxu0
      %v5826 = vadd.f32 %v5797, %v5825
      %v5827 = vpop.f32.mrf.mxu0
      %v5828 = vadd.f32 %v5799, %v5827
      %5829 = vdwg.mxu0
      %5830 = vmatpush.bf16.msra.mxu0 0
      %5831 = vmatpush.bf16.msra.mxu0 0
      %5832 = vmatpush.bf16.msra.mxu0 0
      %5833 = vmatpush.bf16.msra.mxu0 0
      %5834 = vmatpush.bf16.msra.mxu0 %v5334
      %5835 = vmatpush.bf16.msra.mxu0 %v5330
      %5836 = vmatpush.bf16.msra.mxu0 %v5326
      %5837 = vmatpush.bf16.msra.mxu0 %v5322
      %5838 = vmatmul.bf16.gmra.mxu0 %v5558
      %v5839 = vpop.f32.mrf.mxu0
      %v5840 = vadd.f32 %v5811, %v5839
      %v5841 = vpop.f32.mrf.mxu0
      %v5842 = vadd.f32 %v5813, %v5841
      %5843 = vmatmul.bf16.gmra.mxu0 %v5561
      %v5844 = vpop.f32.mrf.mxu0
      %v5845 = vadd.f32 %v5816, %v5844
      %v5846 = vpop.f32.mrf.mxu0
      %v5847 = vadd.f32 %v5818, %v5846
      %5848 = vmatmul.bf16.gmra.mxu0 %v5564
      %v5849 = vpop.f32.mrf.mxu0
      %v5850 = vadd.f32 %v5821, %v5849
      %v5851 = vpop.f32.mrf.mxu0
      %v5852 = vadd.f32 %v5823, %v5851
      %5853 = vmatmul.bf16.gmra.mxu0 %v5567
      %v5854 = vpop.f32.mrf.mxu0
      %v5855 = vadd.f32 %v5826, %v5854
      %v5856 = vpop.f32.mrf.mxu0
      %v5857 = vadd.f32 %v5828, %v5856
      %5858 = vdwg.mxu0
      %5859 = vmatpush.bf16.msra.mxu0 %v5079
      %5860 = vmatpush.bf16.msra.mxu0 %v5075
      %5861 = vmatpush.bf16.msra.mxu0 %v5071
      %5862 = vmatpush.bf16.msra.mxu0 %v5067
      %5863 = vmatpush.bf16.msra.mxu0 %v5063
      %5864 = vmatpush.bf16.msra.mxu0 %v5059
      %5865 = vmatpush.bf16.msra.mxu0 %v5055
      %5866 = vmatpush.bf16.msra.mxu0 %v5051
      %5867 = vmatmul.bf16.gmra.mxu0 %v5521
      %v5868 = vpop.f32.mrf.mxu0
      %v5869 = vadd.f32 %v5420, %v5868
      %v5870 = vpop.f32.mrf.mxu0
      %v5871 = vadd.f32 %v5425, %v5870
      %5872 = vmatmul.bf16.gmra.mxu0 %v5526
      %v5873 = vpop.f32.mrf.mxu0
      %v5874 = vadd.f32 %v5430, %v5873
      %v5875 = vpop.f32.mrf.mxu0
      %v5876 = vadd.f32 %v5435, %v5875
      %5877 = vmatmul.bf16.gmra.mxu0 %v5531
      %v5878 = vpop.f32.mrf.mxu0
      %v5879 = vadd.f32 %v5440, %v5878
      %v5880 = vpop.f32.mrf.mxu0
      %v5881 = vadd.f32 %v5445, %v5880
      %5882 = vmatmul.bf16.gmra.mxu0 %v5536
      %v5883 = vpop.f32.mrf.mxu0
      %v5884 = vadd.f32 %v5450, %v5883
      %v5885 = vpop.f32.mrf.mxu0
      %v5886 = vadd.f32 %v5455, %v5885
      %5887 = vdwg.mxu0
      %5888 = vmatpush.bf16.msra.mxu0 %v3903
      %5889 = vmatpush.bf16.msra.mxu0 %v3899
      %5890 = vmatpush.bf16.msra.mxu0 %v3895
      %5891 = vmatpush.bf16.msra.mxu0 %v3891
      %5892 = vmatpush.bf16.msra.mxu0 %v5095
      %5893 = vmatpush.bf16.msra.mxu0 %v5091
      %5894 = vmatpush.bf16.msra.mxu0 %v5087
      %5895 = vmatpush.bf16.msra.mxu0 %v5083
      %5896 = vmatmul.bf16.gmra.mxu0 %v5522
      %v5897 = vpop.f32.mrf.mxu0
      %v5898 = vadd.f32 %v5869, %v5897
      %v5899 = vpop.f32.mrf.mxu0
      %v5900 = vadd.f32 %v5871, %v5899
      %5901 = vmatmul.bf16.gmra.mxu0 %v5527
      %v5902 = vpop.f32.mrf.mxu0
      %v5903 = vadd.f32 %v5874, %v5902
      %v5904 = vpop.f32.mrf.mxu0
      %v5905 = vadd.f32 %v5876, %v5904
      %5906 = vmatmul.bf16.gmra.mxu0 %v5532
      %v5907 = vpop.f32.mrf.mxu0
      %v5908 = vadd.f32 %v5879, %v5907
      %v5909 = vpop.f32.mrf.mxu0
      %v5910 = vadd.f32 %v5881, %v5909
      %5911 = vmatmul.bf16.gmra.mxu0 %v5537
      %v5912 = vpop.f32.mrf.mxu0
      %v5913 = vadd.f32 %v5884, %v5912
      %v5914 = vpop.f32.mrf.mxu0
      %v5915 = vadd.f32 %v5886, %v5914
      %5916 = vdwg.mxu0
      %5917 = vmatpush.bf16.msra.mxu0 %v3999
      %5918 = vmatpush.bf16.msra.mxu0 %v3995
      %5919 = vmatpush.bf16.msra.mxu0 %v3991
      %5920 = vmatpush.bf16.msra.mxu0 %v3987
      %5921 = vmatpush.bf16.msra.mxu0 %v3543
      %5922 = vmatpush.bf16.msra.mxu0 %v3539
      %5923 = vmatpush.bf16.msra.mxu0 %v3535
      %5924 = vmatpush.bf16.msra.mxu0 %v3531
      %5925 = vmatmul.bf16.gmra.mxu0 %v5523
      %v5926 = vpop.f32.mrf.mxu0
      %v5927 = vadd.f32 %v5898, %v5926
      %v5928 = vpop.f32.mrf.mxu0
      %v5929 = vadd.f32 %v5900, %v5928
      %5930 = vmatmul.bf16.gmra.mxu0 %v5528
      %v5931 = vpop.f32.mrf.mxu0
      %v5932 = vadd.f32 %v5903, %v5931
      %v5933 = vpop.f32.mrf.mxu0
      %v5934 = vadd.f32 %v5905, %v5933
      %5935 = vmatmul.bf16.gmra.mxu0 %v5533
      %v5936 = vpop.f32.mrf.mxu0
      %v5937 = vadd.f32 %v5908, %v5936
      %v5938 = vpop.f32.mrf.mxu0
      %v5939 = vadd.f32 %v5910, %v5938
      %5940 = vmatmul.bf16.gmra.mxu0 %v5538
      %v5941 = vpop.f32.mrf.mxu0
      %v5942 = vadd.f32 %v5913, %v5941
      %v5943 = vpop.f32.mrf.mxu0
      %v5944 = vadd.f32 %v5915, %v5943
      %5945 = vdwg.mxu0
      %5946 = vmatpush.bf16.msra.mxu0 %v5319
      %5947 = vmatpush.bf16.msra.mxu0 %v5315
      %5948 = vmatpush.bf16.msra.mxu0 %v5311
      %5949 = vmatpush.bf16.msra.mxu0 %v5307
      %5950 = vmatpush.bf16.msra.mxu0 %v5303
      %5951 = vmatpush.bf16.msra.mxu0 %v5299
      %5952 = vmatpush.bf16.msra.mxu0 %v5295
      %5953 = vmatpush.bf16.msra.mxu0 %v5291
      %5954 = vmatmul.bf16.gmra.mxu0 %v5524
      %v5955 = vpop.f32.mrf.mxu0
      %v5956 = vadd.f32 %v5927, %v5955
      %v5957 = vpop.f32.mrf.mxu0
      %v5958 = vadd.f32 %v5929, %v5957
      %5959 = vmatmul.bf16.gmra.mxu0 %v5529
      %v5960 = vpop.f32.mrf.mxu0
      %v5961 = vadd.f32 %v5932, %v5960
      %v5962 = vpop.f32.mrf.mxu0
      %v5963 = vadd.f32 %v5934, %v5962
      %5964 = vmatmul.bf16.gmra.mxu0 %v5534
      %v5965 = vpop.f32.mrf.mxu0
      %v5966 = vadd.f32 %v5937, %v5965
      %v5967 = vpop.f32.mrf.mxu0
      %v5968 = vadd.f32 %v5939, %v5967
      %5969 = vmatmul.bf16.gmra.mxu0 %v5539
      %v5970 = vpop.f32.mrf.mxu0
      %v5971 = vadd.f32 %v5942, %v5970
      %v5972 = vpop.f32.mrf.mxu0
      %v5973 = vadd.f32 %v5944, %v5972
      %5974 = vdwg.mxu0
      %5975 = vmatpush.bf16.msra.mxu0 0
      %5976 = vmatpush.bf16.msra.mxu0 0
      %5977 = vmatpush.bf16.msra.mxu0 0
      %5978 = vmatpush.bf16.msra.mxu0 0
      %5979 = vmatpush.bf16.msra.mxu0 %v5335
      %5980 = vmatpush.bf16.msra.mxu0 %v5331
      %5981 = vmatpush.bf16.msra.mxu0 %v5327
      %5982 = vmatpush.bf16.msra.mxu0 %v5323
      %5983 = vmatmul.bf16.gmra.mxu0 %v5558
      %v5984 = vpop.f32.mrf.mxu0
      %v5985 = vadd.f32 %v5956, %v5984
      %v5986 = vpop.f32.mrf.mxu0
      %v5987 = vadd.f32 %v5958, %v5986
      %5988 = vmatmul.bf16.gmra.mxu0 %v5561
      %v5989 = vpop.f32.mrf.mxu0
      %v5990 = vadd.f32 %v5961, %v5989
      %v5991 = vpop.f32.mrf.mxu0
      %v5992 = vadd.f32 %v5963, %v5991
      %5993 = vmatmul.bf16.gmra.mxu0 %v5564
      %v5994 = vpop.f32.mrf.mxu0
      %v5995 = vadd.f32 %v5966, %v5994
      %v5996 = vpop.f32.mrf.mxu0
      %v5997 = vadd.f32 %v5968, %v5996
      %5998 = vmatmul.bf16.gmra.mxu0 %v5567
      %v5999 = vpop.f32.mrf.mxu0
      %v6000 = vadd.f32 %v5971, %v5999
      %v6001 = vpop.f32.mrf.mxu0
      %v6002 = vadd.f32 %v5973, %v6001
      %6003 = vdwg.mxu0
      %6004 = vmatpush.bf16.msra.mxu0 %v5080
      %6005 = vmatpush.bf16.msra.mxu0 %v5076
      %6006 = vmatpush.bf16.msra.mxu0 %v5072
      %6007 = vmatpush.bf16.msra.mxu0 %v5068
      %6008 = vmatpush.bf16.msra.mxu0 %v5064
      %6009 = vmatpush.bf16.msra.mxu0 %v5060
      %6010 = vmatpush.bf16.msra.mxu0 %v5056
      %6011 = vmatpush.bf16.msra.mxu0 %v5052
      %6012 = vmatmul.bf16.gmra.mxu0 %v5521
      %v6013 = vpop.f32.mrf.mxu0
      %v6014 = vadd.f32 %v5420, %v6013
      %v6015 = vpop.f32.mrf.mxu0
      %v6016 = vadd.f32 %v5425, %v6015
      %6017 = vmatmul.bf16.gmra.mxu0 %v5526
      %v6018 = vpop.f32.mrf.mxu0
      %v6019 = vadd.f32 %v5430, %v6018
      %v6020 = vpop.f32.mrf.mxu0
      %v6021 = vadd.f32 %v5435, %v6020
      %6022 = vmatmul.bf16.gmra.mxu0 %v5531
      %v6023 = vpop.f32.mrf.mxu0
      %v6024 = vadd.f32 %v5440, %v6023
      %v6025 = vpop.f32.mrf.mxu0
      %v6026 = vadd.f32 %v5445, %v6025
      %6027 = vmatmul.bf16.gmra.mxu0 %v5536
      %v6028 = vpop.f32.mrf.mxu0
      %v6029 = vadd.f32 %v5450, %v6028
      %v6030 = vpop.f32.mrf.mxu0
      %v6031 = vadd.f32 %v5455, %v6030
      %6032 = vdwg.mxu0
      %6033 = vmatpush.bf16.msra.mxu0 %v3904
      %6034 = vmatpush.bf16.msra.mxu0 %v3900
      %6035 = vmatpush.bf16.msra.mxu0 %v3896
      %6036 = vmatpush.bf16.msra.mxu0 %v3892
      %6037 = vmatpush.bf16.msra.mxu0 %v5096
      %6038 = vmatpush.bf16.msra.mxu0 %v5092
      %6039 = vmatpush.bf16.msra.mxu0 %v5088
      %6040 = vmatpush.bf16.msra.mxu0 %v5084
      %6041 = vmatmul.bf16.gmra.mxu0 %v5522
      %v6042 = vpop.f32.mrf.mxu0
      %v6043 = vadd.f32 %v6014, %v6042
      %v6044 = vpop.f32.mrf.mxu0
      %v6045 = vadd.f32 %v6016, %v6044
      %6046 = vmatmul.bf16.gmra.mxu0 %v5527
      %v6047 = vpop.f32.mrf.mxu0
      %v6048 = vadd.f32 %v6019, %v6047
      %v6049 = vpop.f32.mrf.mxu0
      %v6050 = vadd.f32 %v6021, %v6049
      %6051 = vmatmul.bf16.gmra.mxu0 %v5532
      %v6052 = vpop.f32.mrf.mxu0
      %v6053 = vadd.f32 %v6024, %v6052
      %v6054 = vpop.f32.mrf.mxu0
      %v6055 = vadd.f32 %v6026, %v6054
      %6056 = vmatmul.bf16.gmra.mxu0 %v5537
      %v6057 = vpop.f32.mrf.mxu0
      %v6058 = vadd.f32 %v6029, %v6057
      %v6059 = vpop.f32.mrf.mxu0
      %v6060 = vadd.f32 %v6031, %v6059
      %6061 = vdwg.mxu0
      %6062 = vmatpush.bf16.msra.mxu0 %v4000
      %6063 = vmatpush.bf16.msra.mxu0 %v3996
      %6064 = vmatpush.bf16.msra.mxu0 %v3992
      %6065 = vmatpush.bf16.msra.mxu0 %v3988
      %6066 = vmatpush.bf16.msra.mxu0 %v3544
      %6067 = vmatpush.bf16.msra.mxu0 %v3540
      %6068 = vmatpush.bf16.msra.mxu0 %v3536
      %6069 = vmatpush.bf16.msra.mxu0 %v3532
      %6070 = vmatmul.bf16.gmra.mxu0 %v5523
      %v6071 = vpop.f32.mrf.mxu0
      %v6072 = vadd.f32 %v6043, %v6071
      %v6073 = vpop.f32.mrf.mxu0
      %v6074 = vadd.f32 %v6045, %v6073
      %6075 = vmatmul.bf16.gmra.mxu0 %v5528
      %v6076 = vpop.f32.mrf.mxu0
      %v6077 = vadd.f32 %v6048, %v6076
      %v6078 = vpop.f32.mrf.mxu0
      %v6079 = vadd.f32 %v6050, %v6078
      %6080 = vmatmul.bf16.gmra.mxu0 %v5533
      %v6081 = vpop.f32.mrf.mxu0
      %v6082 = vadd.f32 %v6053, %v6081
      %v6083 = vpop.f32.mrf.mxu0
      %v6084 = vadd.f32 %v6055, %v6083
      %6085 = vmatmul.bf16.gmra.mxu0 %v5538
      %v6086 = vpop.f32.mrf.mxu0
      %v6087 = vadd.f32 %v6058, %v6086
      %v6088 = vpop.f32.mrf.mxu0
      %v6089 = vadd.f32 %v6060, %v6088
      %6090 = vdwg.mxu0
      %6091 = vmatpush.bf16.msra.mxu0 %v5320
      %6092 = vmatpush.bf16.msra.mxu0 %v5316
      %6093 = vmatpush.bf16.msra.mxu0 %v5312
      %6094 = vmatpush.bf16.msra.mxu0 %v5308
      %6095 = vmatpush.bf16.msra.mxu0 %v5304
      %6096 = vmatpush.bf16.msra.mxu0 %v5300
      %6097 = vmatpush.bf16.msra.mxu0 %v5296
      %6098 = vmatpush.bf16.msra.mxu0 %v5292
      %6099 = vmatmul.bf16.gmra.mxu0 %v5524
      %v6100 = vpop.f32.mrf.mxu0
      %v6101 = vadd.f32 %v6072, %v6100
      %v6102 = vpop.f32.mrf.mxu0
      %v6103 = vadd.f32 %v6074, %v6102
      %6104 = vmatmul.bf16.gmra.mxu0 %v5529
      %v6105 = vpop.f32.mrf.mxu0
      %v6106 = vadd.f32 %v6077, %v6105
      %v6107 = vpop.f32.mrf.mxu0
      %v6108 = vadd.f32 %v6079, %v6107
      %6109 = vmatmul.bf16.gmra.mxu0 %v5534
      %v6110 = vpop.f32.mrf.mxu0
      %v6111 = vadd.f32 %v6082, %v6110
      %v6112 = vpop.f32.mrf.mxu0
      %v6113 = vadd.f32 %v6084, %v6112
      %6114 = vmatmul.bf16.gmra.mxu0 %v5539
      %v6115 = vpop.f32.mrf.mxu0
      %v6116 = vadd.f32 %v6087, %v6115
      %v6117 = vpop.f32.mrf.mxu0
      %v6118 = vadd.f32 %v6089, %v6117
      %6119 = vdwg.mxu0
      %6120 = vmatpush.bf16.msra.mxu0 0
      %6121 = vmatpush.bf16.msra.mxu0 0
      %6122 = vmatpush.bf16.msra.mxu0 0
      %6123 = vmatpush.bf16.msra.mxu0 0
      %6124 = vmatpush.bf16.msra.mxu0 %v5336
      %6125 = vmatpush.bf16.msra.mxu0 %v5332
      %6126 = vmatpush.bf16.msra.mxu0 %v5328
      %6127 = vmatpush.bf16.msra.mxu0 %v5324
      %6128 = vmatmul.bf16.gmra.mxu0 %v5558
      %v6129 = vpop.f32.mrf.mxu0
      %v6130 = vadd.f32 %v6101, %v6129
      %v6131 = vpop.f32.mrf.mxu0
      %v6132 = vadd.f32 %v6103, %v6131
      %6133 = vmatmul.bf16.gmra.mxu0 %v5561
      %v6134 = vpop.f32.mrf.mxu0
      %v6135 = vadd.f32 %v6106, %v6134
      %v6136 = vpop.f32.mrf.mxu0
      %v6137 = vadd.f32 %v6108, %v6136
      %6138 = vmatmul.bf16.gmra.mxu0 %v5564
      %v6139 = vpop.f32.mrf.mxu0
      %v6140 = vadd.f32 %v6111, %v6139
      %v6141 = vpop.f32.mrf.mxu0
      %v6142 = vadd.f32 %v6113, %v6141
      %6143 = vmatmul.bf16.gmra.mxu0 %v5567
      %v6144 = vpop.f32.mrf.mxu0
      %v6145 = vadd.f32 %v6116, %v6144
      %v6146 = vpop.f32.mrf.mxu0
      %v6147 = vadd.f32 %v6118, %v6146
      %6148 = vdwg.mxu0
      %v6149 = vmax.f32 %v5695, 0.0
      %v6150 = vmax.f32 %v5840, 0.0
      %v6151 = vmax.f32 %v5985, 0.0
      %v6152 = vmax.f32 %v6130, 0.0
      %v6153 = vmax.f32 %v5697, 0.0
      %v6154 = vmax.f32 %v5842, 0.0
      %v6155 = vmax.f32 %v5987, 0.0
      %v6156 = vmax.f32 %v6132, 0.0
      %v6157 = vmax.f32 %v5700, 0.0
      %v6158 = vmax.f32 %v5845, 0.0
      %v6159 = vmax.f32 %v5990, 0.0
      %v6160 = vmax.f32 %v6135, 0.0
      %v6161 = vmax.f32 %v5702, 0.0
      %v6162 = vmax.f32 %v5847, 0.0
      %v6163 = vmax.f32 %v5992, 0.0
      %v6164 = vmax.f32 %v6137, 0.0
      %v6165 = vmax.f32 %v5705, 0.0
      %v6166 = vmax.f32 %v5850, 0.0
      %v6167 = vmax.f32 %v5995, 0.0
      %v6168 = vmax.f32 %v6140, 0.0
      %v6169 = vmax.f32 %v5707, 0.0
      %v6170 = vmax.f32 %v5852, 0.0
      %v6171 = vmax.f32 %v5997, 0.0
      %v6172 = vmax.f32 %v6142, 0.0
      %v6173 = vmax.f32 %v5710, 0.0
      %v6174 = vmax.f32 %v5855, 0.0
      %v6175 = vmax.f32 %v6000, 0.0
      %v6176 = vmax.f32 %v6145, 0.0
      %v6177 = vmax.f32 %v5712, 0.0
      %v6178 = vmax.f32 %v5857, 0.0
      %v6179 = vmax.f32 %v6002, 0.0
      %v6180 = vmax.f32 %v6147, 0.0
      %v6181 = vld [vmem:[%s8] sm:$0xff]
      %v6182 = vld [vmem:[%s8 + $0x8] sm:$0xff]
      %v6183 = vld [vmem:[%s8 + $0x10] sm:$0xff]
      %v6184 = vld [vmem:[%s8 + $0x18] sm:$0xff]
      %v6185 = vld [vmem:[%s8 + $0x20] sm:$0xff]
      %v6186 = vld [vmem:[%s8 + $0x28] sm:$0xff]
      %v6187 = vld [vmem:[%s8 + $0x30] sm:$0xff]
      %v6188 = vld [vmem:[%s8 + $0x38] sm:$0xff]
      %6190 = vset.pattern.permute.xlu0 0
      %6191 = vperm.xlu0 %6190, %v6181
      %v6192 = vpop.permute.xlu0 %6191
      %6195 = vset.pattern.permute.xlu0 0
      %6196 = vperm.xlu0 %6195, %v6182
      %v6197 = vpop.permute.xlu0 %6196
      %6200 = vset.pattern.permute.xlu0 0
      %6201 = vperm.xlu0 %6200, %v6183
      %v6202 = vpop.permute.xlu0 %6201
      %6205 = vset.pattern.permute.xlu0 0
      %6206 = vperm.xlu0 %6205, %v6184
      %v6207 = vpop.permute.xlu0 %6206
      %6210 = vset.pattern.permute.xlu0 0
      %6211 = vperm.xlu0 %6210, %v6185
      %v6212 = vpop.permute.xlu0 %6211
      %6215 = vset.pattern.permute.xlu0 0
      %6216 = vperm.xlu0 %6215, %v6186
      %v6217 = vpop.permute.xlu0 %6216
      %6220 = vset.pattern.permute.xlu0 0
      %6221 = vperm.xlu0 %6220, %v6187
      %v6222 = vpop.permute.xlu0 %6221
      %6225 = vset.pattern.permute.xlu0 0
      %6226 = vperm.xlu0 %6225, %v6188
      %v6227 = vpop.permute.xlu0 %6226
      %v6229 = vmul.f32 %v6149, %v6192
      %v6230 = vmul.f32 %v6150, %v6192
      %v6231 = vmul.f32 %v6151, %v6192
      %v6232 = vmul.f32 %v6152, %v6192
      %v6233 = vmul.f32 %v6153, %v6197
      %v6234 = vmul.f32 %v6154, %v6197
      %v6235 = vmul.f32 %v6155, %v6197
      %v6236 = vmul.f32 %v6156, %v6197
      %v6237 = vmul.f32 %v6157, %v6202
      %v6238 = vmul.f32 %v6158, %v6202
      %v6239 = vmul.f32 %v6159, %v6202
      %v6240 = vmul.f32 %v6160, %v6202
      %v6241 = vmul.f32 %v6161, %v6207
      %v6242 = vmul.f32 %v6162, %v6207
      %v6243 = vmul.f32 %v6163, %v6207
      %v6244 = vmul.f32 %v6164, %v6207
      %v6245 = vmul.f32 %v6165, %v6212
      %v6246 = vmul.f32 %v6166, %v6212
      %v6247 = vmul.f32 %v6167, %v6212
      %v6248 = vmul.f32 %v6168, %v6212
      %v6249 = vmul.f32 %v6169, %v6217
      %v6250 = vmul.f32 %v6170, %v6217
      %v6251 = vmul.f32 %v6171, %v6217
      %v6252 = vmul.f32 %v6172, %v6217
      %v6253 = vmul.f32 %v6173, %v6222
      %v6254 = vmul.f32 %v6174, %v6222
      %v6255 = vmul.f32 %v6175, %v6222
      %v6256 = vmul.f32 %v6176, %v6222
      %v6257 = vmul.f32 %v6177, %v6227
      %v6258 = vmul.f32 %v6178, %v6227
      %v6259 = vmul.f32 %v6179, %v6227
      %v6260 = vmul.f32 %v6180, %v6227
      %v6261 = vadd.f32 %v6229, %v6233
      %v6262 = vadd.f32 %v6261, %v6237
      %v6263 = vadd.f32 %v6262, %v6241
      %v6264 = vadd.f32 %v6263, %v6245
      %v6265 = vadd.f32 %v6264, %v6249
      %v6266 = vadd.f32 %v6265, %v6253
      %v6267 = vadd.f32 %v6266, %v6257
      %v6268 = vrot.slane %v6267, 4
      %v6269 = vadd.f32 %v6267, %v6268
      %v6270 = vrot.slane %v6269, 2
      %v6271 = vadd.f32 %v6269, %v6270
      %v6272 = vrot.slane %v6271, 1
      %v6273 = vadd.f32 %v6271, %v6272
      %v6274 = vadd.f32 %v6230, %v6234
      %v6275 = vadd.f32 %v6274, %v6238
      %v6276 = vadd.f32 %v6275, %v6242
      %v6277 = vadd.f32 %v6276, %v6246
      %v6278 = vadd.f32 %v6277, %v6250
      %v6279 = vadd.f32 %v6278, %v6254
      %v6280 = vadd.f32 %v6279, %v6258
      %v6281 = vrot.slane %v6280, 4
      %v6282 = vadd.f32 %v6280, %v6281
      %v6283 = vrot.slane %v6282, 2
      %v6284 = vadd.f32 %v6282, %v6283
      %v6285 = vrot.slane %v6284, 1
      %v6286 = vadd.f32 %v6284, %v6285
      %v6287 = vadd.f32 %v6231, %v6235
      %v6288 = vadd.f32 %v6287, %v6239
      %v6289 = vadd.f32 %v6288, %v6243
      %v6290 = vadd.f32 %v6289, %v6247
      %v6291 = vadd.f32 %v6290, %v6251
      %v6292 = vadd.f32 %v6291, %v6255
      %v6293 = vadd.f32 %v6292, %v6259
      %v6294 = vrot.slane %v6293, 4
      %v6295 = vadd.f32 %v6293, %v6294
      %v6296 = vrot.slane %v6295, 2
      %v6297 = vadd.f32 %v6295, %v6296
      %v6298 = vrot.slane %v6297, 1
      %v6299 = vadd.f32 %v6297, %v6298
      %v6300 = vadd.f32 %v6232, %v6236
      %v6301 = vadd.f32 %v6300, %v6240
      %v6302 = vadd.f32 %v6301, %v6244
      %v6303 = vadd.f32 %v6302, %v6248
      %v6304 = vadd.f32 %v6303, %v6252
      %v6305 = vadd.f32 %v6304, %v6256
      %v6306 = vadd.f32 %v6305, %v6260
      %v6307 = vrot.slane %v6306, 4
      %v6308 = vadd.f32 %v6306, %v6307
      %v6309 = vrot.slane %v6308, 2
      %v6310 = vadd.f32 %v6308, %v6309
      %v6311 = vrot.slane %v6310, 1
      %v6312 = vadd.f32 %v6310, %v6311
      %v6313 = vadd.f32 %v6273, %v6286
      %6314 = vadd.xlane.f32.xlu0 %v6313
      %v6315 = vpop.xlane.xlu0 %6314
      %v6316 = vadd.f32 %v6299, %v6312
      %6317 = vadd.xlane.f32.xlu0 %v6316
      %v6318 = vpop.xlane.xlu0 %6317
      %v6319 = vsel %vm810, %v6315, %v6318
      %v6320 = vld [vmem:[#allocation2] sm:$0x1]
      %6322 = vset.pattern.permute.xlu0 0
      %6323 = vperm.xlu0 %6322, %v6320
      %v6324 = vpop.permute.xlu0 %6323
      %v6326 = vperm.slane %v6324, 0
      %v6327 = vadd.f32 %v6319, %v6326
      %vm6328 = vcmask 8192
      %6329 = vst.msk [vmem:[%s357] sm:$0x1] %vm6328, %v6327
      %p6330 = scmp.lt.s32.totalorder %s23, 1
      %s6331 = scalar_select %p6330, %s23, 1
      %s6332 = scalar_lea.vmem %s10, %s6331
      // Predicated region
      $region61: #{discriminator_forward.1} parent=59 // pred_check
        %p6333 = pneg %p256
      $region62: #{discriminator_forward.1} parent=59 // pred_check_branch
        %6335 = sbr.rel (%p6333) target = $region64
      $region63: #{discriminator_forward.1} parent=59 // pred_region
        _
      $region64: #{discriminator_forward.1} parent=59 // pred_fallthru
        _
    $region60: #{discriminator_forward.1} parent=5 // pred_fallthru
      _
    %p6336 = scmp.le.s32.totalorder 2, %s18
    // Predicated region
    $region65: #{discriminator_forward.1} parent=5 // pred_check
      %p6337 = pneg %p6336
    $region66: #{discriminator_forward.1} parent=5 // pred_check_branch
      %6339 = sbr.rel (%p6337) target = $region68
    $region67: #{discriminator_forward.1} parent=5 // pred_region
      %s6340 = ssub.s32 %s18, 2
      // Predicated region
      $region69: #{discriminator_forward.1} parent=67 // pred_check
        %p6341 = pneg %p262
      $region70: #{discriminator_forward.1} parent=67 // pred_check_branch
        %6343 = sbr.rel (%p6341) target = $region72
      $region71: #{discriminator_forward.1} parent=67 // pred_region
        %p6344 = scmp.lt.s32.totalorder %s24, 1
        %s6345 = scalar_select %p6344, %s24, 1
        %s6346 = scalar_lea.vmem %s10, %s6345
      $region72: #{discriminator_forward.1} parent=67 // pred_fallthru
        _
    $region68: #{discriminator_forward.1} parent=5 // pred_fallthru
      _
  $region6: #{discriminator_forward.1} parent=0 // loop_footer
    %s22 = sadd.s32 1, %s18
  $region7: #{discriminator_forward.1} parent=0 // loop_footer_branch
    %17 = sbr.rel target = $region3
  $region8: #{discriminator_forward.1} parent=0 // loop_exit
    _

</llo_original>
